<compile_context>
chip_gen: v7x
topology: tpu7x:2x2x1
jax: 0.10.0
libtpu: 0.0.40
codegen_flags: <defaults>
</compile_context>

<pallas_src>
import math

import jax
import jax.numpy as jnp
from jax import lax
from jax.experimental import pallas as pl
from jax.experimental.pallas import tpu as pltpu
import numpy as np

LANES = 128


# --------------------------------------------------------------------------
# Pallas kernels
# --------------------------------------------------------------------------
def conv_relu_pool_kernel(p_ref, w_ref, b_ref, o_ref):
    """Fused conv (patch matmul) + bias + ReLU + 2x2 max-pool.

    p_ref: (4, P, K) bf16 -- im2col patches for the 4 pool-window corners,
           rows in pooled-pixel raster order.
    w_ref: (K, 128) bf16   b_ref: (1, 128) f32   o_ref: (P, 128) bf16
    """
    w = w_ref[...]
    b = b_ref[...]

    def corner(i):
        y = jnp.dot(p_ref[i], w, preferred_element_type=jnp.float32)
        return jnp.maximum(y + b, 0.0)

    pooled = jnp.maximum(jnp.maximum(corner(0), corner(1)),
                         jnp.maximum(corner(2), corner(3)))
    o_ref[...] = pooled.astype(o_ref.dtype)


def fc_tail_kernel(img_ref, zone_ref,
                   w1_ref, b1_ref, w2_ref, b2_ref, w3_ref, b3_ref,
                   nw1_ref, nb1_ref, nw2_ref, nb2_ref,
                   cw1i_ref, cw1z_ref, cb1_ref, cw2_ref, cb2_ref,
                   o_ref):
    """Whole FC tail in one kernel. Only row 0 / the valid lanes of each
    (8, 128) tile are meaningful; padded rows are ignored downstream."""

    def dense_relu(x, wr, br):
        y = jnp.dot(x.astype(jnp.bfloat16), wr[...],
                    preferred_element_type=jnp.float32)
        return jnp.maximum(y + br[...], 0.0)

    # image branch: fc1 -> fc2 -> fc3 (ReLU each)
    h = dense_relu(img_ref[...], w1_ref, b1_ref)
    h = dense_relu(h, w2_ref, b2_ref)
    img_feat = dense_relu(h, w3_ref, b3_ref)        # valid lanes 0..15, rest 0

    # numeric branch: nfc1 -> nfc2
    z = dense_relu(zone_ref[...], nw1_ref, nb1_ref)
    zone_feat = dense_relu(z, nw2_ref, nb2_ref)     # valid lanes 0..7, rest 0

    # combined fc1: concat(img_feat, zone_feat) @ W  ==  split-weight matmuls
    c = (jnp.dot(img_feat.astype(jnp.bfloat16), cw1i_ref[...],
                 preferred_element_type=jnp.float32)
         + jnp.dot(zone_feat.astype(jnp.bfloat16), cw1z_ref[...],
                   preferred_element_type=jnp.float32)
         + cb1_ref[...])
    c = jnp.maximum(c, 0.0)

    logits = jnp.dot(c.astype(jnp.bfloat16), cw2_ref[...],
                     preferred_element_type=jnp.float32) + cb2_ref[...]

    # masked softmax over the 2 valid lanes
    lane = lax.broadcasted_iota(jnp.int32, logits.shape, 1)
    logits = jnp.where(lane < 2, logits, -jnp.inf)
    m = jnp.max(logits, axis=-1, keepdims=True)
    e = jnp.exp(logits - m)
    denom = jnp.sum(e, axis=-1, keepdims=True)
    o_ref[...] = e * pl.reciprocal(denom, approx=True)


# --------------------------------------------------------------------------
# pallas_call wrappers
# --------------------------------------------------------------------------
def _full_spec(x):
    idx = (0,) * x.ndim
    return pl.BlockSpec(x.shape, lambda i: idx)


_ARB = pltpu.CompilerParams(dimension_semantics=("arbitrary",))


def conv_relu_pool(patches4, w_p, b_p):
    P = patches4.shape[1]
    return pl.pallas_call(
        conv_relu_pool_kernel,
        grid=(1,),
        in_specs=[_full_spec(patches4), _full_spec(w_p), _full_spec(b_p)],
        out_specs=pl.BlockSpec((P, LANES), lambda i: (0, 0)),
        out_shape=jax.ShapeDtypeStruct((P, LANES), jnp.bfloat16),
        compiler_params=_ARB,
    )(patches4, w_p, b_p)


def fc_tail(img_flat, zone_pad, pp):
    ins = [img_flat, zone_pad,
           pp["fc1_w"], pp["fc1_b"], pp["fc2_w"], pp["fc2_b"],
           pp["fc3_w"], pp["fc3_b"],
           pp["nfc1_w"], pp["nfc1_b"], pp["nfc2_w"], pp["nfc2_b"],
           pp["cfc1_w_img"], pp["cfc1_w_zone"], pp["cfc1_b"],
           pp["cfc2_w"], pp["cfc2_b"]]
    return pl.pallas_call(
        fc_tail_kernel,
        grid=(1,),
        in_specs=[_full_spec(x) for x in ins],
        out_specs=pl.BlockSpec((8, LANES), lambda i: (0, 0)),
        out_shape=jax.ShapeDtypeStruct((8, LANES), jnp.float32),
        compiler_params=_ARB,
    )(*ins)


# --------------------------------------------------------------------------
# Glue: patch extraction + pool-corner regrouping (a handful of XLA ops)
# --------------------------------------------------------------------------
def _patches(x_nhwc, kh, kw):
    """Single-HLO im2col; feature index = c*kh*kw + i*kw + j (channel-major),
    matching the PyTorch (out_c, in_c, kh, kw) weight flattening."""
    return lax.conv_general_dilated_patches(
        x_nhwc, (kh, kw), (1, 1), "VALID",
        dimension_numbers=("NHWC", "HWIO", "NHWC"))


def _corner_patches(p_nhwc):
    """(1, H, W, F) -> (4, (H//2)*(W//2), F): patch rows of the 4 maxpool
    window corners, each block in pooled-pixel raster order."""
    _, H, W, F = p_nhwc.shape
    P = (H // 2) * (W // 2)
    corners = [p_nhwc[0, a::2, b::2, :].reshape(P, F)
               for a in (0, 1) for b in (0, 1)]
    return jnp.stack(corners, axis=0)


# --------------------------------------------------------------------------
# Parameters
# --------------------------------------------------------------------------
def init_params(key):
    def u(k, shape, fan_in):
        bound = 1.0 / math.sqrt(fan_in)
        return jax.random.uniform(k, shape, jnp.float32, -bound, bound)

    ks = jax.random.split(key, 18)
    p = {}
    # conv weights stored directly as im2col matrices (in_c*kh*kw, out_c)
    p["conv1_w"], p["conv1_b"] = u(ks[0], (3 * 5 * 5, 6), 75), u(ks[1], (6,), 75)
    p["conv2_w"], p["conv2_b"] = u(ks[2], (6 * 5 * 5, 16), 150), u(ks[3], (16,), 150)
    p["fc1_w"], p["fc1_b"] = u(ks[4], (400, 120), 400), u(ks[5], (120,), 400)
    p["fc2_w"], p["fc2_b"] = u(ks[6], (120, 84), 120), u(ks[7], (84,), 120)
    p["fc3_w"], p["fc3_b"] = u(ks[8], (84, 16), 84), u(ks[9], (16,), 84)
    p["nfc1_w"], p["nfc1_b"] = u(ks[10], (2, 8), 2), u(ks[11], (8,), 2)
    p["nfc2_w"], p["nfc2_b"] = u(ks[12], (8, 8), 8), u(ks[13], (8,), 8)
    p["cfc1_w"], p["cfc1_b"] = u(ks[14], (24, 16), 24), u(ks[15], (16,), 24)
    p["cfc2_w"], p["cfc2_b"] = u(ks[16], (16, 2), 16), u(ks[17], (2,), 16)
    return p


def prepare_params(p):
    """Pad / permute / cast the logical params ONCE so every Pallas kernel
    sees lane-aligned bf16 weights and f32 biases (no per-call pad glue)."""
    bf16, f32 = jnp.bfloat16, jnp.float32

    def pad_to(x, shape):
        return jnp.pad(x, [(0, s - d) for d, s in zip(x.shape, shape)])

    def w(x, kp):
        return pad_to(x.astype(f32), (kp, LANES)).astype(bf16)

    def b(x):
        return pad_to(x.astype(f32).reshape(1, -1), (1, LANES))

    pp = {
        "conv1_w": w(p["conv1_w"], 128), "conv1_b": b(p["conv1_b"]),
        "conv2_w": w(p["conv2_w"], 256), "conv2_b": b(p["conv2_b"]),
        "fc1_b": b(p["fc1_b"]),
        "fc2_w": w(p["fc2_w"], 128), "fc2_b": b(p["fc2_b"]),
        "fc3_w": w(p["fc3_w"], 128), "fc3_b": b(p["fc3_b"]),
        "nfc1_w": w(p["nfc1_w"], 128), "nfc1_b": b(p["nfc1_b"]),
        "nfc2_w": w(p["nfc2_w"], 128), "nfc2_b": b(p["nfc2_b"]),
        "cfc1_w_img": w(p["cfc1_w"][:16], 128),
        "cfc1_w_zone": w(p["cfc1_w"][16:], 128),
        "cfc1_b": b(p["cfc1_b"]),
        "cfc2_w": w(p["cfc2_w"], 128), "cfc2_b": b(p["cfc2_b"]),
    }
    # fc1: fold the PyTorch Flatten(0,2) permutation (flat idx = c*25 + h*5+w)
    # into the weight so the pooled conv2 map (row = h*5+w, lane = c) can be
    # fed as a plain row-major (1, 25*128) vector.
    w1 = p["fc1_w"].reshape(16, 25, 120)            # [c, hw, n]
    w1 = jnp.transpose(w1, (1, 0, 2))               # [hw, c, n]
    w1 = jnp.pad(w1, ((0, 0), (0, LANES - 16), (0, LANES - 120)))
    pp["fc1_w"] = w1.reshape(25 * LANES, LANES).astype(bf16)
    return pp


# --------------------------------------------------------------------------
# Forward pass
# --------------------------------------------------------------------------
def forward(pp, img_chw, zone_x, zone_y):
    bf16, f32 = jnp.bfloat16, jnp.float32

    # ---- conv1 + ReLU + maxpool (fused kernel) ---------------------------
    x = jnp.transpose(img_chw.astype(bf16), (1, 2, 0))[None]     # (1,32,32,3)
    p1 = _corner_patches(_patches(x, 5, 5))                      # (4,196,75)
    p1 = jnp.pad(p1, ((0, 0), (0, 0), (0, LANES - 75)))          # (4,196,128)
    m1 = conv_relu_pool(p1, pp["conv1_w"], pp["conv1_b"])        # (196,128)

    # ---- conv2 + ReLU + maxpool (fused kernel) ---------------------------
    m1s = m1[:, :6].reshape(1, 14, 14, 6)
    p2 = _corner_patches(_patches(m1s, 5, 5))                    # (4,25,150)
    p2 = jnp.pad(p2, ((0, 0), (0, 0), (0, 256 - 150)))           # (4,25,256)
    m2 = conv_relu_pool(p2, pp["conv2_w"], pp["conv2_b"])        # (25,128)

    # ---- fused FC tail ---------------------------------------------------
    img_flat = jnp.pad(m2.reshape(1, 25 * LANES), ((0, 7), (0, 0)))   # (8,3200)
    zone = jnp.concatenate([zone_x, zone_y], -1).astype(f32).reshape(1, 2)
    zone_pad = jnp.pad(zone, ((0, 7), (0, LANES - 2)))                # (8,128)
    out = fc_tail(img_flat, zone_pad, pp)                             # (8,128)
    return out[0, :2]                               # unbatched, like PyTorch


# --------------------------------------------------------------------------
# Pure-JAX f32 reference (ground truth for the correctness check)
# --------------------------------------------------------------------------
def reference(params, img_chw, zone_x, zone_y):
    hi = lax.Precision.HIGHEST
    x = img_chw.astype(jnp.float32)[None]                            # (1,3,32,32)
    w1 = params["conv1_w"].T.reshape(6, 3, 5, 5)
    y = lax.conv_general_dilated(x, w1, (1, 1), "VALID",
                                 dimension_numbers=("NCHW", "OIHW", "NCHW"),
                                 precision=hi)
    y = jnp.maximum(y + params["conv1_b"].reshape(1, 6, 1, 1), 0.0)
    y = lax.reduce_window(y, -jnp.inf, lax.max, (1, 1, 2, 2), (1, 1, 2, 2), "VALID")
    w2 = params["conv2_w"].T.reshape(16, 6, 5, 5)
    y = lax.conv_general_dilated(y, w2, (1, 1), "VALID",
                                 dimension_numbers=("NCHW", "OIHW", "NCHW"),
                                 precision=hi)
    y = jnp.maximum(y + params["conv2_b"].reshape(1, 16, 1, 1), 0.0)
    y = lax.reduce_window(y, -jnp.inf, lax.max, (1, 1, 2, 2), (1, 1, 2, 2), "VALID")
    flat = y.reshape(1, 400)
    h = jnp.maximum(jnp.dot(flat, params["fc1_w"], precision=hi) + params["fc1_b"], 0.0)
    h = jnp.maximum(jnp.dot(h, params["fc2_w"], precision=hi) + params["fc2_b"], 0.0)
    img_feat = jnp.maximum(jnp.dot(h, params["fc3_w"], precision=hi) + params["fc3_b"], 0.0)
    zone = jnp.concatenate([zone_x, zone_y], -1).astype(jnp.float32).reshape(1, 2)
    z = jnp.maximum(jnp.dot(zone, params["nfc1_w"], precision=hi) + params["nfc1_b"], 0.0)
    zone_feat = jnp.maximum(jnp.dot(z, params["nfc2_w"], precision=hi) + params["nfc2_b"], 0.0)
    comb = jnp.concatenate([img_feat, zone_feat], -1)
    c = jnp.maximum(jnp.dot(comb, params["cfc1_w"], precision=hi) + params["cfc1_b"], 0.0)
    logits = jnp.dot(c, params["cfc2_w"], precision=hi) + params["cfc2_b"]
    return jax.nn.softmax(logits, -1).reshape(2)


# --------------------------------------------------------------------------
if __name__ == "__main__":
    # deterministic inputs (module requires img of shape (3, 32, 32))
    k_in = jax.random.PRNGKey(0)
    k_img, k_zx, k_zy = jax.random.split(k_in, 3)
    img = jax.random.normal(k_img, (3, 32, 32), jnp.float32)
    zone_x = jax.random.uniform(k_zx, (1,), jnp.float32)
    zone_y = jax.random.uniform(k_zy, (1,), jnp.float32)

    params = init_params(jax.random.PRNGKey(42))
    pp = prepare_params(params)          # pad/permute/bf16-cast once

    out = jax.jit(forward)(pp, img, zone_x, zone_y)
    out = jax.block_until_ready(out)

    ref = jax.block_until_ready(reference(params, img, zone_x, zone_y))
    np.testing.assert_allclose(np.asarray(out), np.asarray(ref), atol=1e-2, rtol=1e-2)
    assert out.shape == (2,)
    # approx EUP reciprocal in the softmax -> allow a slightly looser sum check
    assert abs(float(jnp.sum(out)) - 1.0) < 1e-2

    print("KERNEL_OK")
</pallas_src>

<mosaic_0001>
module attributes {stable_mosaic.version = 11 : i64} {
  func.func @conv_relu_pool_kernel(%arg0: i32, %arg1: memref<4x196x128xbf16, #tpu.memory_space<vmem>>, %arg2: memref<128x128xbf16, #tpu.memory_space<vmem>>, %arg3: memref<1x128xf32, #tpu.memory_space<vmem>>, %arg4: memref<196x128xbf16, #tpu.memory_space<vmem>>) attributes {dimension_semantics = [#tpu.dimension_semantics<arbitrary>], iteration_bounds = array<i64: 1>, scalar_prefetch = 0 : i64, scratch_operands = 0 : i64, tpu.core_type = #tpu.core_type<tc>, window_params = [{pipeline_mode = #tpu.pipeline_mode<synchronous>, transform_indices = @transform_0, window_bounds = array<i64: 4, 196, 128>}, {pipeline_mode = #tpu.pipeline_mode<synchronous>, transform_indices = @transform_1, window_bounds = array<i64: 128, 128>}, {pipeline_mode = #tpu.pipeline_mode<synchronous>, transform_indices = @transform_2, window_bounds = array<i64: 1, 128>}, {pipeline_mode = #tpu.pipeline_mode<synchronous>, transform_indices = @transform_3, window_bounds = array<i64: 196, 128>}]} {
    %c0 = arith.constant 0 : index
    %c0_0 = arith.constant 0 : index
    %0 = vector.load %arg2[%c0, %c0_0] : memref<128x128xbf16, #tpu.memory_space<vmem>>, vector<128x128xbf16>
    %c0_1 = arith.constant 0 : index
    %c0_2 = arith.constant 0 : index
    %1 = vector.load %arg3[%c0_1, %c0_2] : memref<1x128xf32, #tpu.memory_space<vmem>>, vector<1x128xf32>
    %c0_3 = arith.constant 0 : index
    %c0_4 = arith.constant 0 : index
    %c0_5 = arith.constant 0 : index
    %2 = vector.load %arg1[%c0_3, %c0_4, %c0_5] : memref<4x196x128xbf16, #tpu.memory_space<vmem>>, vector<1x196x128xbf16>
    %3 = vector.shape_cast %2 : vector<1x196x128xbf16> to vector<196x128xbf16>
    %cst = arith.constant dense<0.000000e+00> : vector<196x128xf32>
    %4 = tpu.matmul %3, %0, %cst {dimension_numbers = #tpu.dot_dimension_numbers<[1], [0], [0], [1], [0, 0, 1, 1], [], []>} : vector<196x128xbf16>, vector<128x128xbf16>, vector<196x128xf32> -> vector<196x128xf32>
    %5 = vector.broadcast %1 : vector<1x128xf32> to vector<196x128xf32>
    %6 = arith.addf %4, %5 : vector<196x128xf32>
    %cst_6 = arith.constant 0.000000e+00 : f32
    %7 = vector.broadcast %cst_6 : f32 to vector<196x128xf32>
    %8 = arith.maximumf %6, %7 : vector<196x128xf32>
    %c1 = arith.constant 1 : index
    %c0_7 = arith.constant 0 : index
    %c0_8 = arith.constant 0 : index
    %9 = vector.load %arg1[%c1, %c0_7, %c0_8] : memref<4x196x128xbf16, #tpu.memory_space<vmem>>, vector<1x196x128xbf16>
    %10 = vector.shape_cast %9 : vector<1x196x128xbf16> to vector<196x128xbf16>
    %cst_9 = arith.constant dense<0.000000e+00> : vector<196x128xf32>
    %11 = tpu.matmul %10, %0, %cst_9 {dimension_numbers = #tpu.dot_dimension_numbers<[1], [0], [0], [1], [0, 0, 1, 1], [], []>} : vector<196x128xbf16>, vector<128x128xbf16>, vector<196x128xf32> -> vector<196x128xf32>
    %12 = vector.broadcast %1 : vector<1x128xf32> to vector<196x128xf32>
    %13 = arith.addf %11, %12 : vector<196x128xf32>
    %cst_10 = arith.constant 0.000000e+00 : f32
    %14 = vector.broadcast %cst_10 : f32 to vector<196x128xf32>
    %15 = arith.maximumf %13, %14 : vector<196x128xf32>
    %16 = arith.maximumf %8, %15 : vector<196x128xf32>
    %c2 = arith.constant 2 : index
    %c0_11 = arith.constant 0 : index
    %c0_12 = arith.constant 0 : index
    %17 = vector.load %arg1[%c2, %c0_11, %c0_12] : memref<4x196x128xbf16, #tpu.memory_space<vmem>>, vector<1x196x128xbf16>
    %18 = vector.shape_cast %17 : vector<1x196x128xbf16> to vector<196x128xbf16>
    %cst_13 = arith.constant dense<0.000000e+00> : vector<196x128xf32>
    %19 = tpu.matmul %18, %0, %cst_13 {dimension_numbers = #tpu.dot_dimension_numbers<[1], [0], [0], [1], [0, 0, 1, 1], [], []>} : vector<196x128xbf16>, vector<128x128xbf16>, vector<196x128xf32> -> vector<196x128xf32>
    %20 = vector.broadcast %1 : vector<1x128xf32> to vector<196x128xf32>
    %21 = arith.addf %19, %20 : vector<196x128xf32>
    %cst_14 = arith.constant 0.000000e+00 : f32
    %22 = vector.broadcast %cst_14 : f32 to vector<196x128xf32>
    %23 = arith.maximumf %21, %22 : vector<196x128xf32>
    %c3 = arith.constant 3 : index
    %c0_15 = arith.constant 0 : index
    %c0_16 = arith.constant 0 : index
    %24 = vector.load %arg1[%c3, %c0_15, %c0_16] : memref<4x196x128xbf16, #tpu.memory_space<vmem>>, vector<1x196x128xbf16>
    %25 = vector.shape_cast %24 : vector<1x196x128xbf16> to vector<196x128xbf16>
    %cst_17 = arith.constant dense<0.000000e+00> : vector<196x128xf32>
    %26 = tpu.matmul %25, %0, %cst_17 {dimension_numbers = #tpu.dot_dimension_numbers<[1], [0], [0], [1], [0, 0, 1, 1], [], []>} : vector<196x128xbf16>, vector<128x128xbf16>, vector<196x128xf32> -> vector<196x128xf32>
    %27 = vector.broadcast %1 : vector<1x128xf32> to vector<196x128xf32>
    %28 = arith.addf %26, %27 : vector<196x128xf32>
    %cst_18 = arith.constant 0.000000e+00 : f32
    %29 = vector.broadcast %cst_18 : f32 to vector<196x128xf32>
    %30 = arith.maximumf %28, %29 : vector<196x128xf32>
    %31 = arith.maximumf %23, %30 : vector<196x128xf32>
    %32 = arith.maximumf %16, %31 : vector<196x128xf32>
    %33 = arith.truncf %32 : vector<196x128xf32> to vector<196x128xbf16>
    %c0_19 = arith.constant 0 : index
    %c0_20 = arith.constant 0 : index
    %34 = vector.load %arg4[%c0_19, %c0_20] : memref<196x128xbf16, #tpu.memory_space<vmem>>, vector<196x128xbf16>
    tpu.vector_store %arg4[%c0_19, %c0_20], %33 {strides = array<i32>} : memref<196x128xbf16, #tpu.memory_space<vmem>>, vector<196x128xbf16>,
    return
  }
  func.func @transform_0(%arg0: i32) -> (i32, i32, i32) {
    %c0_i32 = arith.constant 0 : i32
    %c0_i32_0 = arith.constant 0 : i32
    %c0_i32_1 = arith.constant 0 : i32
    %c0_i32_2 = arith.constant 0 : i32
    return %c0_i32, %c0_i32_0, %c0_i32_1 : i32, i32, i32
  }
  func.func @transform_1(%arg0: i32) -> (i32, i32) {
    %c0_i32 = arith.constant 0 : i32
    %c0_i32_0 = arith.constant 0 : i32
    %c0_i32_1 = arith.constant 0 : i32
    return %c0_i32, %c0_i32_0 : i32, i32
  }
  func.func @transform_2(%arg0: i32) -> (i32, i32) {
    %c0_i32 = arith.constant 0 : i32
    %c0_i32_0 = arith.constant 0 : i32
    %c0_i32_1 = arith.constant 0 : i32
    return %c0_i32, %c0_i32_0 : i32, i32
  }
  func.func @transform_3(%arg0: i32) -> (i32, i32) {
    %c0_i32 = arith.constant 0 : i32
    %c0_i32_0 = arith.constant 0 : i32
    %c0_i32_1 = arith.constant 0 : i32
    return %c0_i32, %c0_i32_0 : i32, i32
  }
}

module attributes {stable_mosaic.version = 11 : i64} {
  func.func @conv_relu_pool_kernel(%arg0: i32, %arg1: memref<4x25x256xbf16, #tpu.memory_space<vmem>>, %arg2: memref<256x128xbf16, #tpu.memory_space<vmem>>, %arg3: memref<1x128xf32, #tpu.memory_space<vmem>>, %arg4: memref<25x128xbf16, #tpu.memory_space<vmem>>) attributes {dimension_semantics = [#tpu.dimension_semantics<arbitrary>], iteration_bounds = array<i64: 1>, scalar_prefetch = 0 : i64, scratch_operands = 0 : i64, tpu.core_type = #tpu.core_type<tc>, window_params = [{pipeline_mode = #tpu.pipeline_mode<synchronous>, transform_indices = @transform_0, window_bounds = array<i64: 4, 25, 256>}, {pipeline_mode = #tpu.pipeline_mode<synchronous>, transform_indices = @transform_1, window_bounds = array<i64: 256, 128>}, {pipeline_mode = #tpu.pipeline_mode<synchronous>, transform_indices = @transform_2, window_bounds = array<i64: 1, 128>}, {pipeline_mode = #tpu.pipeline_mode<synchronous>, transform_indices = @transform_3, window_bounds = array<i64: 25, 128>}]} {
    %c0 = arith.constant 0 : index
    %c0_0 = arith.constant 0 : index
    %0 = vector.load %arg2[%c0, %c0_0] : memref<256x128xbf16, #tpu.memory_space<vmem>>, vector<256x128xbf16>
    %c0_1 = arith.constant 0 : index
    %c0_2 = arith.constant 0 : index
    %1 = vector.load %arg3[%c0_1, %c0_2] : memref<1x128xf32, #tpu.memory_space<vmem>>, vector<1x128xf32>
    %c0_3 = arith.constant 0 : index
    %c0_4 = arith.constant 0 : index
    %c0_5 = arith.constant 0 : index
    %2 = vector.load %arg1[%c0_3, %c0_4, %c0_5] : memref<4x25x256xbf16, #tpu.memory_space<vmem>>, vector<1x25x256xbf16>
    %3 = vector.shape_cast %2 : vector<1x25x256xbf16> to vector<25x256xbf16>
    %cst = arith.constant dense<0.000000e+00> : vector<25x128xf32>
    %4 = tpu.matmul %3, %0, %cst {dimension_numbers = #tpu.dot_dimension_numbers<[1], [0], [0], [1], [0, 0, 1, 1], [], []>} : vector<25x256xbf16>, vector<256x128xbf16>, vector<25x128xf32> -> vector<25x128xf32>
    %5 = vector.broadcast %1 : vector<1x128xf32> to vector<25x128xf32>
    %6 = arith.addf %4, %5 : vector<25x128xf32>
    %cst_6 = arith.constant 0.000000e+00 : f32
    %7 = vector.broadcast %cst_6 : f32 to vector<25x128xf32>
    %8 = arith.maximumf %6, %7 : vector<25x128xf32>
    %c1 = arith.constant 1 : index
    %c0_7 = arith.constant 0 : index
    %c0_8 = arith.constant 0 : index
    %9 = vector.load %arg1[%c1, %c0_7, %c0_8] : memref<4x25x256xbf16, #tpu.memory_space<vmem>>, vector<1x25x256xbf16>
    %10 = vector.shape_cast %9 : vector<1x25x256xbf16> to vector<25x256xbf16>
    %cst_9 = arith.constant dense<0.000000e+00> : vector<25x128xf32>
    %11 = tpu.matmul %10, %0, %cst_9 {dimension_numbers = #tpu.dot_dimension_numbers<[1], [0], [0], [1], [0, 0, 1, 1], [], []>} : vector<25x256xbf16>, vector<256x128xbf16>, vector<25x128xf32> -> vector<25x128xf32>
    %12 = vector.broadcast %1 : vector<1x128xf32> to vector<25x128xf32>
    %13 = arith.addf %11, %12 : vector<25x128xf32>
    %cst_10 = arith.constant 0.000000e+00 : f32
    %14 = vector.broadcast %cst_10 : f32 to vector<25x128xf32>
    %15 = arith.maximumf %13, %14 : vector<25x128xf32>
    %16 = arith.maximumf %8, %15 : vector<25x128xf32>
    %c2 = arith.constant 2 : index
    %c0_11 = arith.constant 0 : index
    %c0_12 = arith.constant 0 : index
    %17 = vector.load %arg1[%c2, %c0_11, %c0_12] : memref<4x25x256xbf16, #tpu.memory_space<vmem>>, vector<1x25x256xbf16>
    %18 = vector.shape_cast %17 : vector<1x25x256xbf16> to vector<25x256xbf16>
    %cst_13 = arith.constant dense<0.000000e+00> : vector<25x128xf32>
    %19 = tpu.matmul %18, %0, %cst_13 {dimension_numbers = #tpu.dot_dimension_numbers<[1], [0], [0], [1], [0, 0, 1, 1], [], []>} : vector<25x256xbf16>, vector<256x128xbf16>, vector<25x128xf32> -> vector<25x128xf32>
    %20 = vector.broadcast %1 : vector<1x128xf32> to vector<25x128xf32>
    %21 = arith.addf %19, %20 : vector<25x128xf32>
    %cst_14 = arith.constant 0.000000e+00 : f32
    %22 = vector.broadcast %cst_14 : f32 to vector<25x128xf32>
    %23 = arith.maximumf %21, %22 : vector<25x128xf32>
    %c3 = arith.constant 3 : index
    %c0_15 = arith.constant 0 : index
    %c0_16 = arith.constant 0 : index
    %24 = vector.load %arg1[%c3, %c0_15, %c0_16] : memref<4x25x256xbf16, #tpu.memory_space<vmem>>, vector<1x25x256xbf16>
    %25 = vector.shape_cast %24 : vector<1x25x256xbf16> to vector<25x256xbf16>
    %cst_17 = arith.constant dense<0.000000e+00> : vector<25x128xf32>
    %26 = tpu.matmul %25, %0, %cst_17 {dimension_numbers = #tpu.dot_dimension_numbers<[1], [0], [0], [1], [0, 0, 1, 1], [], []>} : vector<25x256xbf16>, vector<256x128xbf16>, vector<25x128xf32> -> vector<25x128xf32>
    %27 = vector.broadcast %1 : vector<1x128xf32> to vector<25x128xf32>
    %28 = arith.addf %26, %27 : vector<25x128xf32>
    %cst_18 = arith.constant 0.000000e+00 : f32
    %29 = vector.broadcast %cst_18 : f32 to vector<25x128xf32>
    %30 = arith.maximumf %28, %29 : vector<25x128xf32>
    %31 = arith.maximumf %23, %30 : vector<25x128xf32>
    %32 = arith.maximumf %16, %31 : vector<25x128xf32>
    %33 = arith.truncf %32 : vector<25x128xf32> to vector<25x128xbf16>
    %c0_19 = arith.constant 0 : index
    %c0_20 = arith.constant 0 : index
    %34 = vector.load %arg4[%c0_19, %c0_20] : memref<25x128xbf16, #tpu.memory_space<vmem>>, vector<25x128xbf16>
    tpu.vector_store %arg4[%c0_19, %c0_20], %33 {strides = array<i32>} : memref<25x128xbf16, #tpu.memory_space<vmem>>, vector<25x128xbf16>,
    return
  }
  func.func @transform_0(%arg0: i32) -> (i32, i32, i32) {
    %c0_i32 = arith.constant 0 : i32
    %c0_i32_0 = arith.constant 0 : i32
    %c0_i32_1 = arith.constant 0 : i32
    %c0_i32_2 = arith.constant 0 : i32
    return %c0_i32, %c0_i32_0, %c0_i32_1 : i32, i32, i32
  }
  func.func @transform_1(%arg0: i32) -> (i32, i32) {
    %c0_i32 = arith.constant 0 : i32
    %c0_i32_0 = arith.constant 0 : i32
    %c0_i32_1 = arith.constant 0 : i32
    return %c0_i32, %c0_i32_0 : i32, i32
  }
  func.func @transform_2(%arg0: i32) -> (i32, i32) {
    %c0_i32 = arith.constant 0 : i32
    %c0_i32_0 = arith.constant 0 : i32
    %c0_i32_1 = arith.constant 0 : i32
    return %c0_i32, %c0_i32_0 : i32, i32
  }
  func.func @transform_3(%arg0: i32) -> (i32, i32) {
    %c0_i32 = arith.constant 0 : i32
    %c0_i32_0 = arith.constant 0 : i32
    %c0_i32_1 = arith.constant 0 : i32
    return %c0_i32, %c0_i32_0 : i32, i32
  }
}

module attributes {stable_mosaic.version = 11 : i64} {
  func.func @fc_tail_kernel(%arg0: i32, %arg1: memref<8x3200xbf16, #tpu.memory_space<vmem>>, %arg2: memref<8x128xf32, #tpu.memory_space<vmem>>, %arg3: memref<3200x128xbf16, #tpu.memory_space<vmem>>, %arg4: memref<1x128xf32, #tpu.memory_space<vmem>>, %arg5: memref<128x128xbf16, #tpu.memory_space<vmem>>, %arg6: memref<1x128xf32, #tpu.memory_space<vmem>>, %arg7: memref<128x128xbf16, #tpu.memory_space<vmem>>, %arg8: memref<1x128xf32, #tpu.memory_space<vmem>>, %arg9: memref<128x128xbf16, #tpu.memory_space<vmem>>, %arg10: memref<1x128xf32, #tpu.memory_space<vmem>>, %arg11: memref<128x128xbf16, #tpu.memory_space<vmem>>, %arg12: memref<1x128xf32, #tpu.memory_space<vmem>>, %arg13: memref<128x128xbf16, #tpu.memory_space<vmem>>, %arg14: memref<128x128xbf16, #tpu.memory_space<vmem>>, %arg15: memref<1x128xf32, #tpu.memory_space<vmem>>, %arg16: memref<128x128xbf16, #tpu.memory_space<vmem>>, %arg17: memref<1x128xf32, #tpu.memory_space<vmem>>, %arg18: memref<8x128xf32, #tpu.memory_space<vmem>>) attributes {dimension_semantics = [#tpu.dimension_semantics<arbitrary>], iteration_bounds = array<i64: 1>, scalar_prefetch = 0 : i64, scratch_operands = 0 : i64, tpu.core_type = #tpu.core_type<tc>, window_params = [{pipeline_mode = #tpu.pipeline_mode<synchronous>, transform_indices = @transform_0, window_bounds = array<i64: 8, 3200>}, {pipeline_mode = #tpu.pipeline_mode<synchronous>, transform_indices = @transform_1, window_bounds = array<i64: 8, 128>}, {pipeline_mode = #tpu.pipeline_mode<synchronous>, transform_indices = @transform_2, window_bounds = array<i64: 3200, 128>}, {pipeline_mode = #tpu.pipeline_mode<synchronous>, transform_indices = @transform_3, window_bounds = array<i64: 1, 128>}, {pipeline_mode = #tpu.pipeline_mode<synchronous>, transform_indices = @transform_4, window_bounds = array<i64: 128, 128>}, {pipeline_mode = #tpu.pipeline_mode<synchronous>, transform_indices = @transform_5, window_bounds = array<i64: 1, 128>}, {pipeline_mode = #tpu.pipeline_mode<synchronous>, transform_indices = @transform_6, window_bounds = array<i64: 128, 128>}, {pipeline_mode = #tpu.pipeline_mode<synchronous>, transform_indices = @transform_7, window_bounds = array<i64: 1, 128>}, {pipeline_mode = #tpu.pipeline_mode<synchronous>, transform_indices = @transform_8, window_bounds = array<i64: 128, 128>}, {pipeline_mode = #tpu.pipeline_mode<synchronous>, transform_indices = @transform_9, window_bounds = array<i64: 1, 128>}, {pipeline_mode = #tpu.pipeline_mode<synchronous>, transform_indices = @transform_10, window_bounds = array<i64: 128, 128>}, {pipeline_mode = #tpu.pipeline_mode<synchronous>, transform_indices = @transform_11, window_bounds = array<i64: 1, 128>}, {pipeline_mode = #tpu.pipeline_mode<synchronous>, transform_indices = @transform_12, window_bounds = array<i64: 128, 128>}, {pipeline_mode = #tpu.pipeline_mode<synchronous>, transform_indices = @transform_13, window_bounds = array<i64: 128, 128>}, {pipeline_mode = #tpu.pipeline_mode<synchronous>, transform_indices = @transform_14, window_bounds = array<i64: 1, 128>}, {pipeline_mode = #tpu.pipeline_mode<synchronous>, transform_indices = @transform_15, window_bounds = array<i64: 128, 128>}, {pipeline_mode = #tpu.pipeline_mode<synchronous>, transform_indices = @transform_16, window_bounds = array<i64: 1, 128>}, {pipeline_mode = #tpu.pipeline_mode<synchronous>, transform_indices = @transform_17, window_bounds = array<i64: 8, 128>}]} {
    %c0 = arith.constant 0 : index
    %c0_0 = arith.constant 0 : index
    %0 = vector.load %arg1[%c0, %c0_0] : memref<8x3200xbf16, #tpu.memory_space<vmem>>, vector<8x3200xbf16>
    %c0_1 = arith.constant 0 : index
    %c0_2 = arith.constant 0 : index
    %1 = vector.load %arg3[%c0_1, %c0_2] : memref<3200x128xbf16, #tpu.memory_space<vmem>>, vector<3200x128xbf16>
    %cst = arith.constant dense<0.000000e+00> : vector<8x128xf32>
    %2 = tpu.matmul %0, %1, %cst {dimension_numbers = #tpu.dot_dimension_numbers<[1], [0], [0], [1], [0, 0, 1, 1], [], []>} : vector<8x3200xbf16>, vector<3200x128xbf16>, vector<8x128xf32> -> vector<8x128xf32>
    %c0_3 = arith.constant 0 : index
    %c0_4 = arith.constant 0 : index
    %3 = vector.load %arg4[%c0_3, %c0_4] : memref<1x128xf32, #tpu.memory_space<vmem>>, vector<1x128xf32>
    %4 = vector.broadcast %3 : vector<1x128xf32> to vector<8x128xf32>
    %5 = arith.addf %2, %4 : vector<8x128xf32>
    %cst_5 = arith.constant 0.000000e+00 : f32
    %6 = vector.broadcast %cst_5 : f32 to vector<8x128xf32>
    %7 = arith.maximumf %5, %6 : vector<8x128xf32>
    %8 = arith.truncf %7 : vector<8x128xf32> to vector<8x128xbf16>
    %c0_6 = arith.constant 0 : index
    %c0_7 = arith.constant 0 : index
    %9 = vector.load %arg5[%c0_6, %c0_7] : memref<128x128xbf16, #tpu.memory_space<vmem>>, vector<128x128xbf16>
    %cst_8 = arith.constant dense<0.000000e+00> : vector<8x128xf32>
    %10 = tpu.matmul %8, %9, %cst_8 {dimension_numbers = #tpu.dot_dimension_numbers<[1], [0], [0], [1], [0, 0, 1, 1], [], []>} : vector<8x128xbf16>, vector<128x128xbf16>, vector<8x128xf32> -> vector<8x128xf32>
    %c0_9 = arith.constant 0 : index
    %c0_10 = arith.constant 0 : index
    %11 = vector.load %arg6[%c0_9, %c0_10] : memref<1x128xf32, #tpu.memory_space<vmem>>, vector<1x128xf32>
    %12 = vector.broadcast %11 : vector<1x128xf32> to vector<8x128xf32>
    %13 = arith.addf %10, %12 : vector<8x128xf32>
    %cst_11 = arith.constant 0.000000e+00 : f32
    %14 = vector.broadcast %cst_11 : f32 to vector<8x128xf32>
    %15 = arith.maximumf %13, %14 : vector<8x128xf32>
    %16 = arith.truncf %15 : vector<8x128xf32> to vector<8x128xbf16>
    %c0_12 = arith.constant 0 : index
    %c0_13 = arith.constant 0 : index
    %17 = vector.load %arg7[%c0_12, %c0_13] : memref<128x128xbf16, #tpu.memory_space<vmem>>, vector<128x128xbf16>
    %cst_14 = arith.constant dense<0.000000e+00> : vector<8x128xf32>
    %18 = tpu.matmul %16, %17, %cst_14 {dimension_numbers = #tpu.dot_dimension_numbers<[1], [0], [0], [1], [0, 0, 1, 1], [], []>} : vector<8x128xbf16>, vector<128x128xbf16>, vector<8x128xf32> -> vector<8x128xf32>
    %c0_15 = arith.constant 0 : index
    %c0_16 = arith.constant 0 : index
    %19 = vector.load %arg8[%c0_15, %c0_16] : memref<1x128xf32, #tpu.memory_space<vmem>>, vector<1x128xf32>
    %20 = vector.broadcast %19 : vector<1x128xf32> to vector<8x128xf32>
    %21 = arith.addf %18, %20 : vector<8x128xf32>
    %cst_17 = arith.constant 0.000000e+00 : f32
    %22 = vector.broadcast %cst_17 : f32 to vector<8x128xf32>
    %23 = arith.maximumf %21, %22 : vector<8x128xf32>
    %c0_18 = arith.constant 0 : index
    %c0_19 = arith.constant 0 : index
    %24 = vector.load %arg2[%c0_18, %c0_19] : memref<8x128xf32, #tpu.memory_space<vmem>>, vector<8x128xf32>
    %25 = arith.truncf %24 : vector<8x128xf32> to vector<8x128xbf16>
    %c0_20 = arith.constant 0 : index
    %c0_21 = arith.constant 0 : index
    %26 = vector.load %arg9[%c0_20, %c0_21] : memref<128x128xbf16, #tpu.memory_space<vmem>>, vector<128x128xbf16>
    %cst_22 = arith.constant dense<0.000000e+00> : vector<8x128xf32>
    %27 = tpu.matmul %25, %26, %cst_22 {dimension_numbers = #tpu.dot_dimension_numbers<[1], [0], [0], [1], [0, 0, 1, 1], [], []>} : vector<8x128xbf16>, vector<128x128xbf16>, vector<8x128xf32> -> vector<8x128xf32>
    %c0_23 = arith.constant 0 : index
    %c0_24 = arith.constant 0 : index
    %28 = vector.load %arg10[%c0_23, %c0_24] : memref<1x128xf32, #tpu.memory_space<vmem>>, vector<1x128xf32>
    %29 = vector.broadcast %28 : vector<1x128xf32> to vector<8x128xf32>
    %30 = arith.addf %27, %29 : vector<8x128xf32>
    %cst_25 = arith.constant 0.000000e+00 : f32
    %31 = vector.broadcast %cst_25 : f32 to vector<8x128xf32>
    %32 = arith.maximumf %30, %31 : vector<8x128xf32>
    %33 = arith.truncf %32 : vector<8x128xf32> to vector<8x128xbf16>
    %c0_26 = arith.constant 0 : index
    %c0_27 = arith.constant 0 : index
    %34 = vector.load %arg11[%c0_26, %c0_27] : memref<128x128xbf16, #tpu.memory_space<vmem>>, vector<128x128xbf16>
    %cst_28 = arith.constant dense<0.000000e+00> : vector<8x128xf32>
    %35 = tpu.matmul %33, %34, %cst_28 {dimension_numbers = #tpu.dot_dimension_numbers<[1], [0], [0], [1], [0, 0, 1, 1], [], []>} : vector<8x128xbf16>, vector<128x128xbf16>, vector<8x128xf32> -> vector<8x128xf32>
    %c0_29 = arith.constant 0 : index
    %c0_30 = arith.constant 0 : index
    %36 = vector.load %arg12[%c0_29, %c0_30] : memref<1x128xf32, #tpu.memory_space<vmem>>, vector<1x128xf32>
    %37 = vector.broadcast %36 : vector<1x128xf32> to vector<8x128xf32>
    %38 = arith.addf %35, %37 : vector<8x128xf32>
    %cst_31 = arith.constant 0.000000e+00 : f32
    %39 = vector.broadcast %cst_31 : f32 to vector<8x128xf32>
    %40 = arith.maximumf %38, %39 : vector<8x128xf32>
    %41 = arith.truncf %23 : vector<8x128xf32> to vector<8x128xbf16>
    %c0_32 = arith.constant 0 : index
    %c0_33 = arith.constant 0 : index
    %42 = vector.load %arg13[%c0_32, %c0_33] : memref<128x128xbf16, #tpu.memory_space<vmem>>, vector<128x128xbf16>
    %cst_34 = arith.constant dense<0.000000e+00> : vector<8x128xf32>
    %43 = tpu.matmul %41, %42, %cst_34 {dimension_numbers = #tpu.dot_dimension_numbers<[1], [0], [0], [1], [0, 0, 1, 1], [], []>} : vector<8x128xbf16>, vector<128x128xbf16>, vector<8x128xf32> -> vector<8x128xf32>
    %44 = arith.truncf %40 : vector<8x128xf32> to vector<8x128xbf16>
    %c0_35 = arith.constant 0 : index
    %c0_36 = arith.constant 0 : index
    %45 = vector.load %arg14[%c0_35, %c0_36] : memref<128x128xbf16, #tpu.memory_space<vmem>>, vector<128x128xbf16>
    %cst_37 = arith.constant dense<0.000000e+00> : vector<8x128xf32>
    %46 = tpu.matmul %44, %45, %cst_37 {dimension_numbers = #tpu.dot_dimension_numbers<[1], [0], [0], [1], [0, 0, 1, 1], [], []>} : vector<8x128xbf16>, vector<128x128xbf16>, vector<8x128xf32> -> vector<8x128xf32>
    %47 = arith.addf %43, %46 : vector<8x128xf32>
    %c0_38 = arith.constant 0 : index
    %c0_39 = arith.constant 0 : index
    %48 = vector.load %arg15[%c0_38, %c0_39] : memref<1x128xf32, #tpu.memory_space<vmem>>, vector<1x128xf32>
    %49 = vector.broadcast %48 : vector<1x128xf32> to vector<8x128xf32>
    %50 = arith.addf %47, %49 : vector<8x128xf32>
    %cst_40 = arith.constant 0.000000e+00 : f32
    %51 = vector.broadcast %cst_40 : f32 to vector<8x128xf32>
    %52 = arith.maximumf %50, %51 : vector<8x128xf32>
    %53 = arith.truncf %52 : vector<8x128xf32> to vector<8x128xbf16>
    %c0_41 = arith.constant 0 : index
    %c0_42 = arith.constant 0 : index
    %54 = vector.load %arg16[%c0_41, %c0_42] : memref<128x128xbf16, #tpu.memory_space<vmem>>, vector<128x128xbf16>
    %cst_43 = arith.constant dense<0.000000e+00> : vector<8x128xf32>
    %55 = tpu.matmul %53, %54, %cst_43 {dimension_numbers = #tpu.dot_dimension_numbers<[1], [0], [0], [1], [0, 0, 1, 1], [], []>} : vector<8x128xbf16>, vector<128x128xbf16>, vector<8x128xf32> -> vector<8x128xf32>
    %c0_44 = arith.constant 0 : index
    %c0_45 = arith.constant 0 : index
    %56 = vector.load %arg17[%c0_44, %c0_45] : memref<1x128xf32, #tpu.memory_space<vmem>>, vector<1x128xf32>
    %57 = vector.broadcast %56 : vector<1x128xf32> to vector<8x128xf32>
    %58 = arith.addf %55, %57 : vector<8x128xf32>
    %59 = tpu.iota {dimensions = array<i32: 1>} : vector<8x128xi32>
    %c2_i32 = arith.constant 2 : i32
    %60 = vector.broadcast %c2_i32 : i32 to vector<8x128xi32>
    %61 = arith.cmpi slt, %59, %60 : vector<8x128xi32>
    %cst_46 = arith.constant 0xFF800000 : f32
    %62 = vector.broadcast %cst_46 : f32 to vector<8x128xf32>
    %63 = arith.select %61, %58, %62 : vector<8x128xi1>, vector<8x128xf32>
    %cst_47 = arith.constant dense<0xFF800000> : vector<8xf32>
    %64 = vector.multi_reduction <maximumf>, %63, %cst_47 [1] : vector<8x128xf32> to vector<8xf32>
    %65 = vector.shape_cast %64 : vector<8xf32> to vector<8x1xf32>
    %66 = vector.broadcast %65 : vector<8x1xf32> to vector<8x128xf32>
    %67 = arith.subf %63, %66 : vector<8x128xf32>
    %68 = math.exp %67 : vector<8x128xf32>
    %cst_48 = arith.constant dense<0.000000e+00> : vector<8xf32>
    %69 = vector.multi_reduction <add>, %68, %cst_48 [1] : vector<8x128xf32> to vector<8xf32>
    %70 = vector.shape_cast %69 : vector<8xf32> to vector<8x1xf32>
    %71 = tpu.reciprocal %70 {approx = true} : vector<8x1xf32> -> vector<8x1xf32>
    %72 = vector.broadcast %71 : vector<8x1xf32> to vector<8x128xf32>
    %73 = arith.mulf %68, %72 : vector<8x128xf32>
    %c0_49 = arith.constant 0 : index
    %c0_50 = arith.constant 0 : index
    %74 = vector.load %arg18[%c0_49, %c0_50] : memref<8x128xf32, #tpu.memory_space<vmem>>, vector<8x128xf32>
    tpu.vector_store %arg18[%c0_49, %c0_50], %73 {strides = array<i32>} : memref<8x128xf32, #tpu.memory_space<vmem>>, vector<8x128xf32>,
    return
  }
  func.func @transform_0(%arg0: i32) -> (i32, i32) {
    %c0_i32 = arith.constant 0 : i32
    %c0_i32_0 = arith.constant 0 : i32
    %c0_i32_1 = arith.constant 0 : i32
    return %c0_i32, %c0_i32_0 : i32, i32
  }
  func.func @transform_1(%arg0: i32) -> (i32, i32) {
    %c0_i32 = arith.constant 0 : i32
    %c0_i32_0 = arith.constant 0 : i32
    %c0_i32_1 = arith.constant 0 : i32
    return %c0_i32, %c0_i32_0 : i32, i32
  }
  func.func @transform_2(%arg0: i32) -> (i32, i32) {
    %c0_i32 = arith.constant 0 : i32
    %c0_i32_0 = arith.constant 0 : i32
    %c0_i32_1 = arith.constant 0 : i32
    return %c0_i32, %c0_i32_0 : i32, i32
  }
  func.func @transform_3(%arg0: i32) -> (i32, i32) {
    %c0_i32 = arith.constant 0 : i32
    %c0_i32_0 = arith.constant 0 : i32
    %c0_i32_1 = arith.constant 0 : i32
    return %c0_i32, %c0_i32_0 : i32, i32
  }
  func.func @transform_4(%arg0: i32) -> (i32, i32) {
    %c0_i32 = arith.constant 0 : i32
    %c0_i32_0 = arith.constant 0 : i32
    %c0_i32_1 = arith.constant 0 : i32
    return %c0_i32, %c0_i32_0 : i32, i32
  }
  func.func @transform_5(%arg0: i32) -> (i32, i32) {
    %c0_i32 = arith.constant 0 : i32
    %c0_i32_0 = arith.constant 0 : i32
    %c0_i32_1 = arith.constant 0 : i32
    return %c0_i32, %c0_i32_0 : i32, i32
  }
  func.func @transform_6(%arg0: i32) -> (i32, i32) {
    %c0_i32 = arith.constant 0 : i32
    %c0_i32_0 = arith.constant 0 : i32
    %c0_i32_1 = arith.constant 0 : i32
    return %c0_i32, %c0_i32_0 : i32, i32
  }
  func.func @transform_7(%arg0: i32) -> (i32, i32) {
    %c0_i32 = arith.constant 0 : i32
    %c0_i32_0 = arith.constant 0 : i32
    %c0_i32_1 = arith.constant 0 : i32
    return %c0_i32, %c0_i32_0 : i32, i32
  }
  func.func @transform_8(%arg0: i32) -> (i32, i32) {
    %c0_i32 = arith.constant 0 : i32
    %c0_i32_0 = arith.constant 0 : i32
    %c0_i32_1 = arith.constant 0 : i32
    return %c0_i32, %c0_i32_0 : i32, i32
  }
  func.func @transform_9(%arg0: i32) -> (i32, i32) {
    %c0_i32 = arith.constant 0 : i32
    %c0_i32_0 = arith.constant 0 : i32
    %c0_i32_1 = arith.constant 0 : i32
    return %c0_i32, %c0_i32_0 : i32, i32
  }
  func.func @transform_10(%arg0: i32) -> (i32, i32) {
    %c0_i32 = arith.constant 0 : i32
    %c0_i32_0 = arith.constant 0 : i32
    %c0_i32_1 = arith.constant 0 : i32
    return %c0_i32, %c0_i32_0 : i32, i32
  }
  func.func @transform_11(%arg0: i32) -> (i32, i32) {
    %c0_i32 = arith.constant 0 : i32
    %c0_i32_0 = arith.constant 0 : i32
    %c0_i32_1 = arith.constant 0 : i32
    return %c0_i32, %c0_i32_0 : i32, i32
  }
  func.func @transform_12(%arg0: i32) -> (i32, i32) {
    %c0_i32 = arith.constant 0 : i32
    %c0_i32_0 = arith.constant 0 : i32
    %c0_i32_1 = arith.constant 0 : i32
    return %c0_i32, %c0_i32_0 : i32, i32
  }
  func.func @transform_13(%arg0: i32) -> (i32, i32) {
    %c0_i32 = arith.constant 0 : i32
    %c0_i32_0 = arith.constant 0 : i32
    %c0_i32_1 = arith.constant 0 : i32
    return %c0_i32, %c0_i32_0 : i32, i32
  }
  func.func @transform_14(%arg0: i32) -> (i32, i32) {
    %c0_i32 = arith.constant 0 : i32
    %c0_i32_0 = arith.constant 0 : i32
    %c0_i32_1 = arith.constant 0 : i32
    return %c0_i32, %c0_i32_0 : i32, i32
  }
  func.func @transform_15(%arg0: i32) -> (i32, i32) {
    %c0_i32 = arith.constant 0 : i32
    %c0_i32_0 = arith.constant 0 : i32
    %c0_i32_1 = arith.constant 0 : i32
    return %c0_i32, %c0_i32_0 : i32, i32
  }
  func.func @transform_16(%arg0: i32) -> (i32, i32) {
    %c0_i32 = arith.constant 0 : i32
    %c0_i32_0 = arith.constant 0 : i32
    %c0_i32_1 = arith.constant 0 : i32
    return %c0_i32, %c0_i32_0 : i32, i32
  }
  func.func @transform_17(%arg0: i32) -> (i32, i32) {
    %c0_i32 = arith.constant 0 : i32
    %c0_i32_0 = arith.constant 0 : i32
    %c0_i32_1 = arith.constant 0 : i32
    return %c0_i32, %c0_i32_0 : i32, i32
  }
}

</mosaic_0001>

<llo_original>
// kernel: squeeze.10
$region0: #{squeeze.10}
  %s0 = inlined_call_operand.vmem [shape: bf16[14,14,75], index: 0, kind: input, shape index: {}]
  %s1 = inlined_call_operand.vmem [shape: bf16[1,196,75], index: 1, kind: output, shape index: {}]
  $region1: #{squeeze.10} parent=0
    #allocation0 [shape = 'u8[102400]{0}', space=vmem, size = 0x19000, scoped, tag = 'scoped mem for output reshape']
    #allocation1 [shape = 'u8[114688]{0}', space=vmem, size = 0x1c000, scoped, tag = 'scoped mem for input reshape']
    %s3 = smul.u32 4, 2
    %s4 = sshllo.u32 0, %s3
    %s5 = smul.addr 4, 27
    %s6 = scalar_lea.vmem %s0, %s5
    %s7 = sshrl.u32 %s4, 1
    %s8 = sor.u32 %s4, %s7
    %s9 = sand.u32 %s8, 85
    %s10 = sshrl.u32 %s9, 1
    %s11 = sor.u32 %s9, %s10
    %s12 = sand.u32 51, %s11
    %s13 = sshrl.u32 %s12, 2
    %s14 = sor.u32 %s12, %s13
    %s15 = sand.u32 15, %s14
    %v16 = vld [vmem:[%s6] sm:%s15]
    %v17 = vunpack.c.l.bf16 %v16
    %v18 = vunpack.c.h.bf16 %v16
    %s19 = scalar_lea.vmem [#allocation1], 216
    %20 = vst [vmem:[%s19] sm:%s4] %v17
    %s21 = smul.addr 4, 26
    %s22 = scalar_lea.vmem %s0, %s21
    %s23 = sshrl.u32 %s4, 1
    %s24 = sor.u32 %s4, %s23
    %s25 = sand.u32 %s24, 85
    %s26 = sshrl.u32 %s25, 1
    %s27 = sor.u32 %s25, %s26
    %s28 = sand.u32 51, %s27
    %s29 = sshrl.u32 %s28, 2
    %s30 = sor.u32 %s28, %s29
    %s31 = sand.u32 15, %s30
    %v32 = vld [vmem:[%s22] sm:%s31]
    %v33 = vunpack.c.l.bf16 %v32
    %v34 = vunpack.c.h.bf16 %v32
    %s35 = scalar_lea.vmem [#allocation1], 208
    %36 = vst [vmem:[%s35] sm:%s4] %v33
    %s37 = smul.addr 4, 25
    %s38 = scalar_lea.vmem %s0, %s37
    %s39 = sshrl.u32 %s4, 1
    %s40 = sor.u32 %s4, %s39
    %s41 = sand.u32 %s40, 85
    %s42 = sshrl.u32 %s41, 1
    %s43 = sor.u32 %s41, %s42
    %s44 = sand.u32 51, %s43
    %s45 = sshrl.u32 %s44, 2
    %s46 = sor.u32 %s44, %s45
    %s47 = sand.u32 15, %s46
    %v48 = vld [vmem:[%s38] sm:%s47]
    %v49 = vunpack.c.l.bf16 %v48
    %v50 = vunpack.c.h.bf16 %v48
    %s51 = scalar_lea.vmem [#allocation1], 200
    %52 = vst [vmem:[%s51] sm:%s4] %v49
    %s53 = smul.addr 4, 24
    %s54 = scalar_lea.vmem %s0, %s53
    %s55 = sshrl.u32 %s4, 1
    %s56 = sor.u32 %s4, %s55
    %s57 = sand.u32 %s56, 85
    %s58 = sshrl.u32 %s57, 1
    %s59 = sor.u32 %s57, %s58
    %s60 = sand.u32 51, %s59
    %s61 = sshrl.u32 %s60, 2
    %s62 = sor.u32 %s60, %s61
    %s63 = sand.u32 15, %s62
    %v64 = vld [vmem:[%s54] sm:%s63]
    %v65 = vunpack.c.l.bf16 %v64
    %v66 = vunpack.c.h.bf16 %v64
    %s67 = scalar_lea.vmem [#allocation1], 192
    %68 = vst [vmem:[%s67] sm:%s4] %v65
    %s69 = smul.addr 4, 23
    %s70 = scalar_lea.vmem %s0, %s69
    %s71 = sshrl.u32 %s4, 1
    %s72 = sor.u32 %s4, %s71
    %s73 = sand.u32 %s72, 85
    %s74 = sshrl.u32 %s73, 1
    %s75 = sor.u32 %s73, %s74
    %s76 = sand.u32 51, %s75
    %s77 = sshrl.u32 %s76, 2
    %s78 = sor.u32 %s76, %s77
    %s79 = sand.u32 15, %s78
    %v80 = vld [vmem:[%s70] sm:%s79]
    %v81 = vunpack.c.l.bf16 %v80
    %v82 = vunpack.c.h.bf16 %v80
    %s83 = scalar_lea.vmem [#allocation1], 184
    %84 = vst [vmem:[%s83] sm:%s4] %v81
    %s85 = smul.addr 4, 22
    %s86 = scalar_lea.vmem %s0, %s85
    %s87 = sshrl.u32 %s4, 1
    %s88 = sor.u32 %s4, %s87
    %s89 = sand.u32 %s88, 85
    %s90 = sshrl.u32 %s89, 1
    %s91 = sor.u32 %s89, %s90
    %s92 = sand.u32 51, %s91
    %s93 = sshrl.u32 %s92, 2
    %s94 = sor.u32 %s92, %s93
    %s95 = sand.u32 15, %s94
    %v96 = vld [vmem:[%s86] sm:%s95]
    %v97 = vunpack.c.l.bf16 %v96
    %v98 = vunpack.c.h.bf16 %v96
    %s99 = scalar_lea.vmem [#allocation1], 176
    %100 = vst [vmem:[%s99] sm:%s4] %v97
    %s101 = smul.addr 4, 21
    %s102 = scalar_lea.vmem %s0, %s101
    %s103 = sshrl.u32 %s4, 1
    %s104 = sor.u32 %s4, %s103
    %s105 = sand.u32 %s104, 85
    %s106 = sshrl.u32 %s105, 1
    %s107 = sor.u32 %s105, %s106
    %s108 = sand.u32 51, %s107
    %s109 = sshrl.u32 %s108, 2
    %s110 = sor.u32 %s108, %s109
    %s111 = sand.u32 15, %s110
    %v112 = vld [vmem:[%s102] sm:%s111]
    %v113 = vunpack.c.l.bf16 %v112
    %v114 = vunpack.c.h.bf16 %v112
    %s115 = scalar_lea.vmem [#allocation1], 168
    %116 = vst [vmem:[%s115] sm:%s4] %v113
    %s117 = smul.addr 4, 20
    %s118 = scalar_lea.vmem %s0, %s117
    %s119 = sshrl.u32 %s4, 1
    %s120 = sor.u32 %s4, %s119
    %s121 = sand.u32 %s120, 85
    %s122 = sshrl.u32 %s121, 1
    %s123 = sor.u32 %s121, %s122
    %s124 = sand.u32 51, %s123
    %s125 = sshrl.u32 %s124, 2
    %s126 = sor.u32 %s124, %s125
    %s127 = sand.u32 15, %s126
    %v128 = vld [vmem:[%s118] sm:%s127]
    %v129 = vunpack.c.l.bf16 %v128
    %v130 = vunpack.c.h.bf16 %v128
    %s131 = scalar_lea.vmem [#allocation1], 160
    %132 = vst [vmem:[%s131] sm:%s4] %v129
    %s133 = smul.addr 4, 19
    %s134 = scalar_lea.vmem %s0, %s133
    %s135 = sshrl.u32 %s4, 1
    %s136 = sor.u32 %s4, %s135
    %s137 = sand.u32 %s136, 85
    %s138 = sshrl.u32 %s137, 1
    %s139 = sor.u32 %s137, %s138
    %s140 = sand.u32 51, %s139
    %s141 = sshrl.u32 %s140, 2
    %s142 = sor.u32 %s140, %s141
    %s143 = sand.u32 15, %s142
    %v144 = vld [vmem:[%s134] sm:%s143]
    %v145 = vunpack.c.l.bf16 %v144
    %v146 = vunpack.c.h.bf16 %v144
    %s147 = scalar_lea.vmem [#allocation1], 152
    %148 = vst [vmem:[%s147] sm:%s4] %v145
    %s149 = smul.addr 4, 18
    %s150 = scalar_lea.vmem %s0, %s149
    %s151 = sshrl.u32 %s4, 1
    %s152 = sor.u32 %s4, %s151
    %s153 = sand.u32 %s152, 85
    %s154 = sshrl.u32 %s153, 1
    %s155 = sor.u32 %s153, %s154
    %s156 = sand.u32 51, %s155
    %s157 = sshrl.u32 %s156, 2
    %s158 = sor.u32 %s156, %s157
    %s159 = sand.u32 15, %s158
    %v160 = vld [vmem:[%s150] sm:%s159]
    %v161 = vunpack.c.l.bf16 %v160
    %v162 = vunpack.c.h.bf16 %v160
    %s163 = scalar_lea.vmem [#allocation1], 144
    %164 = vst [vmem:[%s163] sm:%s4] %v161
    %s165 = smul.addr 4, 17
    %s166 = scalar_lea.vmem %s0, %s165
    %s167 = sshrl.u32 %s4, 1
    %s168 = sor.u32 %s4, %s167
    %s169 = sand.u32 %s168, 85
    %s170 = sshrl.u32 %s169, 1
    %s171 = sor.u32 %s169, %s170
    %s172 = sand.u32 51, %s171
    %s173 = sshrl.u32 %s172, 2
    %s174 = sor.u32 %s172, %s173
    %s175 = sand.u32 15, %s174
    %v176 = vld [vmem:[%s166] sm:%s175]
    %v177 = vunpack.c.l.bf16 %v176
    %v178 = vunpack.c.h.bf16 %v176
    %s179 = scalar_lea.vmem [#allocation1], 136
    %180 = vst [vmem:[%s179] sm:%s4] %v177
    %s181 = smul.addr 4, 16
    %s182 = scalar_lea.vmem %s0, %s181
    %s183 = sshrl.u32 %s4, 1
    %s184 = sor.u32 %s4, %s183
    %s185 = sand.u32 %s184, 85
    %s186 = sshrl.u32 %s185, 1
    %s187 = sor.u32 %s185, %s186
    %s188 = sand.u32 51, %s187
    %s189 = sshrl.u32 %s188, 2
    %s190 = sor.u32 %s188, %s189
    %s191 = sand.u32 15, %s190
    %v192 = vld [vmem:[%s182] sm:%s191]
    %v193 = vunpack.c.l.bf16 %v192
    %v194 = vunpack.c.h.bf16 %v192
    %s195 = scalar_lea.vmem [#allocation1], 128
    %196 = vst [vmem:[%s195] sm:%s4] %v193
    %s197 = smul.addr 4, 15
    %s198 = scalar_lea.vmem %s0, %s197
    %s199 = sshrl.u32 %s4, 1
    %s200 = sor.u32 %s4, %s199
    %s201 = sand.u32 %s200, 85
    %s202 = sshrl.u32 %s201, 1
    %s203 = sor.u32 %s201, %s202
    %s204 = sand.u32 51, %s203
    %s205 = sshrl.u32 %s204, 2
    %s206 = sor.u32 %s204, %s205
    %s207 = sand.u32 15, %s206
    %v208 = vld [vmem:[%s198] sm:%s207]
    %v209 = vunpack.c.l.bf16 %v208
    %v210 = vunpack.c.h.bf16 %v208
    %s211 = scalar_lea.vmem [#allocation1], 120
    %212 = vst [vmem:[%s211] sm:%s4] %v209
    %s213 = smul.addr 4, 14
    %s214 = scalar_lea.vmem %s0, %s213
    %s215 = sshrl.u32 %s4, 1
    %s216 = sor.u32 %s4, %s215
    %s217 = sand.u32 %s216, 85
    %s218 = sshrl.u32 %s217, 1
    %s219 = sor.u32 %s217, %s218
    %s220 = sand.u32 51, %s219
    %s221 = sshrl.u32 %s220, 2
    %s222 = sor.u32 %s220, %s221
    %s223 = sand.u32 15, %s222
    %v224 = vld [vmem:[%s214] sm:%s223]
    %v225 = vunpack.c.l.bf16 %v224
    %v226 = vunpack.c.h.bf16 %v224
    %s227 = scalar_lea.vmem [#allocation1], 112
    %228 = vst [vmem:[%s227] sm:%s4] %v225
    %s229 = smul.addr 4, 13
    %s230 = scalar_lea.vmem %s0, %s229
    %s231 = sshrl.u32 %s4, 1
    %s232 = sor.u32 %s4, %s231
    %s233 = sand.u32 %s232, 85
    %s234 = sshrl.u32 %s233, 1
    %s235 = sor.u32 %s233, %s234
    %s236 = sand.u32 51, %s235
    %s237 = sshrl.u32 %s236, 2
    %s238 = sor.u32 %s236, %s237
    %s239 = sand.u32 15, %s238
    %v240 = vld [vmem:[%s230] sm:%s239]
    %v241 = vunpack.c.l.bf16 %v240
    %v242 = vunpack.c.h.bf16 %v240
    %s243 = scalar_lea.vmem [#allocation1], 104
    %244 = vst [vmem:[%s243] sm:%s4] %v241
    %s245 = smul.addr 4, 12
    %s246 = scalar_lea.vmem %s0, %s245
    %s247 = sshrl.u32 %s4, 1
    %s248 = sor.u32 %s4, %s247
    %s249 = sand.u32 %s248, 85
    %s250 = sshrl.u32 %s249, 1
    %s251 = sor.u32 %s249, %s250
    %s252 = sand.u32 51, %s251
    %s253 = sshrl.u32 %s252, 2
    %s254 = sor.u32 %s252, %s253
    %s255 = sand.u32 15, %s254
    %v256 = vld [vmem:[%s246] sm:%s255]
    %v257 = vunpack.c.l.bf16 %v256
    %v258 = vunpack.c.h.bf16 %v256
    %s259 = scalar_lea.vmem [#allocation1], 96
    %260 = vst [vmem:[%s259] sm:%s4] %v257
    %s261 = smul.addr 4, 11
    %s262 = scalar_lea.vmem %s0, %s261
    %s263 = sshrl.u32 %s4, 1
    %s264 = sor.u32 %s4, %s263
    %s265 = sand.u32 %s264, 85
    %s266 = sshrl.u32 %s265, 1
    %s267 = sor.u32 %s265, %s266
    %s268 = sand.u32 51, %s267
    %s269 = sshrl.u32 %s268, 2
    %s270 = sor.u32 %s268, %s269
    %s271 = sand.u32 15, %s270
    %v272 = vld [vmem:[%s262] sm:%s271]
    %v273 = vunpack.c.l.bf16 %v272
    %v274 = vunpack.c.h.bf16 %v272
    %s275 = scalar_lea.vmem [#allocation1], 88
    %276 = vst [vmem:[%s275] sm:%s4] %v273
    %s277 = smul.addr 4, 10
    %s278 = scalar_lea.vmem %s0, %s277
    %s279 = sshrl.u32 %s4, 1
    %s280 = sor.u32 %s4, %s279
    %s281 = sand.u32 %s280, 85
    %s282 = sshrl.u32 %s281, 1
    %s283 = sor.u32 %s281, %s282
    %s284 = sand.u32 51, %s283
    %s285 = sshrl.u32 %s284, 2
    %s286 = sor.u32 %s284, %s285
    %s287 = sand.u32 15, %s286
    %v288 = vld [vmem:[%s278] sm:%s287]
    %v289 = vunpack.c.l.bf16 %v288
    %v290 = vunpack.c.h.bf16 %v288
    %s291 = scalar_lea.vmem [#allocation1], 80
    %292 = vst [vmem:[%s291] sm:%s4] %v289
    %s293 = smul.addr 4, 9
    %s294 = scalar_lea.vmem %s0, %s293
    %s295 = sshrl.u32 %s4, 1
    %s296 = sor.u32 %s4, %s295
    %s297 = sand.u32 %s296, 85
    %s298 = sshrl.u32 %s297, 1
    %s299 = sor.u32 %s297, %s298
    %s300 = sand.u32 51, %s299
    %s301 = sshrl.u32 %s300, 2
    %s302 = sor.u32 %s300, %s301
    %s303 = sand.u32 15, %s302
    %v304 = vld [vmem:[%s294] sm:%s303]
    %v305 = vunpack.c.l.bf16 %v304
    %v306 = vunpack.c.h.bf16 %v304
    %s307 = scalar_lea.vmem [#allocation1], 72
    %308 = vst [vmem:[%s307] sm:%s4] %v305
    %s309 = smul.addr 4, 8
    %s310 = scalar_lea.vmem %s0, %s309
    %s311 = sshrl.u32 %s4, 1
    %s312 = sor.u32 %s4, %s311
    %s313 = sand.u32 %s312, 85
    %s314 = sshrl.u32 %s313, 1
    %s315 = sor.u32 %s313, %s314
    %s316 = sand.u32 51, %s315
    %s317 = sshrl.u32 %s316, 2
    %s318 = sor.u32 %s316, %s317
    %s319 = sand.u32 15, %s318
    %v320 = vld [vmem:[%s310] sm:%s319]
    %v321 = vunpack.c.l.bf16 %v320
    %v322 = vunpack.c.h.bf16 %v320
    %s323 = scalar_lea.vmem [#allocation1], 64
    %324 = vst [vmem:[%s323] sm:%s4] %v321
    %s325 = smul.addr 4, 7
    %s326 = scalar_lea.vmem %s0, %s325
    %s327 = sshrl.u32 %s4, 1
    %s328 = sor.u32 %s4, %s327
    %s329 = sand.u32 %s328, 85
    %s330 = sshrl.u32 %s329, 1
    %s331 = sor.u32 %s329, %s330
    %s332 = sand.u32 51, %s331
    %s333 = sshrl.u32 %s332, 2
    %s334 = sor.u32 %s332, %s333
    %s335 = sand.u32 15, %s334
    %v336 = vld [vmem:[%s326] sm:%s335]
    %v337 = vunpack.c.l.bf16 %v336
    %v338 = vunpack.c.h.bf16 %v336
    %s339 = scalar_lea.vmem [#allocation1], 56
    %340 = vst [vmem:[%s339] sm:%s4] %v337
    %s341 = smul.addr 4, 6
    %s342 = scalar_lea.vmem %s0, %s341
    %s343 = sshrl.u32 %s4, 1
    %s344 = sor.u32 %s4, %s343
    %s345 = sand.u32 %s344, 85
    %s346 = sshrl.u32 %s345, 1
    %s347 = sor.u32 %s345, %s346
    %s348 = sand.u32 51, %s347
    %s349 = sshrl.u32 %s348, 2
    %s350 = sor.u32 %s348, %s349
    %s351 = sand.u32 15, %s350
    %v352 = vld [vmem:[%s342] sm:%s351]
    %v353 = vunpack.c.l.bf16 %v352
    %v354 = vunpack.c.h.bf16 %v352
    %s355 = scalar_lea.vmem [#allocation1], 48
    %356 = vst [vmem:[%s355] sm:%s4] %v353
    %s357 = smul.addr 4, 5
    %s358 = scalar_lea.vmem %s0, %s357
    %s359 = sshrl.u32 %s4, 1
    %s360 = sor.u32 %s4, %s359
    %s361 = sand.u32 %s360, 85
    %s362 = sshrl.u32 %s361, 1
    %s363 = sor.u32 %s361, %s362
    %s364 = sand.u32 51, %s363
    %s365 = sshrl.u32 %s364, 2
    %s366 = sor.u32 %s364, %s365
    %s367 = sand.u32 15, %s366
    %v368 = vld [vmem:[%s358] sm:%s367]
    %v369 = vunpack.c.l.bf16 %v368
    %v370 = vunpack.c.h.bf16 %v368
    %s371 = scalar_lea.vmem [#allocation1], 40
    %372 = vst [vmem:[%s371] sm:%s4] %v369
    %s373 = smul.addr 4, 4
    %s374 = scalar_lea.vmem %s0, %s373
    %s375 = sshrl.u32 %s4, 1
    %s376 = sor.u32 %s4, %s375
    %s377 = sand.u32 %s376, 85
    %s378 = sshrl.u32 %s377, 1
    %s379 = sor.u32 %s377, %s378
    %s380 = sand.u32 51, %s379
    %s381 = sshrl.u32 %s380, 2
    %s382 = sor.u32 %s380, %s381
    %s383 = sand.u32 15, %s382
    %v384 = vld [vmem:[%s374] sm:%s383]
    %v385 = vunpack.c.l.bf16 %v384
    %v386 = vunpack.c.h.bf16 %v384
    %s387 = scalar_lea.vmem [#allocation1], 32
    %388 = vst [vmem:[%s387] sm:%s4] %v385
    %s389 = smul.addr 4, 3
    %s390 = scalar_lea.vmem %s0, %s389
    %s391 = sshrl.u32 %s4, 1
    %s392 = sor.u32 %s4, %s391
    %s393 = sand.u32 %s392, 85
    %s394 = sshrl.u32 %s393, 1
    %s395 = sor.u32 %s393, %s394
    %s396 = sand.u32 51, %s395
    %s397 = sshrl.u32 %s396, 2
    %s398 = sor.u32 %s396, %s397
    %s399 = sand.u32 15, %s398
    %v400 = vld [vmem:[%s390] sm:%s399]
    %v401 = vunpack.c.l.bf16 %v400
    %v402 = vunpack.c.h.bf16 %v400
    %s403 = scalar_lea.vmem [#allocation1], 24
    %404 = vst [vmem:[%s403] sm:%s4] %v401
    %s405 = smul.addr 4, 2
    %s406 = scalar_lea.vmem %s0, %s405
    %s407 = sshrl.u32 %s4, 1
    %s408 = sor.u32 %s4, %s407
    %s409 = sand.u32 %s408, 85
    %s410 = sshrl.u32 %s409, 1
    %s411 = sor.u32 %s409, %s410
    %s412 = sand.u32 51, %s411
    %s413 = sshrl.u32 %s412, 2
    %s414 = sor.u32 %s412, %s413
    %s415 = sand.u32 15, %s414
    %v416 = vld [vmem:[%s406] sm:%s415]
    %v417 = vunpack.c.l.bf16 %v416
    %v418 = vunpack.c.h.bf16 %v416
    %s419 = scalar_lea.vmem [#allocation1], 16
    %420 = vst [vmem:[%s419] sm:%s4] %v417
    %s421 = scalar_lea.vmem %s0, 4
    %s422 = sshrl.u32 %s4, 1
    %s423 = sor.u32 %s4, %s422
    %s424 = sand.u32 %s423, 85
    %s425 = sshrl.u32 %s424, 1
    %s426 = sor.u32 %s424, %s425
    %s427 = sand.u32 51, %s426
    %s428 = sshrl.u32 %s427, 2
    %s429 = sor.u32 %s427, %s428
    %s430 = sand.u32 15, %s429
    %v431 = vld [vmem:[%s421] sm:%s430]
    %v432 = vunpack.c.l.bf16 %v431
    %v433 = vunpack.c.h.bf16 %v431
    %s434 = scalar_lea.vmem [#allocation1], 8
    %435 = vst [vmem:[%s434] sm:%s4] %v432
    %s436 = sshrl.u32 %s4, 1
    %s437 = sor.u32 %s4, %s436
    %s438 = sand.u32 %s437, 85
    %s439 = sshrl.u32 %s438, 1
    %s440 = sor.u32 %s438, %s439
    %s441 = sand.u32 51, %s440
    %s442 = sshrl.u32 %s441, 2
    %s443 = sor.u32 %s441, %s442
    %s444 = sand.u32 15, %s443
    %v445 = vld [vmem:[%s0] sm:%s444]
    %v446 = vunpack.c.l.bf16 %v445
    %v447 = vunpack.c.h.bf16 %v445
    %448 = vst [vmem:[#allocation1] sm:%s4] %v446
    %v449 = vld [vmem:[#allocation1] sm:$0xff]
    %vm450 = vcmask 613376
    %451 = vst.msk [vmem:[#allocation0] sm:$0xff] %vm450, %v449
    %s452 = scalar_lea.vmem [#allocation1], 8
    %v453 = vld [vmem:[%s452] sm:$0x3f]
    %vm454 = vcmask 613376
    %s455 = scalar_lea.vmem [#allocation0], 8
    %456 = vst.msk [vmem:[%s455] sm:$0x3f] %vm454, %v453
    %s457 = scalar_lea.vmem [#allocation1], 16
    %v458 = vld [vmem:[%s457] sm:$0xff]
    %vm459 = vcmask 613376
    %s460 = scalar_lea.vmem [#allocation0], 14
    %461 = vst.msk [vmem:[%s460] sm:$0xff] %vm459, %v458
    %s462 = scalar_lea.vmem [#allocation1], 24
    %v463 = vld [vmem:[%s462] sm:$0x3f]
    %vm464 = vcmask 613376
    %s465 = scalar_lea.vmem [#allocation0], 22
    %466 = vst.msk [vmem:[%s465] sm:$0x3f] %vm464, %v463
    %s467 = scalar_lea.vmem [#allocation1], 32
    %v468 = vld [vmem:[%s467] sm:$0xff]
    %vm469 = vcmask 613376
    %s470 = scalar_lea.vmem [#allocation0], 28
    %471 = vst.msk [vmem:[%s470] sm:$0xff] %vm469, %v468
    %s472 = scalar_lea.vmem [#allocation1], 40
    %v473 = vld [vmem:[%s472] sm:$0x3f]
    %vm474 = vcmask 613376
    %s475 = scalar_lea.vmem [#allocation0], 36
    %476 = vst.msk [vmem:[%s475] sm:$0x3f] %vm474, %v473
    %s477 = scalar_lea.vmem [#allocation1], 48
    %v478 = vld [vmem:[%s477] sm:$0xff]
    %vm479 = vcmask 613376
    %s480 = scalar_lea.vmem [#allocation0], 42
    %481 = vst.msk [vmem:[%s480] sm:$0xff] %vm479, %v478
    %s482 = scalar_lea.vmem [#allocation1], 56
    %v483 = vld [vmem:[%s482] sm:$0x3f]
    %vm484 = vcmask 613376
    %s485 = scalar_lea.vmem [#allocation0], 50
    %486 = vst.msk [vmem:[%s485] sm:$0x3f] %vm484, %v483
    %s487 = scalar_lea.vmem [#allocation1], 64
    %v488 = vld [vmem:[%s487] sm:$0xff]
    %vm489 = vcmask 613376
    %s490 = scalar_lea.vmem [#allocation0], 56
    %491 = vst.msk [vmem:[%s490] sm:$0xff] %vm489, %v488
    %s492 = scalar_lea.vmem [#allocation1], 72
    %v493 = vld [vmem:[%s492] sm:$0x3f]
    %vm494 = vcmask 613376
    %s495 = scalar_lea.vmem [#allocation0], 64
    %496 = vst.msk [vmem:[%s495] sm:$0x3f] %vm494, %v493
    %s497 = scalar_lea.vmem [#allocation1], 80
    %v498 = vld [vmem:[%s497] sm:$0xff]
    %vm499 = vcmask 613376
    %s500 = scalar_lea.vmem [#allocation0], 70
    %501 = vst.msk [vmem:[%s500] sm:$0xff] %vm499, %v498
    %s502 = scalar_lea.vmem [#allocation1], 88
    %v503 = vld [vmem:[%s502] sm:$0x3f]
    %vm504 = vcmask 613376
    %s505 = scalar_lea.vmem [#allocation0], 78
    %506 = vst.msk [vmem:[%s505] sm:$0x3f] %vm504, %v503
    %s507 = scalar_lea.vmem [#allocation1], 96
    %v508 = vld [vmem:[%s507] sm:$0xff]
    %vm509 = vcmask 613376
    %s510 = scalar_lea.vmem [#allocation0], 84
    %511 = vst.msk [vmem:[%s510] sm:$0xff] %vm509, %v508
    %s512 = scalar_lea.vmem [#allocation1], 104
    %v513 = vld [vmem:[%s512] sm:$0x3f]
    %vm514 = vcmask 613376
    %s515 = scalar_lea.vmem [#allocation0], 92
    %516 = vst.msk [vmem:[%s515] sm:$0x3f] %vm514, %v513
    %s517 = scalar_lea.vmem [#allocation1], 112
    %v518 = vld [vmem:[%s517] sm:$0xff]
    %vm519 = vcmask 613376
    %s520 = scalar_lea.vmem [#allocation0], 98
    %521 = vst.msk [vmem:[%s520] sm:$0xff] %vm519, %v518
    %s522 = scalar_lea.vmem [#allocation1], 120
    %v523 = vld [vmem:[%s522] sm:$0x3f]
    %vm524 = vcmask 613376
    %s525 = scalar_lea.vmem [#allocation0], 106
    %526 = vst.msk [vmem:[%s525] sm:$0x3f] %vm524, %v523
    %s527 = scalar_lea.vmem [#allocation1], 128
    %v528 = vld [vmem:[%s527] sm:$0xff]
    %vm529 = vcmask 613376
    %s530 = scalar_lea.vmem [#allocation0], 112
    %531 = vst.msk [vmem:[%s530] sm:$0xff] %vm529, %v528
    %s532 = scalar_lea.vmem [#allocation1], 136
    %v533 = vld [vmem:[%s532] sm:$0x3f]
    %vm534 = vcmask 613376
    %s535 = scalar_lea.vmem [#allocation0], 120
    %536 = vst.msk [vmem:[%s535] sm:$0x3f] %vm534, %v533
    %s537 = scalar_lea.vmem [#allocation1], 144
    %v538 = vld [vmem:[%s537] sm:$0xff]
    %vm539 = vcmask 613376
    %s540 = scalar_lea.vmem [#allocation0], 126
    %541 = vst.msk [vmem:[%s540] sm:$0xff] %vm539, %v538
    %s542 = scalar_lea.vmem [#allocation1], 152
    %v543 = vld [vmem:[%s542] sm:$0x3f]
    %vm544 = vcmask 613376
    %s545 = scalar_lea.vmem [#allocation0], 134
    %546 = vst.msk [vmem:[%s545] sm:$0x3f] %vm544, %v543
    %s547 = scalar_lea.vmem [#allocation1], 160
    %v548 = vld [vmem:[%s547] sm:$0xff]
    %vm549 = vcmask 613376
    %s550 = scalar_lea.vmem [#allocation0], 140
    %551 = vst.msk [vmem:[%s550] sm:$0xff] %vm549, %v548
    %s552 = scalar_lea.vmem [#allocation1], 168
    %v553 = vld [vmem:[%s552] sm:$0x3f]
    %vm554 = vcmask 613376
    %s555 = scalar_lea.vmem [#allocation0], 148
    %556 = vst.msk [vmem:[%s555] sm:$0x3f] %vm554, %v553
    %s557 = scalar_lea.vmem [#allocation1], 176
    %v558 = vld [vmem:[%s557] sm:$0xff]
    %vm559 = vcmask 613376
    %s560 = scalar_lea.vmem [#allocation0], 154
    %561 = vst.msk [vmem:[%s560] sm:$0xff] %vm559, %v558
    %s562 = scalar_lea.vmem [#allocation1], 184
    %v563 = vld [vmem:[%s562] sm:$0x3f]
    %vm564 = vcmask 613376
    %s565 = scalar_lea.vmem [#allocation0], 162
    %566 = vst.msk [vmem:[%s565] sm:$0x3f] %vm564, %v563
    %s567 = scalar_lea.vmem [#allocation1], 192
    %v568 = vld [vmem:[%s567] sm:$0xff]
    %vm569 = vcmask 613376
    %s570 = scalar_lea.vmem [#allocation0], 168
    %571 = vst.msk [vmem:[%s570] sm:$0xff] %vm569, %v568
    %s572 = scalar_lea.vmem [#allocation1], 200
    %v573 = vld [vmem:[%s572] sm:$0x3f]
    %vm574 = vcmask 613376
    %s575 = scalar_lea.vmem [#allocation0], 176
    %576 = vst.msk [vmem:[%s575] sm:$0x3f] %vm574, %v573
    %s577 = scalar_lea.vmem [#allocation1], 208
    %v578 = vld [vmem:[%s577] sm:$0xff]
    %vm579 = vcmask 613376
    %s580 = scalar_lea.vmem [#allocation0], 182
    %581 = vst.msk [vmem:[%s580] sm:$0xff] %vm579, %v578
    %s582 = scalar_lea.vmem [#allocation1], 216
    %v583 = vld [vmem:[%s582] sm:$0x3f]
    %vm584 = vcmask 613376
    %s585 = scalar_lea.vmem [#allocation0], 190
    %586 = vst.msk [vmem:[%s585] sm:$0x3f] %vm584, %v583
    %s588 = smul.u32 4, 2
    %s589 = sshllo.u32 0, %s588
    %s590 = sshrl.u32 %s588, 1
    %v591 = vld [vmem:[#allocation0] sm:%s589]
    %v592 = vpack.c.bf16 0.0, %v591
    %s593 = sshllo.u32 0, %s590
    %594 = vst [vmem:[%s1] sm:%s593] %v592
    %s595 = scalar_lea.vmem [#allocation0], 8
    %v596 = vld [vmem:[%s595] sm:%s589]
    %v597 = vpack.c.bf16 0.0, %v596
    %s598 = sshllo.u32 0, %s590
    %s599 = scalar_lea.vmem %s1, 4
    %600 = vst [vmem:[%s599] sm:%s598] %v597
    %s601 = scalar_lea.vmem [#allocation0], 16
    %v602 = vld [vmem:[%s601] sm:%s589]
    %v603 = vpack.c.bf16 0.0, %v602
    %s604 = sshllo.u32 0, %s590
    %s605 = smul.addr 4, 2
    %s606 = scalar_lea.vmem %s1, %s605
    %607 = vst [vmem:[%s606] sm:%s604] %v603
    %s608 = scalar_lea.vmem [#allocation0], 24
    %v609 = vld [vmem:[%s608] sm:%s589]
    %v610 = vpack.c.bf16 0.0, %v609
    %s611 = sshllo.u32 0, %s590
    %s612 = smul.addr 4, 3
    %s613 = scalar_lea.vmem %s1, %s612
    %614 = vst [vmem:[%s613] sm:%s611] %v610
    %s615 = scalar_lea.vmem [#allocation0], 32
    %v616 = vld [vmem:[%s615] sm:%s589]
    %v617 = vpack.c.bf16 0.0, %v616
    %s618 = sshllo.u32 0, %s590
    %s619 = smul.addr 4, 4
    %s620 = scalar_lea.vmem %s1, %s619
    %621 = vst [vmem:[%s620] sm:%s618] %v617
    %s622 = scalar_lea.vmem [#allocation0], 40
    %v623 = vld [vmem:[%s622] sm:%s589]
    %v624 = vpack.c.bf16 0.0, %v623
    %s625 = sshllo.u32 0, %s590
    %s626 = smul.addr 4, 5
    %s627 = scalar_lea.vmem %s1, %s626
    %628 = vst [vmem:[%s627] sm:%s625] %v624
    %s629 = scalar_lea.vmem [#allocation0], 48
    %v630 = vld [vmem:[%s629] sm:%s589]
    %v631 = vpack.c.bf16 0.0, %v630
    %s632 = sshllo.u32 0, %s590
    %s633 = smul.addr 4, 6
    %s634 = scalar_lea.vmem %s1, %s633
    %635 = vst [vmem:[%s634] sm:%s632] %v631
    %s636 = scalar_lea.vmem [#allocation0], 56
    %v637 = vld [vmem:[%s636] sm:%s589]
    %v638 = vpack.c.bf16 0.0, %v637
    %s639 = sshllo.u32 0, %s590
    %s640 = smul.addr 4, 7
    %s641 = scalar_lea.vmem %s1, %s640
    %642 = vst [vmem:[%s641] sm:%s639] %v638
    %s643 = scalar_lea.vmem [#allocation0], 64
    %v644 = vld [vmem:[%s643] sm:%s589]
    %v645 = vpack.c.bf16 0.0, %v644
    %s646 = sshllo.u32 0, %s590
    %s647 = smul.addr 4, 8
    %s648 = scalar_lea.vmem %s1, %s647
    %649 = vst [vmem:[%s648] sm:%s646] %v645
    %s650 = scalar_lea.vmem [#allocation0], 72
    %v651 = vld [vmem:[%s650] sm:%s589]
    %v652 = vpack.c.bf16 0.0, %v651
    %s653 = sshllo.u32 0, %s590
    %s654 = smul.addr 4, 9
    %s655 = scalar_lea.vmem %s1, %s654
    %656 = vst [vmem:[%s655] sm:%s653] %v652
    %s657 = scalar_lea.vmem [#allocation0], 80
    %v658 = vld [vmem:[%s657] sm:%s589]
    %v659 = vpack.c.bf16 0.0, %v658
    %s660 = sshllo.u32 0, %s590
    %s661 = smul.addr 4, 10
    %s662 = scalar_lea.vmem %s1, %s661
    %663 = vst [vmem:[%s662] sm:%s660] %v659
    %s664 = scalar_lea.vmem [#allocation0], 88
    %v665 = vld [vmem:[%s664] sm:%s589]
    %v666 = vpack.c.bf16 0.0, %v665
    %s667 = sshllo.u32 0, %s590
    %s668 = smul.addr 4, 11
    %s669 = scalar_lea.vmem %s1, %s668
    %670 = vst [vmem:[%s669] sm:%s667] %v666
    %s671 = scalar_lea.vmem [#allocation0], 96
    %v672 = vld [vmem:[%s671] sm:%s589]
    %v673 = vpack.c.bf16 0.0, %v672
    %s674 = sshllo.u32 0, %s590
    %s675 = smul.addr 4, 12
    %s676 = scalar_lea.vmem %s1, %s675
    %677 = vst [vmem:[%s676] sm:%s674] %v673
    %s678 = scalar_lea.vmem [#allocation0], 104
    %v679 = vld [vmem:[%s678] sm:%s589]
    %v680 = vpack.c.bf16 0.0, %v679
    %s681 = sshllo.u32 0, %s590
    %s682 = smul.addr 4, 13
    %s683 = scalar_lea.vmem %s1, %s682
    %684 = vst [vmem:[%s683] sm:%s681] %v680
    %s685 = scalar_lea.vmem [#allocation0], 112
    %v686 = vld [vmem:[%s685] sm:%s589]
    %v687 = vpack.c.bf16 0.0, %v686
    %s688 = sshllo.u32 0, %s590
    %s689 = smul.addr 4, 14
    %s690 = scalar_lea.vmem %s1, %s689
    %691 = vst [vmem:[%s690] sm:%s688] %v687
    %s692 = scalar_lea.vmem [#allocation0], 120
    %v693 = vld [vmem:[%s692] sm:%s589]
    %v694 = vpack.c.bf16 0.0, %v693
    %s695 = sshllo.u32 0, %s590
    %s696 = smul.addr 4, 15
    %s697 = scalar_lea.vmem %s1, %s696
    %698 = vst [vmem:[%s697] sm:%s695] %v694
    %s699 = scalar_lea.vmem [#allocation0], 128
    %v700 = vld [vmem:[%s699] sm:%s589]
    %v701 = vpack.c.bf16 0.0, %v700
    %s702 = sshllo.u32 0, %s590
    %s703 = smul.addr 4, 16
    %s704 = scalar_lea.vmem %s1, %s703
    %705 = vst [vmem:[%s704] sm:%s702] %v701
    %s706 = scalar_lea.vmem [#allocation0], 136
    %v707 = vld [vmem:[%s706] sm:%s589]
    %v708 = vpack.c.bf16 0.0, %v707
    %s709 = sshllo.u32 0, %s590
    %s710 = smul.addr 4, 17
    %s711 = scalar_lea.vmem %s1, %s710
    %712 = vst [vmem:[%s711] sm:%s709] %v708
    %s713 = scalar_lea.vmem [#allocation0], 144
    %v714 = vld [vmem:[%s713] sm:%s589]
    %v715 = vpack.c.bf16 0.0, %v714
    %s716 = sshllo.u32 0, %s590
    %s717 = smul.addr 4, 18
    %s718 = scalar_lea.vmem %s1, %s717
    %719 = vst [vmem:[%s718] sm:%s716] %v715
    %s720 = scalar_lea.vmem [#allocation0], 152
    %v721 = vld [vmem:[%s720] sm:%s589]
    %v722 = vpack.c.bf16 0.0, %v721
    %s723 = sshllo.u32 0, %s590
    %s724 = smul.addr 4, 19
    %s725 = scalar_lea.vmem %s1, %s724
    %726 = vst [vmem:[%s725] sm:%s723] %v722
    %s727 = scalar_lea.vmem [#allocation0], 160
    %v728 = vld [vmem:[%s727] sm:%s589]
    %v729 = vpack.c.bf16 0.0, %v728
    %s730 = sshllo.u32 0, %s590
    %s731 = smul.addr 4, 20
    %s732 = scalar_lea.vmem %s1, %s731
    %733 = vst [vmem:[%s732] sm:%s730] %v729
    %s734 = scalar_lea.vmem [#allocation0], 168
    %v735 = vld [vmem:[%s734] sm:%s589]
    %v736 = vpack.c.bf16 0.0, %v735
    %s737 = sshllo.u32 0, %s590
    %s738 = smul.addr 4, 21
    %s739 = scalar_lea.vmem %s1, %s738
    %740 = vst [vmem:[%s739] sm:%s737] %v736
    %s741 = scalar_lea.vmem [#allocation0], 176
    %v742 = vld [vmem:[%s741] sm:%s589]
    %v743 = vpack.c.bf16 0.0, %v742
    %s744 = sshllo.u32 0, %s590
    %s745 = smul.addr 4, 22
    %s746 = scalar_lea.vmem %s1, %s745
    %747 = vst [vmem:[%s746] sm:%s744] %v743
    %s748 = scalar_lea.vmem [#allocation0], 184
    %v749 = vld [vmem:[%s748] sm:%s589]
    %v750 = vpack.c.bf16 0.0, %v749
    %s751 = sshllo.u32 0, %s590
    %s752 = smul.addr 4, 23
    %s753 = scalar_lea.vmem %s1, %s752
    %754 = vst [vmem:[%s753] sm:%s751] %v750
    %s755 = scalar_lea.vmem [#allocation0], 192
    %v756 = vld [vmem:[%s755] sm:%s589]
    %v757 = vpack.c.bf16 0.0, %v756
    %s758 = sshllo.u32 0, %s590
    %s759 = smul.addr 4, 24
    %s760 = scalar_lea.vmem %s1, %s759
    %761 = vst [vmem:[%s760] sm:%s758] %v757

// kernel: forward.3
$region0: #{forward.3}
  #allocation0 [shape = 'u32[]', space=smem, size = 0x4, offset = 0x4, fixed_abs, tag = 'smem constant byte address 0x4 - core index']
  #allocation1 [shape = 'u32[144,128]{1,0:T(1,128)}', space=vmem, size = 0x12000, scoped, tag = 'internal scratch']
  %s0 = inlined_call_operand.vmem [shape: bf16[4,196,128], index: 0, kind: input, shape index: {}]
  %s1 = inlined_call_operand.vmem [shape: bf16[128,128], index: 1, kind: input, shape index: {}]
  %s2 = inlined_call_operand.vmem [shape: f32[1,128], index: 2, kind: input, shape index: {}]
  %s3 = inlined_call_operand.vmem [shape: bf16[196,128], index: 3, kind: output, shape index: {}]
  %s4 = sld [smem:[#allocation0]]
  $region22: #{forward.3} parent=0
    _
  %s6 = ssub.s32 1, %s4
  %s7 = scalar_select 0, %s6, %s4
  // Predicated region
  $region2: #{forward.3} parent=0 // pred_check
    _
  $region3: #{forward.3} parent=0 // pred_check_branch
    %9 = sbr.rel (0) target = $region5
  $region4: #{forward.3} parent=0 // pred_region
    _
  $region5: #{forward.3} parent=0 // pred_fallthru
    _
  // Predicated region
  $region6: #{forward.3} parent=0 // pred_check
    _
  $region7: #{forward.3} parent=0 // pred_check_branch
    %11 = sbr.rel (0) target = $region9
  $region8: #{forward.3} parent=0 // pred_region
    _
  $region9: #{forward.3} parent=0 // pred_fallthru
    _
  // Predicated region
  $region10: #{forward.3} parent=0 // pred_check
    _
  $region11: #{forward.3} parent=0 // pred_check_branch
    %13 = sbr.rel (0) target = $region13
  $region12: #{forward.3} parent=0 // pred_region
    _
  $region13: #{forward.3} parent=0 // pred_fallthru
    _
  %v15 = vld [vmem:[%s1] sm:$0xf]
  %v16 = vld [vmem:[%s1 + $0x4] sm:$0xf]
  %v17 = vld [vmem:[%s1 + $0x8] sm:$0xf]
  %v18 = vld [vmem:[%s1 + $0xc] sm:$0xf]
  %v19 = vld [vmem:[%s1 + $0x10] sm:$0xf]
  %v20 = vld [vmem:[%s1 + $0x14] sm:$0xf]
  %v21 = vld [vmem:[%s1 + $0x18] sm:$0xf]
  %v22 = vld [vmem:[%s1 + $0x1c] sm:$0xf]
  %v23 = vld [vmem:[%s1 + $0x20] sm:$0xf]
  %v24 = vld [vmem:[%s1 + $0x24] sm:$0xf]
  %v25 = vld [vmem:[%s1 + $0x28] sm:$0xf]
  %v26 = vld [vmem:[%s1 + $0x2c] sm:$0xf]
  %v27 = vld [vmem:[%s1 + $0x30] sm:$0xf]
  %v28 = vld [vmem:[%s1 + $0x34] sm:$0xf]
  %v29 = vld [vmem:[%s1 + $0x38] sm:$0xf]
  %v30 = vld [vmem:[%s1 + $0x3c] sm:$0xf]
  %v31 = vld [vmem:[%s2] sm:$0x1]
  %v32 = vld [vmem:[%s0] sm:$0xf]
  %v33 = vld [vmem:[%s0 + $0x4] sm:$0xf]
  %v34 = vld [vmem:[%s0 + $0x8] sm:$0xf]
  %v35 = vld [vmem:[%s0 + $0xc] sm:$0xf]
  %v36 = vld [vmem:[%s0 + $0x10] sm:$0xf]
  %v37 = vld [vmem:[%s0 + $0x14] sm:$0xf]
  %v38 = vld [vmem:[%s0 + $0x18] sm:$0xf]
  %v39 = vld [vmem:[%s0 + $0x1c] sm:$0xf]
  %v40 = vld [vmem:[%s0 + $0x20] sm:$0xf]
  %v41 = vld [vmem:[%s0 + $0x24] sm:$0xf]
  %v42 = vld [vmem:[%s0 + $0x28] sm:$0xf]
  %v43 = vld [vmem:[%s0 + $0x2c] sm:$0xf]
  %v44 = vld [vmem:[%s0 + $0x30] sm:$0xf]
  %v45 = vld [vmem:[%s0 + $0x34] sm:$0xf]
  %v46 = vld [vmem:[%s0 + $0x38] sm:$0xf]
  %v47 = vld [vmem:[%s0 + $0x3c] sm:$0xf]
  %v48 = vld [vmem:[%s0 + $0x40] sm:$0xf]
  %v49 = vld [vmem:[%s0 + $0x44] sm:$0xf]
  %v50 = vld [vmem:[%s0 + $0x48] sm:$0xf]
  %v51 = vld [vmem:[%s0 + $0x4c] sm:$0xf]
  %v52 = vld [vmem:[%s0 + $0x50] sm:$0xf]
  %v53 = vld [vmem:[%s0 + $0x54] sm:$0xf]
  %v54 = vld [vmem:[%s0 + $0x58] sm:$0xf]
  %v55 = vld [vmem:[%s0 + $0x5c] sm:$0xf]
  %v56 = vld [vmem:[%s0 + $0x60] sm:$0x3]
  %v58 = vlaneseq
  %v59 = vshrl.u32 %v58, 7
  %v60 = vsub.s32 0, %v59
  %v61 = vrot.slane %v31, %v60
  %v88 = vunpack.c.l.b16 %v32
  %v89 = vunpack.c.l.b16 %v33
  %v90 = vunpack.c.l.b16 %v34
  %v91 = vunpack.c.l.b16 %v35
  %v92 = vunpack.c.l.b16 %v36
  %v93 = vunpack.c.l.b16 %v37
  %v94 = vunpack.c.l.b16 %v38
  %v95 = vunpack.c.l.b16 %v39
  %v96 = vunpack.c.l.b16 %v40
  %v97 = vunpack.c.l.b16 %v41
  %v98 = vunpack.c.l.b16 %v42
  %v99 = vunpack.c.l.b16 %v43
  %v100 = vunpack.c.l.b16 %v44
  %v101 = vunpack.c.l.b16 %v45
  %v102 = vunpack.c.l.b16 %v46
  %v103 = vunpack.c.l.b16 %v47
  %v104 = vunpack.c.l.b16 %v48
  %v105 = vunpack.c.l.b16 %v49
  %v106 = vunpack.c.l.b16 %v50
  %v107 = vunpack.c.l.b16 %v51
  %v108 = vunpack.c.l.b16 %v52
  %v109 = vunpack.c.l.b16 %v53
  %v110 = vunpack.c.l.b16 %v54
  %v111 = vunpack.c.l.b16 %v55
  %v112 = vunpack.c.l.b16 %v56
  %v113 = vpack.c.b16 %v89, %v88
  %v114 = vpack.c.b16 %v91, %v90
  %v115 = vpack.c.b16 %v93, %v92
  %v116 = vpack.c.b16 %v95, %v94
  %v117 = vpack.c.b16 %v97, %v96
  %v118 = vpack.c.b16 %v99, %v98
  %v119 = vpack.c.b16 %v101, %v100
  %v120 = vpack.c.b16 %v103, %v102
  %v121 = vpack.c.b16 %v105, %v104
  %v122 = vpack.c.b16 %v107, %v106
  %v123 = vpack.c.b16 %v109, %v108
  %v124 = vpack.c.b16 %v111, %v110
  %v125 = vpack.c.b16 %v112, %v112
  %v155 = vunpack.c.l.b16 %v15
  %v156 = vunpack.c.l.b16 %v16
  %v157 = vunpack.c.l.b16 %v17
  %v158 = vunpack.c.l.b16 %v18
  %v159 = vunpack.c.l.b16 %v19
  %v160 = vunpack.c.l.b16 %v20
  %v161 = vunpack.c.l.b16 %v21
  %v162 = vunpack.c.l.b16 %v22
  %v163 = vunpack.c.l.b16 %v23
  %v164 = vunpack.c.l.b16 %v24
  %v165 = vunpack.c.l.b16 %v25
  %v166 = vunpack.c.l.b16 %v26
  %v167 = vunpack.c.l.b16 %v27
  %v168 = vunpack.c.l.b16 %v28
  %v169 = vunpack.c.l.b16 %v29
  %v170 = vunpack.c.l.b16 %v30
  %v171 = vpack.c.b16 %v156, %v155
  %v172 = vpack.c.b16 %v158, %v157
  %v173 = vpack.c.b16 %v160, %v159
  %v174 = vpack.c.b16 %v162, %v161
  %v175 = vpack.c.b16 %v164, %v163
  %v176 = vpack.c.b16 %v166, %v165
  %v177 = vpack.c.b16 %v168, %v167
  %v178 = vpack.c.b16 %v170, %v169
  %187 = vmatprep.subr.bf16.mxu0 0
  %188 = vmatpush1.bf16.msra.mxu0 %v171
  %189 = vmatprep.subr.bf16.mxu0 0
  %190 = vmatpush1.bf16.msra.mxu0 %v172
  %191 = vmatprep.subr.bf16.mxu0 0
  %192 = vmatpush1.bf16.msra.mxu0 %v173
  %193 = vmatprep.subr.bf16.mxu0 0
  %194 = vmatpush1.bf16.msra.mxu0 %v174
  %195 = vmatprep.subr.bf16.mxu0 0
  %196 = vmatpush1.bf16.msra.mxu0 %v175
  %197 = vmatprep.subr.bf16.mxu0 0
  %198 = vmatpush1.bf16.msra.mxu0 %v176
  %199 = vmatprep.subr.bf16.mxu0 0
  %200 = vmatpush1.bf16.msra.mxu0 %v177
  %201 = vmatprep.subr.bf16.mxu0 0
  %202 = vmatpush1.bf16.msra.mxu0 %v178
  %203 = vmatprep.subr.bf16.mxu0 0
  %204 = vmatpush1.bf16.msra.mxu0 0
  %205 = vmatprep.subr.bf16.mxu0 0
  %206 = vmatpush1.bf16.msra.mxu0 0
  %207 = vmatprep.subr.bf16.mxu0 0
  %208 = vmatpush1.bf16.msra.mxu0 0
  %209 = vmatprep.subr.bf16.mxu0 0
  %210 = vmatpush1.bf16.msra.mxu0 0
  %211 = vmatprep.subr.bf16.mxu0 0
  %212 = vmatpush1.bf16.msra.mxu0 0
  %213 = vmatprep.subr.bf16.mxu0 0
  %214 = vmatpush1.bf16.msra.mxu0 0
  %215 = vmatprep.subr.bf16.mxu0 0
  %216 = vmatpush1.bf16.msra.mxu0 0
  %217 = vmatprep.subr.bf16.mxu0 0
  %218 = vmatpush1.bf16.msra.mxu0 0
  %219 = vmatprep.mubr.bf16.mxu0 0
  %220 = vmatmul.mubr.bf16.gmra.mrb[0].mxu0 %v113
  %v221 = vpop.f32.mrb[0].mxu0
  %v222 = vadd.f32 %v61, %v221
  %v223 = vpop.f32.mrb[0].mxu0
  %v224 = vpop.f32.mrb[0].mxu0
  %v225 = vadd.f32 %v61, %v224
  %v226 = vpop.f32.mrb[0].mxu0
  %227 = vmatprep.mubr.bf16.mxu0 0
  %228 = vmatmul.mubr.bf16.gmra.mrb[0].mxu0 %v114
  %v229 = vpop.f32.mrb[0].mxu0
  %v230 = vadd.f32 %v61, %v229
  %v231 = vpop.f32.mrb[0].mxu0
  %v232 = vpop.f32.mrb[0].mxu0
  %v233 = vadd.f32 %v61, %v232
  %v234 = vpop.f32.mrb[0].mxu0
  %235 = vmatprep.mubr.bf16.mxu0 0
  %236 = vmatmul.mubr.bf16.gmra.mrb[0].mxu0 %v115
  %v237 = vpop.f32.mrb[0].mxu0
  %v238 = vadd.f32 %v61, %v237
  %v239 = vpop.f32.mrb[0].mxu0
  %v240 = vpop.f32.mrb[0].mxu0
  %v241 = vadd.f32 %v61, %v240
  %v242 = vpop.f32.mrb[0].mxu0
  %243 = vmatprep.mubr.bf16.mxu0 0
  %244 = vmatmul.mubr.bf16.gmra.mrb[0].mxu0 %v116
  %v245 = vpop.f32.mrb[0].mxu0
  %v246 = vadd.f32 %v61, %v245
  %v247 = vpop.f32.mrb[0].mxu0
  %v248 = vpop.f32.mrb[0].mxu0
  %v249 = vadd.f32 %v61, %v248
  %v250 = vpop.f32.mrb[0].mxu0
  %251 = vmatprep.mubr.bf16.mxu0 0
  %252 = vmatmul.mubr.bf16.gmra.mrb[0].mxu0 %v117
  %v253 = vpop.f32.mrb[0].mxu0
  %v254 = vadd.f32 %v61, %v253
  %v255 = vpop.f32.mrb[0].mxu0
  %v256 = vpop.f32.mrb[0].mxu0
  %v257 = vadd.f32 %v61, %v256
  %v258 = vpop.f32.mrb[0].mxu0
  %259 = vmatprep.mubr.bf16.mxu0 0
  %260 = vmatmul.mubr.bf16.gmra.mrb[0].mxu0 %v118
  %v261 = vpop.f32.mrb[0].mxu0
  %v262 = vadd.f32 %v61, %v261
  %v263 = vpop.f32.mrb[0].mxu0
  %v264 = vpop.f32.mrb[0].mxu0
  %v265 = vadd.f32 %v61, %v264
  %v266 = vpop.f32.mrb[0].mxu0
  %267 = vmatprep.mubr.bf16.mxu0 0
  %268 = vmatmul.mubr.bf16.gmra.mrb[0].mxu0 %v119
  %v269 = vpop.f32.mrb[0].mxu0
  %v270 = vadd.f32 %v61, %v269
  %v271 = vpop.f32.mrb[0].mxu0
  %v272 = vpop.f32.mrb[0].mxu0
  %v273 = vadd.f32 %v61, %v272
  %v274 = vpop.f32.mrb[0].mxu0
  %275 = vmatprep.mubr.bf16.mxu0 0
  %276 = vmatmul.mubr.bf16.gmra.mrb[0].mxu0 %v120
  %v277 = vpop.f32.mrb[0].mxu0
  %v278 = vadd.f32 %v61, %v277
  %v279 = vpop.f32.mrb[0].mxu0
  %v280 = vpop.f32.mrb[0].mxu0
  %v281 = vadd.f32 %v61, %v280
  %v282 = vpop.f32.mrb[0].mxu0
  %283 = vmatprep.mubr.bf16.mxu0 0
  %284 = vmatmul.mubr.bf16.gmra.mrb[0].mxu0 %v121
  %v285 = vpop.f32.mrb[0].mxu0
  %v286 = vadd.f32 %v61, %v285
  %v287 = vpop.f32.mrb[0].mxu0
  %v288 = vpop.f32.mrb[0].mxu0
  %v289 = vadd.f32 %v61, %v288
  %v290 = vpop.f32.mrb[0].mxu0
  %291 = vmatprep.mubr.bf16.mxu0 0
  %292 = vmatmul.mubr.bf16.gmra.mrb[0].mxu0 %v122
  %v293 = vpop.f32.mrb[0].mxu0
  %v294 = vadd.f32 %v61, %v293
  %v295 = vpop.f32.mrb[0].mxu0
  %v296 = vpop.f32.mrb[0].mxu0
  %v297 = vadd.f32 %v61, %v296
  %v298 = vpop.f32.mrb[0].mxu0
  %299 = vmatprep.mubr.bf16.mxu0 0
  %300 = vmatmul.mubr.bf16.gmra.mrb[0].mxu0 %v123
  %v301 = vpop.f32.mrb[0].mxu0
  %v302 = vadd.f32 %v61, %v301
  %v303 = vpop.f32.mrb[0].mxu0
  %v304 = vpop.f32.mrb[0].mxu0
  %v305 = vadd.f32 %v61, %v304
  %v306 = vpop.f32.mrb[0].mxu0
  %307 = vmatprep.mubr.bf16.mxu0 0
  %308 = vmatmul.mubr.bf16.gmra.mrb[0].mxu0 %v124
  %v309 = vpop.f32.mrb[0].mxu0
  %v310 = vadd.f32 %v61, %v309
  %v311 = vpop.f32.mrb[0].mxu0
  %v312 = vpop.f32.mrb[0].mxu0
  %v313 = vadd.f32 %v61, %v312
  %v314 = vpop.f32.mrb[0].mxu0
  %315 = vmatprep.mubr.bf16.mxu0 0
  %316 = vmatmul.mubr.bf16.gmra.mrb[0].mxu0 %v125
  %v317 = vpop.f32.mrb[0].mxu0
  %v318 = vadd.f32 %v61, %v317
  %v319 = vpop.f32.mrb[0].mxu0
  %v320 = vpop.f32.mrb[0].mxu0
  %v321 = vpop.f32.mrb[0].mxu0
  %322 = vdwg.mxu0
  %v323 = vmax.f32 %v222, 0.0
  %v324 = vmax.f32 %v225, 0.0
  %v325 = vmax.f32 %v230, 0.0
  %v326 = vmax.f32 %v233, 0.0
  %v327 = vmax.f32 %v238, 0.0
  %v328 = vmax.f32 %v241, 0.0
  %v329 = vmax.f32 %v246, 0.0
  %v330 = vmax.f32 %v249, 0.0
  %v331 = vmax.f32 %v254, 0.0
  %v332 = vmax.f32 %v257, 0.0
  %v333 = vmax.f32 %v262, 0.0
  %v334 = vmax.f32 %v265, 0.0
  %v335 = vmax.f32 %v270, 0.0
  %v336 = vmax.f32 %v273, 0.0
  %v337 = vmax.f32 %v278, 0.0
  %v338 = vmax.f32 %v281, 0.0
  %v339 = vmax.f32 %v286, 0.0
  %v340 = vmax.f32 %v289, 0.0
  %v341 = vmax.f32 %v294, 0.0
  %v342 = vmax.f32 %v297, 0.0
  %v343 = vmax.f32 %v302, 0.0
  %v344 = vmax.f32 %v305, 0.0
  %v345 = vmax.f32 %v310, 0.0
  %v346 = vmax.f32 %v313, 0.0
  %v347 = vmax.f32 %v318, 0.0
  %s348 = scalar_lea.vmem %s0, 100
  %v349 = vld [vmem:[%s348] sm:$0xf]
  %v350 = vld [vmem:[%s348 + $0x4] sm:$0xf]
  %v351 = vld [vmem:[%s348 + $0x8] sm:$0xf]
  %v352 = vld [vmem:[%s348 + $0xc] sm:$0xf]
  %v353 = vld [vmem:[%s348 + $0x10] sm:$0xf]
  %v354 = vld [vmem:[%s348 + $0x14] sm:$0xf]
  %v355 = vld [vmem:[%s348 + $0x18] sm:$0xf]
  %v356 = vld [vmem:[%s348 + $0x1c] sm:$0xf]
  %v357 = vld [vmem:[%s348 + $0x20] sm:$0xf]
  %v358 = vld [vmem:[%s348 + $0x24] sm:$0xf]
  %v359 = vld [vmem:[%s348 + $0x28] sm:$0xf]
  %v360 = vld [vmem:[%s348 + $0x2c] sm:$0xf]
  %v361 = vld [vmem:[%s348 + $0x30] sm:$0xf]
  %v362 = vld [vmem:[%s348 + $0x34] sm:$0xf]
  %v363 = vld [vmem:[%s348 + $0x38] sm:$0xf]
  %v364 = vld [vmem:[%s348 + $0x3c] sm:$0xf]
  %v365 = vld [vmem:[%s348 + $0x40] sm:$0xf]
  %v366 = vld [vmem:[%s348 + $0x44] sm:$0xf]
  %v367 = vld [vmem:[%s348 + $0x48] sm:$0xf]
  %v368 = vld [vmem:[%s348 + $0x4c] sm:$0xf]
  %v369 = vld [vmem:[%s348 + $0x50] sm:$0xf]
  %v370 = vld [vmem:[%s348 + $0x54] sm:$0xf]
  %v371 = vld [vmem:[%s348 + $0x58] sm:$0xf]
  %v372 = vld [vmem:[%s348 + $0x5c] sm:$0xf]
  %v373 = vld [vmem:[%s348 + $0x60] sm:$0x3]
  %v399 = vunpack.c.l.b16 %v349
  %v400 = vunpack.c.l.b16 %v350
  %v401 = vunpack.c.l.b16 %v351
  %v402 = vunpack.c.l.b16 %v352
  %v403 = vunpack.c.l.b16 %v353
  %v404 = vunpack.c.l.b16 %v354
  %v405 = vunpack.c.l.b16 %v355
  %v406 = vunpack.c.l.b16 %v356
  %v407 = vunpack.c.l.b16 %v357
  %v408 = vunpack.c.l.b16 %v358
  %v409 = vunpack.c.l.b16 %v359
  %v410 = vunpack.c.l.b16 %v360
  %v411 = vunpack.c.l.b16 %v361
  %v412 = vunpack.c.l.b16 %v362
  %v413 = vunpack.c.l.b16 %v363
  %v414 = vunpack.c.l.b16 %v364
  %v415 = vunpack.c.l.b16 %v365
  %v416 = vunpack.c.l.b16 %v366
  %v417 = vunpack.c.l.b16 %v367
  %v418 = vunpack.c.l.b16 %v368
  %v419 = vunpack.c.l.b16 %v369
  %v420 = vunpack.c.l.b16 %v370
  %v421 = vunpack.c.l.b16 %v371
  %v422 = vunpack.c.l.b16 %v372
  %v423 = vunpack.c.l.b16 %v373
  %v424 = vpack.c.b16 %v400, %v399
  %v425 = vpack.c.b16 %v402, %v401
  %v426 = vpack.c.b16 %v404, %v403
  %v427 = vpack.c.b16 %v406, %v405
  %v428 = vpack.c.b16 %v408, %v407
  %v429 = vpack.c.b16 %v410, %v409
  %v430 = vpack.c.b16 %v412, %v411
  %v431 = vpack.c.b16 %v414, %v413
  %v432 = vpack.c.b16 %v416, %v415
  %v433 = vpack.c.b16 %v418, %v417
  %v434 = vpack.c.b16 %v420, %v419
  %v435 = vpack.c.b16 %v422, %v421
  %v436 = vpack.c.b16 %v423, %v423
  %450 = vmatprep.subr.bf16.mxu0 0
  %451 = vmatpush1.bf16.msra.mxu0 %v171
  %452 = vmatprep.subr.bf16.mxu0 0
  %453 = vmatpush1.bf16.msra.mxu0 %v172
  %454 = vmatprep.subr.bf16.mxu0 0
  %455 = vmatpush1.bf16.msra.mxu0 %v173
  %456 = vmatprep.subr.bf16.mxu0 0
  %457 = vmatpush1.bf16.msra.mxu0 %v174
  %458 = vmatprep.subr.bf16.mxu0 0
  %459 = vmatpush1.bf16.msra.mxu0 %v175
  %460 = vmatprep.subr.bf16.mxu0 0
  %461 = vmatpush1.bf16.msra.mxu0 %v176
  %462 = vmatprep.subr.bf16.mxu0 0
  %463 = vmatpush1.bf16.msra.mxu0 %v177
  %464 = vmatprep.subr.bf16.mxu0 0
  %465 = vmatpush1.bf16.msra.mxu0 %v178
  %466 = vmatprep.subr.bf16.mxu0 0
  %467 = vmatpush1.bf16.msra.mxu0 0
  %468 = vmatprep.subr.bf16.mxu0 0
  %469 = vmatpush1.bf16.msra.mxu0 0
  %470 = vmatprep.subr.bf16.mxu0 0
  %471 = vmatpush1.bf16.msra.mxu0 0
  %472 = vmatprep.subr.bf16.mxu0 0
  %473 = vmatpush1.bf16.msra.mxu0 0
  %474 = vmatprep.subr.bf16.mxu0 0
  %475 = vmatpush1.bf16.msra.mxu0 0
  %476 = vmatprep.subr.bf16.mxu0 0
  %477 = vmatpush1.bf16.msra.mxu0 0
  %478 = vmatprep.subr.bf16.mxu0 0
  %479 = vmatpush1.bf16.msra.mxu0 0
  %480 = vmatprep.subr.bf16.mxu0 0
  %481 = vmatpush1.bf16.msra.mxu0 0
  %482 = vmatprep.mubr.bf16.mxu0 0
  %483 = vmatmul.mubr.bf16.gmra.mrb[0].mxu0 %v424
  %v484 = vpop.f32.mrb[0].mxu0
  %v485 = vadd.f32 %v61, %v484
  %v486 = vpop.f32.mrb[0].mxu0
  %v487 = vpop.f32.mrb[0].mxu0
  %v488 = vadd.f32 %v61, %v487
  %v489 = vpop.f32.mrb[0].mxu0
  %490 = vmatprep.mubr.bf16.mxu0 0
  %491 = vmatmul.mubr.bf16.gmra.mrb[0].mxu0 %v425
  %v492 = vpop.f32.mrb[0].mxu0
  %v493 = vadd.f32 %v61, %v492
  %v494 = vpop.f32.mrb[0].mxu0
  %v495 = vpop.f32.mrb[0].mxu0
  %v496 = vadd.f32 %v61, %v495
  %v497 = vpop.f32.mrb[0].mxu0
  %498 = vmatprep.mubr.bf16.mxu0 0
  %499 = vmatmul.mubr.bf16.gmra.mrb[0].mxu0 %v426
  %v500 = vpop.f32.mrb[0].mxu0
  %v501 = vadd.f32 %v61, %v500
  %v502 = vpop.f32.mrb[0].mxu0
  %v503 = vpop.f32.mrb[0].mxu0
  %v504 = vadd.f32 %v61, %v503
  %v505 = vpop.f32.mrb[0].mxu0
  %506 = vmatprep.mubr.bf16.mxu0 0
  %507 = vmatmul.mubr.bf16.gmra.mrb[0].mxu0 %v427
  %v508 = vpop.f32.mrb[0].mxu0
  %v509 = vadd.f32 %v61, %v508
  %v510 = vpop.f32.mrb[0].mxu0
  %v511 = vpop.f32.mrb[0].mxu0
  %v512 = vadd.f32 %v61, %v511
  %v513 = vpop.f32.mrb[0].mxu0
  %514 = vmatprep.mubr.bf16.mxu0 0
  %515 = vmatmul.mubr.bf16.gmra.mrb[0].mxu0 %v428
  %v516 = vpop.f32.mrb[0].mxu0
  %v517 = vadd.f32 %v61, %v516
  %v518 = vpop.f32.mrb[0].mxu0
  %v519 = vpop.f32.mrb[0].mxu0
  %v520 = vadd.f32 %v61, %v519
  %v521 = vpop.f32.mrb[0].mxu0
  %522 = vmatprep.mubr.bf16.mxu0 0
  %523 = vmatmul.mubr.bf16.gmra.mrb[0].mxu0 %v429
  %v524 = vpop.f32.mrb[0].mxu0
  %v525 = vadd.f32 %v61, %v524
  %v526 = vpop.f32.mrb[0].mxu0
  %v527 = vpop.f32.mrb[0].mxu0
  %v528 = vadd.f32 %v61, %v527
  %v529 = vpop.f32.mrb[0].mxu0
  %530 = vmatprep.mubr.bf16.mxu0 0
  %531 = vmatmul.mubr.bf16.gmra.mrb[0].mxu0 %v430
  %v532 = vpop.f32.mrb[0].mxu0
  %v533 = vadd.f32 %v61, %v532
  %v534 = vpop.f32.mrb[0].mxu0
  %v535 = vpop.f32.mrb[0].mxu0
  %v536 = vadd.f32 %v61, %v535
  %v537 = vpop.f32.mrb[0].mxu0
  %538 = vmatprep.mubr.bf16.mxu0 0
  %539 = vmatmul.mubr.bf16.gmra.mrb[0].mxu0 %v431
  %v540 = vpop.f32.mrb[0].mxu0
  %v541 = vadd.f32 %v61, %v540
  %v542 = vpop.f32.mrb[0].mxu0
  %v543 = vpop.f32.mrb[0].mxu0
  %v544 = vadd.f32 %v61, %v543
  %v545 = vpop.f32.mrb[0].mxu0
  %546 = vmatprep.mubr.bf16.mxu0 0
  %547 = vmatmul.mubr.bf16.gmra.mrb[0].mxu0 %v432
  %v548 = vpop.f32.mrb[0].mxu0
  %v549 = vadd.f32 %v61, %v548
  %v550 = vpop.f32.mrb[0].mxu0
  %v551 = vpop.f32.mrb[0].mxu0
  %v552 = vadd.f32 %v61, %v551
  %v553 = vpop.f32.mrb[0].mxu0
  %554 = vmatprep.mubr.bf16.mxu0 0
  %555 = vmatmul.mubr.bf16.gmra.mrb[0].mxu0 %v433
  %v556 = vpop.f32.mrb[0].mxu0
  %v557 = vadd.f32 %v61, %v556
  %v558 = vpop.f32.mrb[0].mxu0
  %v559 = vpop.f32.mrb[0].mxu0
  %v560 = vadd.f32 %v61, %v559
  %v561 = vpop.f32.mrb[0].mxu0
  %562 = vmatprep.mubr.bf16.mxu0 0
  %563 = vmatmul.mubr.bf16.gmra.mrb[0].mxu0 %v434
  %v564 = vpop.f32.mrb[0].mxu0
  %v565 = vadd.f32 %v61, %v564
  %v566 = vpop.f32.mrb[0].mxu0
  %v567 = vpop.f32.mrb[0].mxu0
  %v568 = vadd.f32 %v61, %v567
  %v569 = vpop.f32.mrb[0].mxu0
  %570 = vmatprep.mubr.bf16.mxu0 0
  %571 = vmatmul.mubr.bf16.gmra.mrb[0].mxu0 %v435
  %v572 = vpop.f32.mrb[0].mxu0
  %v573 = vadd.f32 %v61, %v572
  %v574 = vpop.f32.mrb[0].mxu0
  %v575 = vpop.f32.mrb[0].mxu0
  %v576 = vadd.f32 %v61, %v575
  %v577 = vpop.f32.mrb[0].mxu0
  %578 = vmatprep.mubr.bf16.mxu0 0
  %579 = vmatmul.mubr.bf16.gmra.mrb[0].mxu0 %v436
  %v580 = vpop.f32.mrb[0].mxu0
  %v581 = vadd.f32 %v61, %v580
  %v582 = vpop.f32.mrb[0].mxu0
  %v583 = vpop.f32.mrb[0].mxu0
  %v584 = vpop.f32.mrb[0].mxu0
  %585 = vdwg.mxu0
  %v586 = vmax.f32 %v485, 0.0
  %v587 = vmax.f32 %v488, 0.0
  %v588 = vmax.f32 %v493, 0.0
  %v589 = vmax.f32 %v496, 0.0
  %v590 = vmax.f32 %v501, 0.0
  %v591 = vmax.f32 %v504, 0.0
  %v592 = vmax.f32 %v509, 0.0
  %v593 = vmax.f32 %v512, 0.0
  %v594 = vmax.f32 %v517, 0.0
  %v595 = vmax.f32 %v520, 0.0
  %v596 = vmax.f32 %v525, 0.0
  %v597 = vmax.f32 %v528, 0.0
  %v598 = vmax.f32 %v533, 0.0
  %v599 = vmax.f32 %v536, 0.0
  %v600 = vmax.f32 %v541, 0.0
  %v601 = vmax.f32 %v544, 0.0
  %v602 = vmax.f32 %v549, 0.0
  %v603 = vmax.f32 %v552, 0.0
  %v604 = vmax.f32 %v557, 0.0
  %v605 = vmax.f32 %v560, 0.0
  %v606 = vmax.f32 %v565, 0.0
  %v607 = vmax.f32 %v568, 0.0
  %v608 = vmax.f32 %v573, 0.0
  %v609 = vmax.f32 %v576, 0.0
  %v610 = vmax.f32 %v581, 0.0
  %v611 = vmax.f32 %v323, %v586
  %v612 = vmax.f32 %v324, %v587
  %v613 = vmax.f32 %v325, %v588
  %v614 = vmax.f32 %v326, %v589
  %v615 = vmax.f32 %v327, %v590
  %v616 = vmax.f32 %v328, %v591
  %v617 = vmax.f32 %v329, %v592
  %v618 = vmax.f32 %v330, %v593
  %v619 = vmax.f32 %v331, %v594
  %v620 = vmax.f32 %v332, %v595
  %v621 = vmax.f32 %v333, %v596
  %v622 = vmax.f32 %v334, %v597
  %v623 = vmax.f32 %v335, %v598
  %v624 = vmax.f32 %v336, %v599
  %v625 = vmax.f32 %v337, %v600
  %v626 = vmax.f32 %v338, %v601
  %v627 = vmax.f32 %v339, %v602
  %v628 = vmax.f32 %v340, %v603
  %v629 = vmax.f32 %v341, %v604
  %v630 = vmax.f32 %v342, %v605
  %v631 = vmax.f32 %v343, %v606
  %v632 = vmax.f32 %v344, %v607
  %v633 = vmax.f32 %v345, %v608
  %v634 = vmax.f32 %v346, %v609
  %v635 = vmax.f32 %v347, %v610
  %s636 = scalar_lea.vmem %s0, 200
  %v637 = vld [vmem:[%s636] sm:$0xf]
  %v638 = vld [vmem:[%s636 + $0x4] sm:$0xf]
  %v639 = vld [vmem:[%s636 + $0x8] sm:$0xf]
  %v640 = vld [vmem:[%s636 + $0xc] sm:$0xf]
  %v641 = vld [vmem:[%s636 + $0x10] sm:$0xf]
  %v642 = vld [vmem:[%s636 + $0x14] sm:$0xf]
  %v643 = vld [vmem:[%s636 + $0x18] sm:$0xf]
  %v644 = vld [vmem:[%s636 + $0x1c] sm:$0xf]
  %v645 = vld [vmem:[%s636 + $0x20] sm:$0xf]
  %v646 = vld [vmem:[%s636 + $0x24] sm:$0xf]
  %v647 = vld [vmem:[%s636 + $0x28] sm:$0xf]
  %v648 = vld [vmem:[%s636 + $0x2c] sm:$0xf]
  %v649 = vld [vmem:[%s636 + $0x30] sm:$0xf]
  %v650 = vld [vmem:[%s636 + $0x34] sm:$0xf]
  %v651 = vld [vmem:[%s636 + $0x38] sm:$0xf]
  %v652 = vld [vmem:[%s636 + $0x3c] sm:$0xf]
  %v653 = vld [vmem:[%s636 + $0x40] sm:$0xf]
  %v654 = vld [vmem:[%s636 + $0x44] sm:$0xf]
  %v655 = vld [vmem:[%s636 + $0x48] sm:$0xf]
  %v656 = vld [vmem:[%s636 + $0x4c] sm:$0xf]
  %v657 = vld [vmem:[%s636 + $0x50] sm:$0xf]
  %v658 = vld [vmem:[%s636 + $0x54] sm:$0xf]
  %v659 = vld [vmem:[%s636 + $0x58] sm:$0xf]
  %v660 = vld [vmem:[%s636 + $0x5c] sm:$0xf]
  %v661 = vld [vmem:[%s636 + $0x60] sm:$0x3]
  %v687 = vunpack.c.l.b16 %v637
  %v688 = vunpack.c.l.b16 %v638
  %v689 = vunpack.c.l.b16 %v639
  %v690 = vunpack.c.l.b16 %v640
  %v691 = vunpack.c.l.b16 %v641
  %v692 = vunpack.c.l.b16 %v642
  %v693 = vunpack.c.l.b16 %v643
  %v694 = vunpack.c.l.b16 %v644
  %v695 = vunpack.c.l.b16 %v645
  %v696 = vunpack.c.l.b16 %v646
  %v697 = vunpack.c.l.b16 %v647
  %v698 = vunpack.c.l.b16 %v648
  %v699 = vunpack.c.l.b16 %v649
  %v700 = vunpack.c.l.b16 %v650
  %v701 = vunpack.c.l.b16 %v651
  %v702 = vunpack.c.l.b16 %v652
  %v703 = vunpack.c.l.b16 %v653
  %v704 = vunpack.c.l.b16 %v654
  %v705 = vunpack.c.l.b16 %v655
  %v706 = vunpack.c.l.b16 %v656
  %v707 = vunpack.c.l.b16 %v657
  %v708 = vunpack.c.l.b16 %v658
  %v709 = vunpack.c.l.b16 %v659
  %v710 = vunpack.c.l.b16 %v660
  %v711 = vunpack.c.l.b16 %v661
  %v712 = vpack.c.b16 %v688, %v687
  %v713 = vpack.c.b16 %v690, %v689
  %v714 = vpack.c.b16 %v692, %v691
  %v715 = vpack.c.b16 %v694, %v693
  %v716 = vpack.c.b16 %v696, %v695
  %v717 = vpack.c.b16 %v698, %v697
  %v718 = vpack.c.b16 %v700, %v699
  %v719 = vpack.c.b16 %v702, %v701
  %v720 = vpack.c.b16 %v704, %v703
  %v721 = vpack.c.b16 %v706, %v705
  %v722 = vpack.c.b16 %v708, %v707
  %v723 = vpack.c.b16 %v710, %v709
  %v724 = vpack.c.b16 %v711, %v711
  %738 = vmatprep.subr.bf16.mxu0 0
  %739 = vmatpush1.bf16.msra.mxu0 %v171
  %740 = vmatprep.subr.bf16.mxu0 0
  %741 = vmatpush1.bf16.msra.mxu0 %v172
  %742 = vmatprep.subr.bf16.mxu0 0
  %743 = vmatpush1.bf16.msra.mxu0 %v173
  %744 = vmatprep.subr.bf16.mxu0 0
  %745 = vmatpush1.bf16.msra.mxu0 %v174
  %746 = vmatprep.subr.bf16.mxu0 0
  %747 = vmatpush1.bf16.msra.mxu0 %v175
  %748 = vmatprep.subr.bf16.mxu0 0
  %749 = vmatpush1.bf16.msra.mxu0 %v176
  %750 = vmatprep.subr.bf16.mxu0 0
  %751 = vmatpush1.bf16.msra.mxu0 %v177
  %752 = vmatprep.subr.bf16.mxu0 0
  %753 = vmatpush1.bf16.msra.mxu0 %v178
  %754 = vmatprep.subr.bf16.mxu0 0
  %755 = vmatpush1.bf16.msra.mxu0 0
  %756 = vmatprep.subr.bf16.mxu0 0
  %757 = vmatpush1.bf16.msra.mxu0 0
  %758 = vmatprep.subr.bf16.mxu0 0
  %759 = vmatpush1.bf16.msra.mxu0 0
  %760 = vmatprep.subr.bf16.mxu0 0
  %761 = vmatpush1.bf16.msra.mxu0 0
  %762 = vmatprep.subr.bf16.mxu0 0
  %763 = vmatpush1.bf16.msra.mxu0 0
  %764 = vmatprep.subr.bf16.mxu0 0
  %765 = vmatpush1.bf16.msra.mxu0 0
  %766 = vmatprep.subr.bf16.mxu0 0
  %767 = vmatpush1.bf16.msra.mxu0 0
  %768 = vmatprep.subr.bf16.mxu0 0
  %769 = vmatpush1.bf16.msra.mxu0 0
  %770 = vmatprep.mubr.bf16.mxu0 0
  %771 = vmatmul.mubr.bf16.gmra.mrb[0].mxu0 %v712
  %v772 = vpop.f32.mrb[0].mxu0
  %v773 = vadd.f32 %v61, %v772
  %v774 = vpop.f32.mrb[0].mxu0
  %v775 = vpop.f32.mrb[0].mxu0
  %v776 = vadd.f32 %v61, %v775
  %v777 = vpop.f32.mrb[0].mxu0
  %778 = vmatprep.mubr.bf16.mxu0 0
  %779 = vmatmul.mubr.bf16.gmra.mrb[0].mxu0 %v713
  %v780 = vpop.f32.mrb[0].mxu0
  %v781 = vadd.f32 %v61, %v780
  %v782 = vpop.f32.mrb[0].mxu0
  %v783 = vpop.f32.mrb[0].mxu0
  %v784 = vadd.f32 %v61, %v783
  %v785 = vpop.f32.mrb[0].mxu0
  %786 = vmatprep.mubr.bf16.mxu0 0
  %787 = vmatmul.mubr.bf16.gmra.mrb[0].mxu0 %v714
  %v788 = vpop.f32.mrb[0].mxu0
  %v789 = vadd.f32 %v61, %v788
  %v790 = vpop.f32.mrb[0].mxu0
  %v791 = vpop.f32.mrb[0].mxu0
  %v792 = vadd.f32 %v61, %v791
  %v793 = vpop.f32.mrb[0].mxu0
  %794 = vmatprep.mubr.bf16.mxu0 0
  %795 = vmatmul.mubr.bf16.gmra.mrb[0].mxu0 %v715
  %v796 = vpop.f32.mrb[0].mxu0
  %v797 = vadd.f32 %v61, %v796
  %v798 = vpop.f32.mrb[0].mxu0
  %v799 = vpop.f32.mrb[0].mxu0
  %v800 = vadd.f32 %v61, %v799
  %v801 = vpop.f32.mrb[0].mxu0
  %802 = vmatprep.mubr.bf16.mxu0 0
  %803 = vmatmul.mubr.bf16.gmra.mrb[0].mxu0 %v716
  %v804 = vpop.f32.mrb[0].mxu0
  %v805 = vadd.f32 %v61, %v804
  %v806 = vpop.f32.mrb[0].mxu0
  %v807 = vpop.f32.mrb[0].mxu0
  %v808 = vadd.f32 %v61, %v807
  %v809 = vpop.f32.mrb[0].mxu0
  %810 = vmatprep.mubr.bf16.mxu0 0
  %811 = vmatmul.mubr.bf16.gmra.mrb[0].mxu0 %v717
  %v812 = vpop.f32.mrb[0].mxu0
  %v813 = vadd.f32 %v61, %v812
  %v814 = vpop.f32.mrb[0].mxu0
  %v815 = vpop.f32.mrb[0].mxu0
  %v816 = vadd.f32 %v61, %v815
  %v817 = vpop.f32.mrb[0].mxu0
  %818 = vmatprep.mubr.bf16.mxu0 0
  %819 = vmatmul.mubr.bf16.gmra.mrb[0].mxu0 %v718
  %v820 = vpop.f32.mrb[0].mxu0
  %v821 = vadd.f32 %v61, %v820
  %v822 = vpop.f32.mrb[0].mxu0
  %v823 = vpop.f32.mrb[0].mxu0
  %v824 = vadd.f32 %v61, %v823
  %v825 = vpop.f32.mrb[0].mxu0
  %826 = vmatprep.mubr.bf16.mxu0 0
  %827 = vmatmul.mubr.bf16.gmra.mrb[0].mxu0 %v719
  %v828 = vpop.f32.mrb[0].mxu0
  %v829 = vadd.f32 %v61, %v828
  %v830 = vpop.f32.mrb[0].mxu0
  %v831 = vpop.f32.mrb[0].mxu0
  %v832 = vadd.f32 %v61, %v831
  %v833 = vpop.f32.mrb[0].mxu0
  %834 = vmatprep.mubr.bf16.mxu0 0
  %835 = vmatmul.mubr.bf16.gmra.mrb[0].mxu0 %v720
  %v836 = vpop.f32.mrb[0].mxu0
  %v837 = vadd.f32 %v61, %v836
  %v838 = vpop.f32.mrb[0].mxu0
  %v839 = vpop.f32.mrb[0].mxu0
  %v840 = vadd.f32 %v61, %v839
  %v841 = vpop.f32.mrb[0].mxu0
  %842 = vmatprep.mubr.bf16.mxu0 0
  %843 = vmatmul.mubr.bf16.gmra.mrb[0].mxu0 %v721
  %v844 = vpop.f32.mrb[0].mxu0
  %v845 = vadd.f32 %v61, %v844
  %v846 = vpop.f32.mrb[0].mxu0
  %v847 = vpop.f32.mrb[0].mxu0
  %v848 = vadd.f32 %v61, %v847
  %v849 = vpop.f32.mrb[0].mxu0
  %850 = vmatprep.mubr.bf16.mxu0 0
  %851 = vmatmul.mubr.bf16.gmra.mrb[0].mxu0 %v722
  %v852 = vpop.f32.mrb[0].mxu0
  %v853 = vadd.f32 %v61, %v852
  %v854 = vpop.f32.mrb[0].mxu0
  %v855 = vpop.f32.mrb[0].mxu0
  %v856 = vadd.f32 %v61, %v855
  %v857 = vpop.f32.mrb[0].mxu0
  %858 = vmatprep.mubr.bf16.mxu0 0
  %859 = vmatmul.mubr.bf16.gmra.mrb[0].mxu0 %v723
  %v860 = vpop.f32.mrb[0].mxu0
  %v861 = vadd.f32 %v61, %v860
  %v862 = vpop.f32.mrb[0].mxu0
  %v863 = vpop.f32.mrb[0].mxu0
  %v864 = vadd.f32 %v61, %v863
  %v865 = vpop.f32.mrb[0].mxu0
  %866 = vmatprep.mubr.bf16.mxu0 0
  %867 = vmatmul.mubr.bf16.gmra.mrb[0].mxu0 %v724
  %v868 = vpop.f32.mrb[0].mxu0
  %v869 = vadd.f32 %v61, %v868
  %v870 = vpop.f32.mrb[0].mxu0
  %v871 = vpop.f32.mrb[0].mxu0
  %v872 = vpop.f32.mrb[0].mxu0
  %873 = vdwg.mxu0
  %v874 = vmax.f32 %v773, 0.0
  %v875 = vmax.f32 %v776, 0.0
  %v876 = vmax.f32 %v781, 0.0
  %v877 = vmax.f32 %v784, 0.0
  %v878 = vmax.f32 %v789, 0.0
  %v879 = vmax.f32 %v792, 0.0
  %v880 = vmax.f32 %v797, 0.0
  %v881 = vmax.f32 %v800, 0.0
  %v882 = vmax.f32 %v805, 0.0
  %v883 = vmax.f32 %v808, 0.0
  %v884 = vmax.f32 %v813, 0.0
  %v885 = vmax.f32 %v816, 0.0
  %v886 = vmax.f32 %v821, 0.0
  %v887 = vmax.f32 %v824, 0.0
  %v888 = vmax.f32 %v829, 0.0
  %v889 = vmax.f32 %v832, 0.0
  %v890 = vmax.f32 %v837, 0.0
  %v891 = vmax.f32 %v840, 0.0
  %v892 = vmax.f32 %v845, 0.0
  %v893 = vmax.f32 %v848, 0.0
  %v894 = vmax.f32 %v853, 0.0
  %v895 = vmax.f32 %v856, 0.0
  %v896 = vmax.f32 %v861, 0.0
  %v897 = vmax.f32 %v864, 0.0
  %v898 = vmax.f32 %v869, 0.0
  %s899 = scalar_lea.vmem %s0, 300
  %v900 = vld [vmem:[%s899] sm:$0xf]
  %v901 = vld [vmem:[%s899 + $0x4] sm:$0xf]
  %v902 = vld [vmem:[%s899 + $0x8] sm:$0xf]
  %v903 = vld [vmem:[%s899 + $0xc] sm:$0xf]
  %v904 = vld [vmem:[%s899 + $0x10] sm:$0xf]
  %v905 = vld [vmem:[%s899 + $0x14] sm:$0xf]
  %v906 = vld [vmem:[%s899 + $0x18] sm:$0xf]
  %v907 = vld [vmem:[%s899 + $0x1c] sm:$0xf]
  %v908 = vld [vmem:[%s899 + $0x20] sm:$0xf]
  %v909 = vld [vmem:[%s899 + $0x24] sm:$0xf]
  %v910 = vld [vmem:[%s899 + $0x28] sm:$0xf]
  %v911 = vld [vmem:[%s899 + $0x2c] sm:$0xf]
  %v912 = vld [vmem:[%s899 + $0x30] sm:$0xf]
  %v913 = vld [vmem:[%s899 + $0x34] sm:$0xf]
  %v914 = vld [vmem:[%s899 + $0x38] sm:$0xf]
  %v915 = vld [vmem:[%s899 + $0x3c] sm:$0xf]
  %v916 = vld [vmem:[%s899 + $0x40] sm:$0xf]
  %v917 = vld [vmem:[%s899 + $0x44] sm:$0xf]
  %v918 = vld [vmem:[%s899 + $0x48] sm:$0xf]
  %v919 = vld [vmem:[%s899 + $0x4c] sm:$0xf]
  %v920 = vld [vmem:[%s899 + $0x50] sm:$0xf]
  %v921 = vld [vmem:[%s899 + $0x54] sm:$0xf]
  %v922 = vld [vmem:[%s899 + $0x58] sm:$0xf]
  %v923 = vld [vmem:[%s899 + $0x5c] sm:$0xf]
  %v924 = vld [vmem:[%s899 + $0x60] sm:$0x3]
  %v950 = vunpack.c.l.b16 %v900
  %v951 = vunpack.c.l.b16 %v901
  %v952 = vunpack.c.l.b16 %v902
  %v953 = vunpack.c.l.b16 %v903
  %v954 = vunpack.c.l.b16 %v904
  %v955 = vunpack.c.l.b16 %v905
  %v956 = vunpack.c.l.b16 %v906
  %v957 = vunpack.c.l.b16 %v907
  %v958 = vunpack.c.l.b16 %v908
  %v959 = vunpack.c.l.b16 %v909
  %v960 = vunpack.c.l.b16 %v910
  %v961 = vunpack.c.l.b16 %v911
  %v962 = vunpack.c.l.b16 %v912
  %v963 = vunpack.c.l.b16 %v913
  %v964 = vunpack.c.l.b16 %v914
  %v965 = vunpack.c.l.b16 %v915
  %v966 = vunpack.c.l.b16 %v916
  %v967 = vunpack.c.l.b16 %v917
  %v968 = vunpack.c.l.b16 %v918
  %v969 = vunpack.c.l.b16 %v919
  %v970 = vunpack.c.l.b16 %v920
  %v971 = vunpack.c.l.b16 %v921
  %v972 = vunpack.c.l.b16 %v922
  %v973 = vunpack.c.l.b16 %v923
  %v974 = vunpack.c.l.b16 %v924
  %v975 = vpack.c.b16 %v951, %v950
  %v976 = vpack.c.b16 %v953, %v952
  %v977 = vpack.c.b16 %v955, %v954
  %v978 = vpack.c.b16 %v957, %v956
  %v979 = vpack.c.b16 %v959, %v958
  %v980 = vpack.c.b16 %v961, %v960
  %v981 = vpack.c.b16 %v963, %v962
  %v982 = vpack.c.b16 %v965, %v964
  %v983 = vpack.c.b16 %v967, %v966
  %v984 = vpack.c.b16 %v969, %v968
  %v985 = vpack.c.b16 %v971, %v970
  %v986 = vpack.c.b16 %v973, %v972
  %v987 = vpack.c.b16 %v974, %v974
  %1001 = vmatprep.subr.bf16.mxu0 0
  %1002 = vmatpush1.bf16.msra.mxu0 %v171
  %1003 = vmatprep.subr.bf16.mxu0 0
  %1004 = vmatpush1.bf16.msra.mxu0 %v172
  %1005 = vmatprep.subr.bf16.mxu0 0
  %1006 = vmatpush1.bf16.msra.mxu0 %v173
  %1007 = vmatprep.subr.bf16.mxu0 0
  %1008 = vmatpush1.bf16.msra.mxu0 %v174
  %1009 = vmatprep.subr.bf16.mxu0 0
  %1010 = vmatpush1.bf16.msra.mxu0 %v175
  %1011 = vmatprep.subr.bf16.mxu0 0
  %1012 = vmatpush1.bf16.msra.mxu0 %v176
  %1013 = vmatprep.subr.bf16.mxu0 0
  %1014 = vmatpush1.bf16.msra.mxu0 %v177
  %1015 = vmatprep.subr.bf16.mxu0 0
  %1016 = vmatpush1.bf16.msra.mxu0 %v178
  %1017 = vmatprep.subr.bf16.mxu0 0
  %1018 = vmatpush1.bf16.msra.mxu0 0
  %1019 = vmatprep.subr.bf16.mxu0 0
  %1020 = vmatpush1.bf16.msra.mxu0 0
  %1021 = vmatprep.subr.bf16.mxu0 0
  %1022 = vmatpush1.bf16.msra.mxu0 0
  %1023 = vmatprep.subr.bf16.mxu0 0
  %1024 = vmatpush1.bf16.msra.mxu0 0
  %1025 = vmatprep.subr.bf16.mxu0 0
  %1026 = vmatpush1.bf16.msra.mxu0 0
  %1027 = vmatprep.subr.bf16.mxu0 0
  %1028 = vmatpush1.bf16.msra.mxu0 0
  %1029 = vmatprep.subr.bf16.mxu0 0
  %1030 = vmatpush1.bf16.msra.mxu0 0
  %1031 = vmatprep.subr.bf16.mxu0 0
  %1032 = vmatpush1.bf16.msra.mxu0 0
  %1033 = vmatprep.mubr.bf16.mxu0 0
  %1034 = vmatmul.mubr.bf16.gmra.mrb[0].mxu0 %v975
  %v1035 = vpop.f32.mrb[0].mxu0
  %v1036 = vadd.f32 %v61, %v1035
  %v1037 = vpop.f32.mrb[0].mxu0
  %v1038 = vpop.f32.mrb[0].mxu0
  %v1039 = vadd.f32 %v61, %v1038
  %v1040 = vpop.f32.mrb[0].mxu0
  %1041 = vmatprep.mubr.bf16.mxu0 0
  %1042 = vmatmul.mubr.bf16.gmra.mrb[0].mxu0 %v976
  %v1043 = vpop.f32.mrb[0].mxu0
  %v1044 = vadd.f32 %v61, %v1043
  %v1045 = vpop.f32.mrb[0].mxu0
  %v1046 = vpop.f32.mrb[0].mxu0
  %v1047 = vadd.f32 %v61, %v1046
  %v1048 = vpop.f32.mrb[0].mxu0
  %1049 = vmatprep.mubr.bf16.mxu0 0
  %1050 = vmatmul.mubr.bf16.gmra.mrb[0].mxu0 %v977
  %v1051 = vpop.f32.mrb[0].mxu0
  %v1052 = vadd.f32 %v61, %v1051
  %v1053 = vpop.f32.mrb[0].mxu0
  %v1054 = vpop.f32.mrb[0].mxu0
  %v1055 = vadd.f32 %v61, %v1054
  %v1056 = vpop.f32.mrb[0].mxu0
  %1057 = vmatprep.mubr.bf16.mxu0 0
  %1058 = vmatmul.mubr.bf16.gmra.mrb[0].mxu0 %v978
  %v1059 = vpop.f32.mrb[0].mxu0
  %v1060 = vadd.f32 %v61, %v1059
  %v1061 = vpop.f32.mrb[0].mxu0
  %v1062 = vpop.f32.mrb[0].mxu0
  %v1063 = vadd.f32 %v61, %v1062
  %v1064 = vpop.f32.mrb[0].mxu0
  %1065 = vmatprep.mubr.bf16.mxu0 0
  %1066 = vmatmul.mubr.bf16.gmra.mrb[0].mxu0 %v979
  %v1067 = vpop.f32.mrb[0].mxu0
  %v1068 = vadd.f32 %v61, %v1067
  %v1069 = vpop.f32.mrb[0].mxu0
  %v1070 = vpop.f32.mrb[0].mxu0
  %v1071 = vadd.f32 %v61, %v1070
  %v1072 = vpop.f32.mrb[0].mxu0
  %1073 = vmatprep.mubr.bf16.mxu0 0
  %1074 = vmatmul.mubr.bf16.gmra.mrb[0].mxu0 %v980
  %v1075 = vpop.f32.mrb[0].mxu0
  %v1076 = vadd.f32 %v61, %v1075
  %v1077 = vpop.f32.mrb[0].mxu0
  %v1078 = vpop.f32.mrb[0].mxu0
  %v1079 = vadd.f32 %v61, %v1078
  %v1080 = vpop.f32.mrb[0].mxu0
  %1081 = vmatprep.mubr.bf16.mxu0 0
  %1082 = vmatmul.mubr.bf16.gmra.mrb[0].mxu0 %v981
  %v1083 = vpop.f32.mrb[0].mxu0
  %v1084 = vadd.f32 %v61, %v1083
  %v1085 = vpop.f32.mrb[0].mxu0
  %v1086 = vpop.f32.mrb[0].mxu0
  %v1087 = vadd.f32 %v61, %v1086
  %v1088 = vpop.f32.mrb[0].mxu0
  %1089 = vmatprep.mubr.bf16.mxu0 0
  %1090 = vmatmul.mubr.bf16.gmra.mrb[0].mxu0 %v982
  %v1091 = vpop.f32.mrb[0].mxu0
  %v1092 = vadd.f32 %v61, %v1091
  %v1093 = vpop.f32.mrb[0].mxu0
  %v1094 = vpop.f32.mrb[0].mxu0
  %v1095 = vadd.f32 %v61, %v1094
  %v1096 = vpop.f32.mrb[0].mxu0
  %1097 = vmatprep.mubr.bf16.mxu0 0
  %1098 = vmatmul.mubr.bf16.gmra.mrb[0].mxu0 %v983
  %v1099 = vpop.f32.mrb[0].mxu0
  %v1100 = vadd.f32 %v61, %v1099
  %v1101 = vpop.f32.mrb[0].mxu0
  %v1102 = vpop.f32.mrb[0].mxu0
  %v1103 = vadd.f32 %v61, %v1102
  %v1104 = vpop.f32.mrb[0].mxu0
  %1105 = vmatprep.mubr.bf16.mxu0 0
  %1106 = vmatmul.mubr.bf16.gmra.mrb[0].mxu0 %v984
  %v1107 = vpop.f32.mrb[0].mxu0
  %v1108 = vadd.f32 %v61, %v1107
  %v1109 = vpop.f32.mrb[0].mxu0
  %v1110 = vpop.f32.mrb[0].mxu0
  %v1111 = vadd.f32 %v61, %v1110
  %v1112 = vpop.f32.mrb[0].mxu0
  %1113 = vmatprep.mubr.bf16.mxu0 0
  %1114 = vmatmul.mubr.bf16.gmra.mrb[0].mxu0 %v985
  %v1115 = vpop.f32.mrb[0].mxu0
  %v1116 = vadd.f32 %v61, %v1115
  %v1117 = vpop.f32.mrb[0].mxu0
  %v1118 = vpop.f32.mrb[0].mxu0
  %v1119 = vadd.f32 %v61, %v1118
  %v1120 = vpop.f32.mrb[0].mxu0
  %1121 = vmatprep.mubr.bf16.mxu0 0
  %1122 = vmatmul.mubr.bf16.gmra.mrb[0].mxu0 %v986
  %v1123 = vpop.f32.mrb[0].mxu0
  %v1124 = vadd.f32 %v61, %v1123
  %v1125 = vpop.f32.mrb[0].mxu0
  %v1126 = vpop.f32.mrb[0].mxu0
  %v1127 = vadd.f32 %v61, %v1126
  %v1128 = vpop.f32.mrb[0].mxu0
  %1129 = vmatprep.mubr.bf16.mxu0 0
  %1130 = vmatmul.mubr.bf16.gmra.mrb[0].mxu0 %v987
  %v1131 = vpop.f32.mrb[0].mxu0
  %v1132 = vadd.f32 %v61, %v1131
  %v1133 = vpop.f32.mrb[0].mxu0
  %v1134 = vpop.f32.mrb[0].mxu0
  %v1135 = vpop.f32.mrb[0].mxu0
  %1136 = vdwg.mxu0
  %v1137 = vmax.f32 %v1036, 0.0
  %v1138 = vmax.f32 %v1039, 0.0
  %v1139 = vmax.f32 %v1044, 0.0
  %v1140 = vmax.f32 %v1047, 0.0
  %v1141 = vmax.f32 %v1052, 0.0
  %v1142 = vmax.f32 %v1055, 0.0
  %v1143 = vmax.f32 %v1060, 0.0
  %v1144 = vmax.f32 %v1063, 0.0
  %v1145 = vmax.f32 %v1068, 0.0
  %v1146 = vmax.f32 %v1071, 0.0
  %v1147 = vmax.f32 %v1076, 0.0
  %v1148 = vmax.f32 %v1079, 0.0
  %v1149 = vmax.f32 %v1084, 0.0
  %v1150 = vmax.f32 %v1087, 0.0
  %v1151 = vmax.f32 %v1092, 0.0
  %v1152 = vmax.f32 %v1095, 0.0
  %v1153 = vmax.f32 %v1100, 0.0
  %v1154 = vmax.f32 %v1103, 0.0
  %v1155 = vmax.f32 %v1108, 0.0
  %v1156 = vmax.f32 %v1111, 0.0
  %v1157 = vmax.f32 %v1116, 0.0
  %v1158 = vmax.f32 %v1119, 0.0
  %v1159 = vmax.f32 %v1124, 0.0
  %v1160 = vmax.f32 %v1127, 0.0
  %v1161 = vmax.f32 %v1132, 0.0
  %v1162 = vmax.f32 %v874, %v1137
  %v1163 = vmax.f32 %v875, %v1138
  %v1164 = vmax.f32 %v876, %v1139
  %v1165 = vmax.f32 %v877, %v1140
  %v1166 = vmax.f32 %v878, %v1141
  %v1167 = vmax.f32 %v879, %v1142
  %v1168 = vmax.f32 %v880, %v1143
  %v1169 = vmax.f32 %v881, %v1144
  %v1170 = vmax.f32 %v882, %v1145
  %v1171 = vmax.f32 %v883, %v1146
  %v1172 = vmax.f32 %v884, %v1147
  %v1173 = vmax.f32 %v885, %v1148
  %v1174 = vmax.f32 %v886, %v1149
  %v1175 = vmax.f32 %v887, %v1150
  %v1176 = vmax.f32 %v888, %v1151
  %v1177 = vmax.f32 %v889, %v1152
  %v1178 = vmax.f32 %v890, %v1153
  %v1179 = vmax.f32 %v891, %v1154
  %v1180 = vmax.f32 %v892, %v1155
  %v1181 = vmax.f32 %v893, %v1156
  %v1182 = vmax.f32 %v894, %v1157
  %v1183 = vmax.f32 %v895, %v1158
  %v1184 = vmax.f32 %v896, %v1159
  %v1185 = vmax.f32 %v897, %v1160
  %v1186 = vmax.f32 %v898, %v1161
  %v1187 = vmax.f32 %v611, %v1162
  %v1188 = vmax.f32 %v612, %v1163
  %v1189 = vmax.f32 %v613, %v1164
  %v1190 = vmax.f32 %v614, %v1165
  %v1191 = vmax.f32 %v615, %v1166
  %v1192 = vmax.f32 %v616, %v1167
  %v1193 = vmax.f32 %v617, %v1168
  %v1194 = vmax.f32 %v618, %v1169
  %v1195 = vmax.f32 %v619, %v1170
  %v1196 = vmax.f32 %v620, %v1171
  %v1197 = vmax.f32 %v621, %v1172
  %v1198 = vmax.f32 %v622, %v1173
  %v1199 = vmax.f32 %v623, %v1174
  %v1200 = vmax.f32 %v624, %v1175
  %v1201 = vmax.f32 %v625, %v1176
  %v1202 = vmax.f32 %v626, %v1177
  %v1203 = vmax.f32 %v627, %v1178
  %v1204 = vmax.f32 %v628, %v1179
  %v1205 = vmax.f32 %v629, %v1180
  %v1206 = vmax.f32 %v630, %v1181
  %v1207 = vmax.f32 %v631, %v1182
  %v1208 = vmax.f32 %v632, %v1183
  %v1209 = vmax.f32 %v633, %v1184
  %v1210 = vmax.f32 %v634, %v1185
  %v1211 = vmax.f32 %v635, %v1186
  %v1212 = vpack.c.bf16 %v1188, %v1187
  %v1213 = vpack.c.bf16 %v1190, %v1189
  %v1214 = vpack.c.bf16 %v1192, %v1191
  %v1215 = vpack.c.bf16 %v1194, %v1193
  %v1216 = vpack.c.bf16 %v1196, %v1195
  %v1217 = vpack.c.bf16 %v1198, %v1197
  %v1218 = vpack.c.bf16 %v1200, %v1199
  %v1219 = vpack.c.bf16 %v1202, %v1201
  %v1220 = vpack.c.bf16 %v1204, %v1203
  %v1221 = vpack.c.bf16 %v1206, %v1205
  %v1222 = vpack.c.bf16 %v1208, %v1207
  %v1223 = vpack.c.bf16 %v1210, %v1209
  %v1224 = vpack.c.bf16 %v1211, %v1211
  %v1238 = vunpack.c.l.b16 %v1212
  %v1239 = vunpack.c.h.b16 %v1212
  %v1240 = vunpack.c.l.b16 %v1213
  %v1241 = vunpack.c.h.b16 %v1213
  %v1242 = vunpack.c.l.b16 %v1214
  %v1243 = vunpack.c.h.b16 %v1214
  %v1244 = vunpack.c.l.b16 %v1215
  %v1245 = vunpack.c.h.b16 %v1215
  %v1246 = vunpack.c.l.b16 %v1216
  %v1247 = vunpack.c.h.b16 %v1216
  %v1248 = vunpack.c.l.b16 %v1217
  %v1249 = vunpack.c.h.b16 %v1217
  %v1250 = vunpack.c.l.b16 %v1218
  %v1251 = vunpack.c.h.b16 %v1218
  %v1252 = vunpack.c.l.b16 %v1219
  %v1253 = vunpack.c.h.b16 %v1219
  %v1254 = vunpack.c.l.b16 %v1220
  %v1255 = vunpack.c.h.b16 %v1220
  %v1256 = vunpack.c.l.b16 %v1221
  %v1257 = vunpack.c.h.b16 %v1221
  %v1258 = vunpack.c.l.b16 %v1222
  %v1259 = vunpack.c.h.b16 %v1222
  %v1260 = vunpack.c.l.b16 %v1223
  %v1261 = vunpack.c.h.b16 %v1223
  %v1262 = vunpack.c.l.b16 %v1224
  %v1263 = vpack.c.b16 %v1238, %v1238
  %v1264 = vpack.c.b16 %v1239, %v1239
  %v1265 = vpack.c.b16 %v1240, %v1240
  %v1266 = vpack.c.b16 %v1241, %v1241
  %v1267 = vpack.c.b16 %v1242, %v1242
  %v1268 = vpack.c.b16 %v1243, %v1243
  %v1269 = vpack.c.b16 %v1244, %v1244
  %v1270 = vpack.c.b16 %v1245, %v1245
  %v1271 = vpack.c.b16 %v1246, %v1246
  %v1272 = vpack.c.b16 %v1247, %v1247
  %v1273 = vpack.c.b16 %v1248, %v1248
  %v1274 = vpack.c.b16 %v1249, %v1249
  %v1275 = vpack.c.b16 %v1250, %v1250
  %v1276 = vpack.c.b16 %v1251, %v1251
  %v1277 = vpack.c.b16 %v1252, %v1252
  %v1278 = vpack.c.b16 %v1253, %v1253
  %v1279 = vpack.c.b16 %v1254, %v1254
  %v1280 = vpack.c.b16 %v1255, %v1255
  %v1281 = vpack.c.b16 %v1256, %v1256
  %v1282 = vpack.c.b16 %v1257, %v1257
  %v1283 = vpack.c.b16 %v1258, %v1258
  %v1284 = vpack.c.b16 %v1259, %v1259
  %v1285 = vpack.c.b16 %v1260, %v1260
  %v1286 = vpack.c.b16 %v1261, %v1261
  %v1287 = vpack.c.b16 %v1262, %v1262
  %1313 = vst [vmem:[%s3] sm:$0xf] %v1263
  %1314 = vst [vmem:[%s3 + $0x4] sm:$0xf] %v1264
  %1315 = vst [vmem:[%s3 + $0x8] sm:$0xf] %v1265
  %1316 = vst [vmem:[%s3 + $0xc] sm:$0xf] %v1266
  %1317 = vst [vmem:[%s3 + $0x10] sm:$0xf] %v1267
  %1318 = vst [vmem:[%s3 + $0x14] sm:$0xf] %v1268
  %1319 = vst [vmem:[%s3 + $0x18] sm:$0xf] %v1269
  %1320 = vst [vmem:[%s3 + $0x1c] sm:$0xf] %v1270
  %1321 = vst [vmem:[%s3 + $0x20] sm:$0xf] %v1271
  %1322 = vst [vmem:[%s3 + $0x24] sm:$0xf] %v1272
  %1323 = vst [vmem:[%s3 + $0x28] sm:$0xf] %v1273
  %1324 = vst [vmem:[%s3 + $0x2c] sm:$0xf] %v1274
  %1325 = vst [vmem:[%s3 + $0x30] sm:$0xf] %v1275
  %1326 = vst [vmem:[%s3 + $0x34] sm:$0xf] %v1276
  %1327 = vst [vmem:[%s3 + $0x38] sm:$0xf] %v1277
  %1328 = vst [vmem:[%s3 + $0x3c] sm:$0xf] %v1278
  %1329 = vst [vmem:[%s3 + $0x40] sm:$0xf] %v1279
  %1330 = vst [vmem:[%s3 + $0x44] sm:$0xf] %v1280
  %1331 = vst [vmem:[%s3 + $0x48] sm:$0xf] %v1281
  %1332 = vst [vmem:[%s3 + $0x4c] sm:$0xf] %v1282
  %1333 = vst [vmem:[%s3 + $0x50] sm:$0xf] %v1283
  %1334 = vst [vmem:[%s3 + $0x54] sm:$0xf] %v1284
  %1335 = vst [vmem:[%s3 + $0x58] sm:$0xf] %v1285
  %1336 = vst [vmem:[%s3 + $0x5c] sm:$0xf] %v1286
  %1337 = vst [vmem:[%s3 + $0x60] sm:$0x3] %v1287
  // Predicated region
  $region14: #{forward.3} parent=0 // pred_check
    _
  $region15: #{forward.3} parent=0 // pred_check_branch
    %1339 = sbr.rel (0) target = $region17
  $region16: #{forward.3} parent=0 // pred_region
    _
  $region17: #{forward.3} parent=0 // pred_fallthru
    _
  // Predicated region
  $region18: #{forward.3} parent=0 // pred_check
    _
  $region19: #{forward.3} parent=0 // pred_check_branch
    %1341 = sbr.rel (0) target = $region21
  $region20: #{forward.3} parent=0 // pred_region
    _
  $region21: #{forward.3} parent=0 // pred_fallthru
    _

// kernel: squeeze.13
$region0: #{squeeze.13}
  %s0 = inlined_call_operand.vmem [shape: bf16[5,5,150], index: 0, kind: input, shape index: {}]
  %s1 = inlined_call_operand.vmem [shape: bf16[1,25,150], index: 1, kind: output, shape index: {}]
  $region1: #{squeeze.13} parent=0
    #allocation0 [shape = 'u8[32768]{0}', space=vmem, size = 0x8000, scoped, tag = 'scoped mem for output reshape']
    #allocation1 [shape = 'u8[40960]{0}', space=vmem, size = 0xa000, scoped, tag = 'scoped mem for input reshape']
    %s3 = smul.u32 4, 2
    %s4 = sshllo.u32 0, %s3
    %s5 = smul.addr 4, 9
    %s6 = scalar_lea.vmem %s0, %s5
    %s7 = sshrl.u32 %s4, 1
    %s8 = sor.u32 %s4, %s7
    %s9 = sand.u32 %s8, 85
    %s10 = sshrl.u32 %s9, 1
    %s11 = sor.u32 %s9, %s10
    %s12 = sand.u32 51, %s11
    %s13 = sshrl.u32 %s12, 2
    %s14 = sor.u32 %s12, %s13
    %s15 = sand.u32 15, %s14
    %v16 = vld [vmem:[%s6] sm:%s15]
    %v17 = vunpack.c.l.bf16 %v16
    %v18 = vunpack.c.h.bf16 %v16
    %s19 = scalar_lea.vmem [#allocation1], 72
    %20 = vst [vmem:[%s19] sm:%s4] %v17
    %s21 = smul.addr 4, 8
    %s22 = scalar_lea.vmem %s0, %s21
    %s23 = sshrl.u32 %s4, 1
    %s24 = sor.u32 %s4, %s23
    %s25 = sand.u32 %s24, 85
    %s26 = sshrl.u32 %s25, 1
    %s27 = sor.u32 %s25, %s26
    %s28 = sand.u32 51, %s27
    %s29 = sshrl.u32 %s28, 2
    %s30 = sor.u32 %s28, %s29
    %s31 = sand.u32 15, %s30
    %v32 = vld [vmem:[%s22] sm:%s31]
    %v33 = vunpack.c.l.bf16 %v32
    %v34 = vunpack.c.h.bf16 %v32
    %s35 = scalar_lea.vmem [#allocation1], 64
    %36 = vst [vmem:[%s35] sm:%s4] %v33
    %s37 = smul.addr 4, 7
    %s38 = scalar_lea.vmem %s0, %s37
    %s39 = sshrl.u32 %s4, 1
    %s40 = sor.u32 %s4, %s39
    %s41 = sand.u32 %s40, 85
    %s42 = sshrl.u32 %s41, 1
    %s43 = sor.u32 %s41, %s42
    %s44 = sand.u32 51, %s43
    %s45 = sshrl.u32 %s44, 2
    %s46 = sor.u32 %s44, %s45
    %s47 = sand.u32 15, %s46
    %v48 = vld [vmem:[%s38] sm:%s47]
    %v49 = vunpack.c.l.bf16 %v48
    %v50 = vunpack.c.h.bf16 %v48
    %s51 = scalar_lea.vmem [#allocation1], 56
    %52 = vst [vmem:[%s51] sm:%s4] %v49
    %s53 = smul.addr 4, 6
    %s54 = scalar_lea.vmem %s0, %s53
    %s55 = sshrl.u32 %s4, 1
    %s56 = sor.u32 %s4, %s55
    %s57 = sand.u32 %s56, 85
    %s58 = sshrl.u32 %s57, 1
    %s59 = sor.u32 %s57, %s58
    %s60 = sand.u32 51, %s59
    %s61 = sshrl.u32 %s60, 2
    %s62 = sor.u32 %s60, %s61
    %s63 = sand.u32 15, %s62
    %v64 = vld [vmem:[%s54] sm:%s63]
    %v65 = vunpack.c.l.bf16 %v64
    %v66 = vunpack.c.h.bf16 %v64
    %s67 = scalar_lea.vmem [#allocation1], 48
    %68 = vst [vmem:[%s67] sm:%s4] %v65
    %s69 = smul.addr 4, 5
    %s70 = scalar_lea.vmem %s0, %s69
    %s71 = sshrl.u32 %s4, 1
    %s72 = sor.u32 %s4, %s71
    %s73 = sand.u32 %s72, 85
    %s74 = sshrl.u32 %s73, 1
    %s75 = sor.u32 %s73, %s74
    %s76 = sand.u32 51, %s75
    %s77 = sshrl.u32 %s76, 2
    %s78 = sor.u32 %s76, %s77
    %s79 = sand.u32 15, %s78
    %v80 = vld [vmem:[%s70] sm:%s79]
    %v81 = vunpack.c.l.bf16 %v80
    %v82 = vunpack.c.h.bf16 %v80
    %s83 = scalar_lea.vmem [#allocation1], 40
    %84 = vst [vmem:[%s83] sm:%s4] %v81
    %s85 = smul.addr 4, 4
    %s86 = scalar_lea.vmem %s0, %s85
    %s87 = sshrl.u32 %s4, 1
    %s88 = sor.u32 %s4, %s87
    %s89 = sand.u32 %s88, 85
    %s90 = sshrl.u32 %s89, 1
    %s91 = sor.u32 %s89, %s90
    %s92 = sand.u32 51, %s91
    %s93 = sshrl.u32 %s92, 2
    %s94 = sor.u32 %s92, %s93
    %s95 = sand.u32 15, %s94
    %v96 = vld [vmem:[%s86] sm:%s95]
    %v97 = vunpack.c.l.bf16 %v96
    %v98 = vunpack.c.h.bf16 %v96
    %s99 = scalar_lea.vmem [#allocation1], 32
    %100 = vst [vmem:[%s99] sm:%s4] %v97
    %s101 = smul.addr 4, 3
    %s102 = scalar_lea.vmem %s0, %s101
    %s103 = sshrl.u32 %s4, 1
    %s104 = sor.u32 %s4, %s103
    %s105 = sand.u32 %s104, 85
    %s106 = sshrl.u32 %s105, 1
    %s107 = sor.u32 %s105, %s106
    %s108 = sand.u32 51, %s107
    %s109 = sshrl.u32 %s108, 2
    %s110 = sor.u32 %s108, %s109
    %s111 = sand.u32 15, %s110
    %v112 = vld [vmem:[%s102] sm:%s111]
    %v113 = vunpack.c.l.bf16 %v112
    %v114 = vunpack.c.h.bf16 %v112
    %s115 = scalar_lea.vmem [#allocation1], 24
    %116 = vst [vmem:[%s115] sm:%s4] %v113
    %s117 = smul.addr 4, 2
    %s118 = scalar_lea.vmem %s0, %s117
    %s119 = sshrl.u32 %s4, 1
    %s120 = sor.u32 %s4, %s119
    %s121 = sand.u32 %s120, 85
    %s122 = sshrl.u32 %s121, 1
    %s123 = sor.u32 %s121, %s122
    %s124 = sand.u32 51, %s123
    %s125 = sshrl.u32 %s124, 2
    %s126 = sor.u32 %s124, %s125
    %s127 = sand.u32 15, %s126
    %v128 = vld [vmem:[%s118] sm:%s127]
    %v129 = vunpack.c.l.bf16 %v128
    %v130 = vunpack.c.h.bf16 %v128
    %s131 = scalar_lea.vmem [#allocation1], 16
    %132 = vst [vmem:[%s131] sm:%s4] %v129
    %s133 = scalar_lea.vmem %s0, 4
    %s134 = sshrl.u32 %s4, 1
    %s135 = sor.u32 %s4, %s134
    %s136 = sand.u32 %s135, 85
    %s137 = sshrl.u32 %s136, 1
    %s138 = sor.u32 %s136, %s137
    %s139 = sand.u32 51, %s138
    %s140 = sshrl.u32 %s139, 2
    %s141 = sor.u32 %s139, %s140
    %s142 = sand.u32 15, %s141
    %v143 = vld [vmem:[%s133] sm:%s142]
    %v144 = vunpack.c.l.bf16 %v143
    %v145 = vunpack.c.h.bf16 %v143
    %s146 = scalar_lea.vmem [#allocation1], 8
    %147 = vst [vmem:[%s146] sm:%s4] %v144
    %s148 = sshrl.u32 %s4, 1
    %s149 = sor.u32 %s4, %s148
    %s150 = sand.u32 %s149, 85
    %s151 = sshrl.u32 %s150, 1
    %s152 = sor.u32 %s150, %s151
    %s153 = sand.u32 51, %s152
    %s154 = sshrl.u32 %s153, 2
    %s155 = sor.u32 %s153, %s154
    %s156 = sand.u32 15, %s155
    %v157 = vld [vmem:[%s0] sm:%s156]
    %v158 = vunpack.c.l.bf16 %v157
    %v159 = vunpack.c.h.bf16 %v157
    %160 = vst [vmem:[#allocation1] sm:%s4] %v158
    %s161 = scalar_lea.vmem [#allocation1], 8
    %v162 = vld [vmem:[%s161] sm:$0x1f]
    %vm163 = vcmask 179200
    %s164 = scalar_lea.vmem [#allocation0], 8
    %165 = vst.msk [vmem:[%s164] sm:$0x1f] %vm163, %v162
    %s166 = scalar_lea.vmem [#allocation1], 24
    %v167 = vld [vmem:[%s166] sm:$0x1f]
    %vm168 = vcmask 179200
    %s169 = scalar_lea.vmem [#allocation0], 13
    %170 = vst.msk [vmem:[%s169] sm:$0x7] %vm168, %v167
    %s171 = scalar_lea.vmem [#allocation0], 21
    %172 = vst.msk [vmem:[%s171] sm:$0x18] %vm168, %v167
    %s173 = scalar_lea.vmem [#allocation1], 40
    %v174 = vld [vmem:[%s173] sm:$0x1f]
    %vm175 = vcmask 179200
    %s176 = scalar_lea.vmem [#allocation0], 26
    %177 = vst.msk [vmem:[%s176] sm:$0x1f] %vm175, %v174
    %s178 = scalar_lea.vmem [#allocation1], 56
    %v179 = vld [vmem:[%s178] sm:$0x1f]
    %vm180 = vcmask 179200
    %s181 = scalar_lea.vmem [#allocation0], 31
    %182 = vst.msk [vmem:[%s181] ss:$9 sm:$0x3] %vm180, %v179
    %s183 = scalar_lea.vmem [#allocation0], 39
    %184 = vst.msk [vmem:[%s183] sm:$0x1c] %vm180, %v179
    %s185 = scalar_lea.vmem [#allocation1], 72
    %v186 = vld [vmem:[%s185] sm:$0x1f]
    %vm187 = vcmask 179200
    %s188 = scalar_lea.vmem [#allocation0], 44
    %189 = vst.msk [vmem:[%s188] sm:$0xf] %vm187, %v186
    %s190 = scalar_lea.vmem [#allocation0], 52
    %191 = vst.msk [vmem:[%s190] sm:$0x10] %vm187, %v186
    %v192 = vld [vmem:[#allocation1] sm:$0x1f]
    %193 = vst [vmem:[#allocation0] sm:$0x1f] %v192
    %s194 = scalar_lea.vmem [#allocation1], 16
    %v195 = vld [vmem:[%s194] sm:$0x1f]
    %s196 = scalar_lea.vmem [#allocation0], 5
    %197 = vst [vmem:[%s196] sm:$0x7] %v195
    %s198 = scalar_lea.vmem [#allocation0], 13
    %199 = vst [vmem:[%s198] sm:$0x18] %v195
    %s200 = scalar_lea.vmem [#allocation1], 32
    %v201 = vld [vmem:[%s200] sm:$0x1f]
    %s202 = scalar_lea.vmem [#allocation0], 18
    %203 = vst [vmem:[%s202] sm:$0x1f] %v201
    %s204 = scalar_lea.vmem [#allocation1], 48
    %v205 = vld [vmem:[%s204] sm:$0x1f]
    %s206 = scalar_lea.vmem [#allocation0], 23
    %207 = vst [vmem:[%s206] ss:$9 sm:$0x3] %v205
    %s208 = scalar_lea.vmem [#allocation0], 31
    %209 = vst [vmem:[%s208] sm:$0x1c] %v205
    %s210 = scalar_lea.vmem [#allocation1], 64
    %v211 = vld [vmem:[%s210] sm:$0x1f]
    %s212 = scalar_lea.vmem [#allocation0], 36
    %213 = vst [vmem:[%s212] sm:$0xf] %v211
    %s214 = scalar_lea.vmem [#allocation0], 44
    %215 = vst [vmem:[%s214] sm:$0x10] %v211
    %s217 = smul.u32 4, 2
    %s218 = sshllo.u32 0, %s217
    %s219 = sshrl.u32 %s217, 1
    %v220 = vld [vmem:[#allocation0] sm:%s218]
    %v221 = vpack.c.bf16 0.0, %v220
    %s222 = sshllo.u32 0, %s219
    %223 = vst [vmem:[%s1] sm:%s222] %v221
    %s224 = scalar_lea.vmem [#allocation0], 8
    %v225 = vld [vmem:[%s224] sm:%s218]
    %v226 = vpack.c.bf16 0.0, %v225
    %s227 = sshllo.u32 0, %s219
    %s228 = scalar_lea.vmem %s1, 4
    %229 = vst [vmem:[%s228] sm:%s227] %v226
    %s230 = scalar_lea.vmem [#allocation0], 16
    %v231 = vld [vmem:[%s230] sm:%s218]
    %v232 = vpack.c.bf16 0.0, %v231
    %s233 = sshllo.u32 0, %s219
    %s234 = smul.addr 4, 2
    %s235 = scalar_lea.vmem %s1, %s234
    %236 = vst [vmem:[%s235] sm:%s233] %v232
    %s237 = scalar_lea.vmem [#allocation0], 24
    %v238 = vld [vmem:[%s237] sm:%s218]
    %v239 = vpack.c.bf16 0.0, %v238
    %s240 = sshllo.u32 0, %s219
    %s241 = smul.addr 4, 3
    %s242 = scalar_lea.vmem %s1, %s241
    %243 = vst [vmem:[%s242] sm:%s240] %v239
    %s244 = scalar_lea.vmem [#allocation0], 32
    %v245 = vld [vmem:[%s244] sm:%s218]
    %v246 = vpack.c.bf16 0.0, %v245
    %s247 = sshllo.u32 0, %s219
    %s248 = smul.addr 4, 4
    %s249 = scalar_lea.vmem %s1, %s248
    %250 = vst [vmem:[%s249] sm:%s247] %v246
    %s251 = scalar_lea.vmem [#allocation0], 40
    %v252 = vld [vmem:[%s251] sm:%s218]
    %v253 = vpack.c.bf16 0.0, %v252
    %s254 = sshllo.u32 0, %s219
    %s255 = smul.addr 4, 5
    %s256 = scalar_lea.vmem %s1, %s255
    %257 = vst [vmem:[%s256] sm:%s254] %v253
    %s258 = scalar_lea.vmem [#allocation0], 48
    %v259 = vld [vmem:[%s258] sm:%s218]
    %v260 = vpack.c.bf16 0.0, %v259
    %s261 = sshllo.u32 0, %s219
    %s262 = smul.addr 4, 6
    %s263 = scalar_lea.vmem %s1, %s262
    %264 = vst [vmem:[%s263] sm:%s261] %v260
    %s265 = scalar_lea.vmem [#allocation0], 56
    %v266 = vld [vmem:[%s265] sm:%s218]
    %v267 = vpack.c.bf16 0.0, %v266
    %s268 = sshllo.u32 0, %s219
    %s269 = smul.addr 4, 7
    %s270 = scalar_lea.vmem %s1, %s269
    %271 = vst [vmem:[%s270] sm:%s268] %v267

// kernel: forward.4
$region0: #{forward.4}
  #allocation0 [shape = 'u32[]', space=smem, size = 0x4, offset = 0x4, fixed_abs, tag = 'smem constant byte address 0x4 - core index']
  #allocation1 [shape = 'u32[144,128]{1,0:T(1,128)}', space=vmem, size = 0x12000, scoped, tag = 'internal scratch']
  %s0 = inlined_call_operand.vmem [shape: bf16[4,25,256], index: 0, kind: input, shape index: {}]
  %s1 = inlined_call_operand.vmem [shape: bf16[256,128], index: 1, kind: input, shape index: {}]
  %s2 = inlined_call_operand.vmem [shape: f32[1,128], index: 2, kind: input, shape index: {}]
  %s3 = inlined_call_operand.vmem [shape: bf16[25,128], index: 3, kind: output, shape index: {}]
  %s4 = sld [smem:[#allocation0]]
  $region22: #{forward.4} parent=0
    _
  %s6 = ssub.s32 1, %s4
  %s7 = scalar_select 0, %s6, %s4
  // Predicated region
  $region2: #{forward.4} parent=0 // pred_check
    _
  $region3: #{forward.4} parent=0 // pred_check_branch
    %9 = sbr.rel (0) target = $region5
  $region4: #{forward.4} parent=0 // pred_region
    _
  $region5: #{forward.4} parent=0 // pred_fallthru
    _
  // Predicated region
  $region6: #{forward.4} parent=0 // pred_check
    _
  $region7: #{forward.4} parent=0 // pred_check_branch
    %11 = sbr.rel (0) target = $region9
  $region8: #{forward.4} parent=0 // pred_region
    _
  $region9: #{forward.4} parent=0 // pred_fallthru
    _
  // Predicated region
  $region10: #{forward.4} parent=0 // pred_check
    _
  $region11: #{forward.4} parent=0 // pred_check_branch
    %13 = sbr.rel (0) target = $region13
  $region12: #{forward.4} parent=0 // pred_region
    _
  $region13: #{forward.4} parent=0 // pred_fallthru
    _
  %v15 = vld [vmem:[%s1] sm:$0xf]
  %v16 = vld [vmem:[%s1 + $0x4] sm:$0xf]
  %v17 = vld [vmem:[%s1 + $0x8] sm:$0xf]
  %v18 = vld [vmem:[%s1 + $0xc] sm:$0xf]
  %v19 = vld [vmem:[%s1 + $0x10] sm:$0xf]
  %v20 = vld [vmem:[%s1 + $0x14] sm:$0xf]
  %v21 = vld [vmem:[%s1 + $0x18] sm:$0xf]
  %v22 = vld [vmem:[%s1 + $0x1c] sm:$0xf]
  %v23 = vld [vmem:[%s1 + $0x20] sm:$0xf]
  %v24 = vld [vmem:[%s1 + $0x24] sm:$0xf]
  %v25 = vld [vmem:[%s1 + $0x28] sm:$0xf]
  %v26 = vld [vmem:[%s1 + $0x2c] sm:$0xf]
  %v27 = vld [vmem:[%s1 + $0x30] sm:$0xf]
  %v28 = vld [vmem:[%s1 + $0x34] sm:$0xf]
  %v29 = vld [vmem:[%s1 + $0x38] sm:$0xf]
  %v30 = vld [vmem:[%s1 + $0x3c] sm:$0xf]
  %v31 = vld [vmem:[%s1 + $0x40] sm:$0xf]
  %v32 = vld [vmem:[%s1 + $0x44] sm:$0xf]
  %v33 = vld [vmem:[%s1 + $0x48] sm:$0xf]
  %v34 = vld [vmem:[%s1 + $0x4c] sm:$0xf]
  %v35 = vld [vmem:[%s1 + $0x50] sm:$0xf]
  %v36 = vld [vmem:[%s1 + $0x54] sm:$0xf]
  %v37 = vld [vmem:[%s1 + $0x58] sm:$0xf]
  %v38 = vld [vmem:[%s1 + $0x5c] sm:$0xf]
  %v39 = vld [vmem:[%s1 + $0x60] sm:$0xf]
  %v40 = vld [vmem:[%s1 + $0x64] sm:$0xf]
  %v41 = vld [vmem:[%s1 + $0x68] sm:$0xf]
  %v42 = vld [vmem:[%s1 + $0x6c] sm:$0xf]
  %v43 = vld [vmem:[%s1 + $0x70] sm:$0xf]
  %v44 = vld [vmem:[%s1 + $0x74] sm:$0xf]
  %v45 = vld [vmem:[%s1 + $0x78] sm:$0xf]
  %v46 = vld [vmem:[%s1 + $0x7c] sm:$0xf]
  %v47 = vld [vmem:[%s2] sm:$0x1]
  %v48 = vld [vmem:[%s0] sm:$0xff]
  %v49 = vld [vmem:[%s0 + $0x8] sm:$0xff]
  %v50 = vld [vmem:[%s0 + $0x10] sm:$0xff]
  %v51 = vld [vmem:[%s0 + $0x18] sm:$0x11]
  %v53 = vlaneseq
  %v54 = vshrl.u32 %v53, 7
  %v55 = vsub.s32 0, %v54
  %v56 = vrot.slane %v47, %v55
  %v62 = vunpack.c.l.b16 %v48
  %v63 = vunpack.c.h.b16 %v48
  %v64 = vunpack.c.l.b16 %v49
  %v65 = vunpack.c.h.b16 %v49
  %v66 = vunpack.c.l.b16 %v50
  %v67 = vunpack.c.h.b16 %v50
  %v68 = vunpack.c.l.b16 %v51
  %v69 = vunpack.c.h.b16 %v51
  %v70 = vpack.c.b16 %v64, %v62
  %v71 = vpack.c.b16 %v65, %v63
  %v72 = vpack.c.b16 %v68, %v66
  %v73 = vpack.c.b16 %v69, %v67
  %v110 = vunpack.c.l.b16 %v15
  %v111 = vunpack.c.l.b16 %v16
  %v112 = vunpack.c.l.b16 %v17
  %v113 = vunpack.c.l.b16 %v18
  %v114 = vunpack.c.l.b16 %v19
  %v115 = vunpack.c.l.b16 %v20
  %v116 = vunpack.c.l.b16 %v21
  %v117 = vunpack.c.l.b16 %v22
  %v118 = vunpack.c.l.b16 %v23
  %v119 = vunpack.c.l.b16 %v24
  %v120 = vunpack.c.l.b16 %v25
  %v121 = vunpack.c.l.b16 %v26
  %v122 = vunpack.c.l.b16 %v27
  %v123 = vunpack.c.l.b16 %v28
  %v124 = vunpack.c.l.b16 %v29
  %v125 = vunpack.c.l.b16 %v30
  %v126 = vunpack.c.l.b16 %v31
  %v127 = vunpack.c.l.b16 %v32
  %v128 = vunpack.c.l.b16 %v33
  %v129 = vunpack.c.l.b16 %v34
  %v130 = vunpack.c.l.b16 %v35
  %v131 = vunpack.c.l.b16 %v36
  %v132 = vunpack.c.l.b16 %v37
  %v133 = vunpack.c.l.b16 %v38
  %v134 = vunpack.c.l.b16 %v39
  %v135 = vunpack.c.l.b16 %v40
  %v136 = vunpack.c.l.b16 %v41
  %v137 = vunpack.c.l.b16 %v42
  %v138 = vunpack.c.l.b16 %v43
  %v139 = vunpack.c.l.b16 %v44
  %v140 = vunpack.c.l.b16 %v45
  %v141 = vunpack.c.l.b16 %v46
  %v142 = vpack.c.b16 %v111, %v110
  %v143 = vpack.c.b16 %v113, %v112
  %v144 = vpack.c.b16 %v115, %v114
  %v145 = vpack.c.b16 %v117, %v116
  %v146 = vpack.c.b16 %v119, %v118
  %v147 = vpack.c.b16 %v121, %v120
  %v148 = vpack.c.b16 %v123, %v122
  %v149 = vpack.c.b16 %v125, %v124
  %v150 = vpack.c.b16 %v127, %v126
  %v151 = vpack.c.b16 %v129, %v128
  %v152 = vpack.c.b16 %v131, %v130
  %v153 = vpack.c.b16 %v133, %v132
  %v154 = vpack.c.b16 %v135, %v134
  %v155 = vpack.c.b16 %v137, %v136
  %v156 = vpack.c.b16 %v139, %v138
  %v157 = vpack.c.b16 %v141, %v140
  %174 = vmatprep.subr.bf16.mxu0 0
  %175 = vmatpush1.bf16.msra.mxu0 %v142
  %176 = vmatprep.subr.bf16.mxu0 0
  %177 = vmatpush1.bf16.msra.mxu0 %v143
  %178 = vmatprep.subr.bf16.mxu0 0
  %179 = vmatpush1.bf16.msra.mxu0 %v144
  %180 = vmatprep.subr.bf16.mxu0 0
  %181 = vmatpush1.bf16.msra.mxu0 %v145
  %182 = vmatprep.subr.bf16.mxu0 0
  %183 = vmatpush1.bf16.msra.mxu0 %v146
  %184 = vmatprep.subr.bf16.mxu0 0
  %185 = vmatpush1.bf16.msra.mxu0 %v147
  %186 = vmatprep.subr.bf16.mxu0 0
  %187 = vmatpush1.bf16.msra.mxu0 %v148
  %188 = vmatprep.subr.bf16.mxu0 0
  %189 = vmatpush1.bf16.msra.mxu0 %v149
  %190 = vmatprep.subr.bf16.mxu0 0
  %191 = vmatpush1.bf16.msra.mxu0 %v150
  %192 = vmatprep.subr.bf16.mxu0 0
  %193 = vmatpush1.bf16.msra.mxu0 %v151
  %194 = vmatprep.subr.bf16.mxu0 0
  %195 = vmatpush1.bf16.msra.mxu0 %v152
  %196 = vmatprep.subr.bf16.mxu0 0
  %197 = vmatpush1.bf16.msra.mxu0 %v153
  %198 = vmatprep.subr.bf16.mxu0 0
  %199 = vmatpush1.bf16.msra.mxu0 %v154
  %200 = vmatprep.subr.bf16.mxu0 0
  %201 = vmatpush1.bf16.msra.mxu0 %v155
  %202 = vmatprep.subr.bf16.mxu0 0
  %203 = vmatpush1.bf16.msra.mxu0 %v156
  %204 = vmatprep.subr.bf16.mxu0 0
  %205 = vmatpush1.bf16.msra.mxu0 %v157
  %206 = vmatprep.mubr.bf16.mxu0 %v71
  %207 = vmatmul.mubr.bf16.gmra.mrb[0].mxu0 %v70
  %v208 = vpop.f32.mrb[0].mxu0
  %v209 = vadd.f32 %v56, %v208
  %v210 = vpop.f32.mrb[0].mxu0
  %v211 = vpop.f32.mrb[0].mxu0
  %v212 = vadd.f32 %v56, %v211
  %v213 = vpop.f32.mrb[0].mxu0
  %214 = vmatprep.mubr.bf16.mxu0 %v73
  %215 = vmatmul.mubr.bf16.gmra.mrb[0].mxu0 %v72
  %v216 = vpop.f32.mrb[0].mxu0
  %v217 = vadd.f32 %v56, %v216
  %v218 = vpop.f32.mrb[0].mxu0
  %v219 = vpop.f32.mrb[0].mxu0
  %v220 = vadd.f32 %v56, %v219
  %v221 = vpop.f32.mrb[0].mxu0
  %222 = vdwg.mxu0
  %v223 = vmax.f32 %v209, 0.0
  %v224 = vmax.f32 %v212, 0.0
  %v225 = vmax.f32 %v217, 0.0
  %v226 = vmax.f32 %v220, 0.0
  %s227 = scalar_lea.vmem %s0, 32
  %v228 = vld [vmem:[%s227] sm:$0xff]
  %v229 = vld [vmem:[%s227 + $0x8] sm:$0xff]
  %v230 = vld [vmem:[%s227 + $0x10] sm:$0xff]
  %v231 = vld [vmem:[%s227 + $0x18] sm:$0x11]
  %v236 = vunpack.c.l.b16 %v228
  %v237 = vunpack.c.h.b16 %v228
  %v238 = vunpack.c.l.b16 %v229
  %v239 = vunpack.c.h.b16 %v229
  %v240 = vunpack.c.l.b16 %v230
  %v241 = vunpack.c.h.b16 %v230
  %v242 = vunpack.c.l.b16 %v231
  %v243 = vunpack.c.h.b16 %v231
  %v244 = vpack.c.b16 %v238, %v236
  %v245 = vpack.c.b16 %v239, %v237
  %v246 = vpack.c.b16 %v242, %v240
  %v247 = vpack.c.b16 %v243, %v241
  %252 = vmatprep.subr.bf16.mxu0 0
  %253 = vmatpush1.bf16.msra.mxu0 %v142
  %254 = vmatprep.subr.bf16.mxu0 0
  %255 = vmatpush1.bf16.msra.mxu0 %v143
  %256 = vmatprep.subr.bf16.mxu0 0
  %257 = vmatpush1.bf16.msra.mxu0 %v144
  %258 = vmatprep.subr.bf16.mxu0 0
  %259 = vmatpush1.bf16.msra.mxu0 %v145
  %260 = vmatprep.subr.bf16.mxu0 0
  %261 = vmatpush1.bf16.msra.mxu0 %v146
  %262 = vmatprep.subr.bf16.mxu0 0
  %263 = vmatpush1.bf16.msra.mxu0 %v147
  %264 = vmatprep.subr.bf16.mxu0 0
  %265 = vmatpush1.bf16.msra.mxu0 %v148
  %266 = vmatprep.subr.bf16.mxu0 0
  %267 = vmatpush1.bf16.msra.mxu0 %v149
  %268 = vmatprep.subr.bf16.mxu0 0
  %269 = vmatpush1.bf16.msra.mxu0 %v150
  %270 = vmatprep.subr.bf16.mxu0 0
  %271 = vmatpush1.bf16.msra.mxu0 %v151
  %272 = vmatprep.subr.bf16.mxu0 0
  %273 = vmatpush1.bf16.msra.mxu0 %v152
  %274 = vmatprep.subr.bf16.mxu0 0
  %275 = vmatpush1.bf16.msra.mxu0 %v153
  %276 = vmatprep.subr.bf16.mxu0 0
  %277 = vmatpush1.bf16.msra.mxu0 %v154
  %278 = vmatprep.subr.bf16.mxu0 0
  %279 = vmatpush1.bf16.msra.mxu0 %v155
  %280 = vmatprep.subr.bf16.mxu0 0
  %281 = vmatpush1.bf16.msra.mxu0 %v156
  %282 = vmatprep.subr.bf16.mxu0 0
  %283 = vmatpush1.bf16.msra.mxu0 %v157
  %284 = vmatprep.mubr.bf16.mxu0 %v245
  %285 = vmatmul.mubr.bf16.gmra.mrb[0].mxu0 %v244
  %v286 = vpop.f32.mrb[0].mxu0
  %v287 = vadd.f32 %v56, %v286
  %v288 = vpop.f32.mrb[0].mxu0
  %v289 = vpop.f32.mrb[0].mxu0
  %v290 = vadd.f32 %v56, %v289
  %v291 = vpop.f32.mrb[0].mxu0
  %292 = vmatprep.mubr.bf16.mxu0 %v247
  %293 = vmatmul.mubr.bf16.gmra.mrb[0].mxu0 %v246
  %v294 = vpop.f32.mrb[0].mxu0
  %v295 = vadd.f32 %v56, %v294
  %v296 = vpop.f32.mrb[0].mxu0
  %v297 = vpop.f32.mrb[0].mxu0
  %v298 = vadd.f32 %v56, %v297
  %v299 = vpop.f32.mrb[0].mxu0
  %300 = vdwg.mxu0
  %v301 = vmax.f32 %v287, 0.0
  %v302 = vmax.f32 %v290, 0.0
  %v303 = vmax.f32 %v295, 0.0
  %v304 = vmax.f32 %v298, 0.0
  %v305 = vmax.f32 %v223, %v301
  %v306 = vmax.f32 %v224, %v302
  %v307 = vmax.f32 %v225, %v303
  %v308 = vmax.f32 %v226, %v304
  %s309 = scalar_lea.vmem %s0, 64
  %v310 = vld [vmem:[%s309] sm:$0xff]
  %v311 = vld [vmem:[%s309 + $0x8] sm:$0xff]
  %v312 = vld [vmem:[%s309 + $0x10] sm:$0xff]
  %v313 = vld [vmem:[%s309 + $0x18] sm:$0x11]
  %v318 = vunpack.c.l.b16 %v310
  %v319 = vunpack.c.h.b16 %v310
  %v320 = vunpack.c.l.b16 %v311
  %v321 = vunpack.c.h.b16 %v311
  %v322 = vunpack.c.l.b16 %v312
  %v323 = vunpack.c.h.b16 %v312
  %v324 = vunpack.c.l.b16 %v313
  %v325 = vunpack.c.h.b16 %v313
  %v326 = vpack.c.b16 %v320, %v318
  %v327 = vpack.c.b16 %v321, %v319
  %v328 = vpack.c.b16 %v324, %v322
  %v329 = vpack.c.b16 %v325, %v323
  %334 = vmatprep.subr.bf16.mxu0 0
  %335 = vmatpush1.bf16.msra.mxu0 %v142
  %336 = vmatprep.subr.bf16.mxu0 0
  %337 = vmatpush1.bf16.msra.mxu0 %v143
  %338 = vmatprep.subr.bf16.mxu0 0
  %339 = vmatpush1.bf16.msra.mxu0 %v144
  %340 = vmatprep.subr.bf16.mxu0 0
  %341 = vmatpush1.bf16.msra.mxu0 %v145
  %342 = vmatprep.subr.bf16.mxu0 0
  %343 = vmatpush1.bf16.msra.mxu0 %v146
  %344 = vmatprep.subr.bf16.mxu0 0
  %345 = vmatpush1.bf16.msra.mxu0 %v147
  %346 = vmatprep.subr.bf16.mxu0 0
  %347 = vmatpush1.bf16.msra.mxu0 %v148
  %348 = vmatprep.subr.bf16.mxu0 0
  %349 = vmatpush1.bf16.msra.mxu0 %v149
  %350 = vmatprep.subr.bf16.mxu0 0
  %351 = vmatpush1.bf16.msra.mxu0 %v150
  %352 = vmatprep.subr.bf16.mxu0 0
  %353 = vmatpush1.bf16.msra.mxu0 %v151
  %354 = vmatprep.subr.bf16.mxu0 0
  %355 = vmatpush1.bf16.msra.mxu0 %v152
  %356 = vmatprep.subr.bf16.mxu0 0
  %357 = vmatpush1.bf16.msra.mxu0 %v153
  %358 = vmatprep.subr.bf16.mxu0 0
  %359 = vmatpush1.bf16.msra.mxu0 %v154
  %360 = vmatprep.subr.bf16.mxu0 0
  %361 = vmatpush1.bf16.msra.mxu0 %v155
  %362 = vmatprep.subr.bf16.mxu0 0
  %363 = vmatpush1.bf16.msra.mxu0 %v156
  %364 = vmatprep.subr.bf16.mxu0 0
  %365 = vmatpush1.bf16.msra.mxu0 %v157
  %366 = vmatprep.mubr.bf16.mxu0 %v327
  %367 = vmatmul.mubr.bf16.gmra.mrb[0].mxu0 %v326
  %v368 = vpop.f32.mrb[0].mxu0
  %v369 = vadd.f32 %v56, %v368
  %v370 = vpop.f32.mrb[0].mxu0
  %v371 = vpop.f32.mrb[0].mxu0
  %v372 = vadd.f32 %v56, %v371
  %v373 = vpop.f32.mrb[0].mxu0
  %374 = vmatprep.mubr.bf16.mxu0 %v329
  %375 = vmatmul.mubr.bf16.gmra.mrb[0].mxu0 %v328
  %v376 = vpop.f32.mrb[0].mxu0
  %v377 = vadd.f32 %v56, %v376
  %v378 = vpop.f32.mrb[0].mxu0
  %v379 = vpop.f32.mrb[0].mxu0
  %v380 = vadd.f32 %v56, %v379
  %v381 = vpop.f32.mrb[0].mxu0
  %382 = vdwg.mxu0
  %v383 = vmax.f32 %v369, 0.0
  %v384 = vmax.f32 %v372, 0.0
  %v385 = vmax.f32 %v377, 0.0
  %v386 = vmax.f32 %v380, 0.0
  %s387 = scalar_lea.vmem %s0, 96
  %v388 = vld [vmem:[%s387] sm:$0xff]
  %v389 = vld [vmem:[%s387 + $0x8] sm:$0xff]
  %v390 = vld [vmem:[%s387 + $0x10] sm:$0xff]
  %v391 = vld [vmem:[%s387 + $0x18] sm:$0x11]
  %v396 = vunpack.c.l.b16 %v388
  %v397 = vunpack.c.h.b16 %v388
  %v398 = vunpack.c.l.b16 %v389
  %v399 = vunpack.c.h.b16 %v389
  %v400 = vunpack.c.l.b16 %v390
  %v401 = vunpack.c.h.b16 %v390
  %v402 = vunpack.c.l.b16 %v391
  %v403 = vunpack.c.h.b16 %v391
  %v404 = vpack.c.b16 %v398, %v396
  %v405 = vpack.c.b16 %v399, %v397
  %v406 = vpack.c.b16 %v402, %v400
  %v407 = vpack.c.b16 %v403, %v401
  %412 = vmatprep.subr.bf16.mxu0 0
  %413 = vmatpush1.bf16.msra.mxu0 %v142
  %414 = vmatprep.subr.bf16.mxu0 0
  %415 = vmatpush1.bf16.msra.mxu0 %v143
  %416 = vmatprep.subr.bf16.mxu0 0
  %417 = vmatpush1.bf16.msra.mxu0 %v144
  %418 = vmatprep.subr.bf16.mxu0 0
  %419 = vmatpush1.bf16.msra.mxu0 %v145
  %420 = vmatprep.subr.bf16.mxu0 0
  %421 = vmatpush1.bf16.msra.mxu0 %v146
  %422 = vmatprep.subr.bf16.mxu0 0
  %423 = vmatpush1.bf16.msra.mxu0 %v147
  %424 = vmatprep.subr.bf16.mxu0 0
  %425 = vmatpush1.bf16.msra.mxu0 %v148
  %426 = vmatprep.subr.bf16.mxu0 0
  %427 = vmatpush1.bf16.msra.mxu0 %v149
  %428 = vmatprep.subr.bf16.mxu0 0
  %429 = vmatpush1.bf16.msra.mxu0 %v150
  %430 = vmatprep.subr.bf16.mxu0 0
  %431 = vmatpush1.bf16.msra.mxu0 %v151
  %432 = vmatprep.subr.bf16.mxu0 0
  %433 = vmatpush1.bf16.msra.mxu0 %v152
  %434 = vmatprep.subr.bf16.mxu0 0
  %435 = vmatpush1.bf16.msra.mxu0 %v153
  %436 = vmatprep.subr.bf16.mxu0 0
  %437 = vmatpush1.bf16.msra.mxu0 %v154
  %438 = vmatprep.subr.bf16.mxu0 0
  %439 = vmatpush1.bf16.msra.mxu0 %v155
  %440 = vmatprep.subr.bf16.mxu0 0
  %441 = vmatpush1.bf16.msra.mxu0 %v156
  %442 = vmatprep.subr.bf16.mxu0 0
  %443 = vmatpush1.bf16.msra.mxu0 %v157
  %444 = vmatprep.mubr.bf16.mxu0 %v405
  %445 = vmatmul.mubr.bf16.gmra.mrb[0].mxu0 %v404
  %v446 = vpop.f32.mrb[0].mxu0
  %v447 = vadd.f32 %v56, %v446
  %v448 = vpop.f32.mrb[0].mxu0
  %v449 = vpop.f32.mrb[0].mxu0
  %v450 = vadd.f32 %v56, %v449
  %v451 = vpop.f32.mrb[0].mxu0
  %452 = vmatprep.mubr.bf16.mxu0 %v407
  %453 = vmatmul.mubr.bf16.gmra.mrb[0].mxu0 %v406
  %v454 = vpop.f32.mrb[0].mxu0
  %v455 = vadd.f32 %v56, %v454
  %v456 = vpop.f32.mrb[0].mxu0
  %v457 = vpop.f32.mrb[0].mxu0
  %v458 = vadd.f32 %v56, %v457
  %v459 = vpop.f32.mrb[0].mxu0
  %460 = vdwg.mxu0
  %v461 = vmax.f32 %v447, 0.0
  %v462 = vmax.f32 %v450, 0.0
  %v463 = vmax.f32 %v455, 0.0
  %v464 = vmax.f32 %v458, 0.0
  %v465 = vmax.f32 %v383, %v461
  %v466 = vmax.f32 %v384, %v462
  %v467 = vmax.f32 %v385, %v463
  %v468 = vmax.f32 %v386, %v464
  %v469 = vmax.f32 %v305, %v465
  %v470 = vmax.f32 %v306, %v466
  %v471 = vmax.f32 %v307, %v467
  %v472 = vmax.f32 %v308, %v468
  %v473 = vpack.c.bf16 %v470, %v469
  %v474 = vpack.c.bf16 %v472, %v471
  %v477 = vunpack.c.l.b16 %v473
  %v478 = vunpack.c.h.b16 %v473
  %v479 = vunpack.c.l.b16 %v474
  %v480 = vunpack.c.h.b16 %v474
  %v481 = vpack.c.b16 %v477, %v477
  %v482 = vpack.c.b16 %v478, %v478
  %v483 = vpack.c.b16 %v479, %v479
  %v484 = vpack.c.b16 %v480, %v480
  %489 = vst [vmem:[%s3] sm:$0xf] %v481
  %490 = vst [vmem:[%s3 + $0x4] sm:$0xf] %v482
  %491 = vst [vmem:[%s3 + $0x8] sm:$0xf] %v483
  %vm492 = vcmask 1040384
  %vm493 = vsmask.f32 256
  %vm494 = vmand %vm492, %vm493
  %v495 = vld [vmem:[%s3 + $0xc] sm:$0x1]
  %v496 = vsel %vm494, %v484, %v495
  %497 = vst [vmem:[%s3 + $0xc] sm:$0x1] %v496
  // Predicated region
  $region14: #{forward.4} parent=0 // pred_check
    _
  $region15: #{forward.4} parent=0 // pred_check_branch
    %499 = sbr.rel (0) target = $region17
  $region16: #{forward.4} parent=0 // pred_region
    _
  $region17: #{forward.4} parent=0 // pred_fallthru
    _
  // Predicated region
  $region18: #{forward.4} parent=0 // pred_check
    _
  $region19: #{forward.4} parent=0 // pred_check_branch
    %501 = sbr.rel (0) target = $region21
  $region20: #{forward.4} parent=0 // pred_region
    _
  $region21: #{forward.4} parent=0 // pred_fallthru
    _

// kernel: forward.5
$region0: #{forward.5}
  #allocation0 [shape = 'u32[]', space=smem, size = 0x4, offset = 0x4, fixed_abs, tag = 'smem constant byte address 0x4 - core index']
  #allocation1 [shape = 'u32[144,128]{1,0:T(1,128)}', space=vmem, size = 0x12000, scoped, tag = 'internal scratch']
  %s0 = inlined_call_operand.vmem [shape: bf16[8,3200], index: 0, kind: input, shape index: {}]
  %s1 = inlined_call_operand.vmem [shape: f32[8,128], index: 1, kind: input, shape index: {}]
  %s2 = inlined_call_operand.vmem [shape: bf16[3200,128], index: 2, kind: input, shape index: {}]
  %s3 = inlined_call_operand.vmem [shape: f32[1,128], index: 3, kind: input, shape index: {}]
  %s4 = inlined_call_operand.vmem [shape: bf16[128,128], index: 4, kind: input, shape index: {}]
  %s5 = inlined_call_operand.vmem [shape: f32[1,128], index: 5, kind: input, shape index: {}]
  %s6 = inlined_call_operand.vmem [shape: bf16[128,128], index: 6, kind: input, shape index: {}]
  %s7 = inlined_call_operand.vmem [shape: f32[1,128], index: 7, kind: input, shape index: {}]
  %s8 = inlined_call_operand.vmem [shape: bf16[128,128], index: 8, kind: input, shape index: {}]
  %s9 = inlined_call_operand.vmem [shape: f32[1,128], index: 9, kind: input, shape index: {}]
  %s10 = inlined_call_operand.vmem [shape: bf16[128,128], index: 10, kind: input, shape index: {}]
  %s11 = inlined_call_operand.vmem [shape: f32[1,128], index: 11, kind: input, shape index: {}]
  %s12 = inlined_call_operand.vmem [shape: bf16[128,128], index: 12, kind: input, shape index: {}]
  %s13 = inlined_call_operand.vmem [shape: bf16[128,128], index: 13, kind: input, shape index: {}]
  %s14 = inlined_call_operand.vmem [shape: f32[1,128], index: 14, kind: input, shape index: {}]
  %s15 = inlined_call_operand.vmem [shape: bf16[128,128], index: 15, kind: input, shape index: {}]
  %s16 = inlined_call_operand.vmem [shape: f32[1,128], index: 16, kind: input, shape index: {}]
  %s17 = inlined_call_operand.vmem [shape: f32[8,128], index: 17, kind: output, shape index: {}]
  %s18 = sld [smem:[#allocation0]]
  $region78: #{forward.5} parent=0
    _
  %s20 = ssub.s32 1, %s18
  %s21 = scalar_select 0, %s20, %s18
  // Predicated region
  $region2: #{forward.5} parent=0 // pred_check
    _
  $region3: #{forward.5} parent=0 // pred_check_branch
    %23 = sbr.rel (0) target = $region5
  $region4: #{forward.5} parent=0 // pred_region
    _
  $region5: #{forward.5} parent=0 // pred_fallthru
    _
  // Predicated region
  $region6: #{forward.5} parent=0 // pred_check
    _
  $region7: #{forward.5} parent=0 // pred_check_branch
    %25 = sbr.rel (0) target = $region9
  $region8: #{forward.5} parent=0 // pred_region
    _
  $region9: #{forward.5} parent=0 // pred_fallthru
    _
  // Predicated region
  $region10: #{forward.5} parent=0 // pred_check
    _
  $region11: #{forward.5} parent=0 // pred_check_branch
    %27 = sbr.rel (0) target = $region13
  $region12: #{forward.5} parent=0 // pred_region
    _
  $region13: #{forward.5} parent=0 // pred_fallthru
    _
  // Predicated region
  $region14: #{forward.5} parent=0 // pred_check
    _
  $region15: #{forward.5} parent=0 // pred_check_branch
    %29 = sbr.rel (0) target = $region17
  $region16: #{forward.5} parent=0 // pred_region
    _
  $region17: #{forward.5} parent=0 // pred_fallthru
    _
  // Predicated region
  $region18: #{forward.5} parent=0 // pred_check
    _
  $region19: #{forward.5} parent=0 // pred_check_branch
    %31 = sbr.rel (0) target = $region21
  $region20: #{forward.5} parent=0 // pred_region
    _
  $region21: #{forward.5} parent=0 // pred_fallthru
    _
  // Predicated region
  $region22: #{forward.5} parent=0 // pred_check
    _
  $region23: #{forward.5} parent=0 // pred_check_branch
    %33 = sbr.rel (0) target = $region25
  $region24: #{forward.5} parent=0 // pred_region
    _
  $region25: #{forward.5} parent=0 // pred_fallthru
    _
  // Predicated region
  $region26: #{forward.5} parent=0 // pred_check
    _
  $region27: #{forward.5} parent=0 // pred_check_branch
    %35 = sbr.rel (0) target = $region29
  $region28: #{forward.5} parent=0 // pred_region
    _
  $region29: #{forward.5} parent=0 // pred_fallthru
    _
  // Predicated region
  $region30: #{forward.5} parent=0 // pred_check
    _
  $region31: #{forward.5} parent=0 // pred_check_branch
    %37 = sbr.rel (0) target = $region33
  $region32: #{forward.5} parent=0 // pred_region
    _
  $region33: #{forward.5} parent=0 // pred_fallthru
    _
  // Predicated region
  $region34: #{forward.5} parent=0 // pred_check
    _
  $region35: #{forward.5} parent=0 // pred_check_branch
    %39 = sbr.rel (0) target = $region37
  $region36: #{forward.5} parent=0 // pred_region
    _
  $region37: #{forward.5} parent=0 // pred_fallthru
    _
  // Predicated region
  $region38: #{forward.5} parent=0 // pred_check
    _
  $region39: #{forward.5} parent=0 // pred_check_branch
    %41 = sbr.rel (0) target = $region41
  $region40: #{forward.5} parent=0 // pred_region
    _
  $region41: #{forward.5} parent=0 // pred_fallthru
    _
  // Predicated region
  $region42: #{forward.5} parent=0 // pred_check
    _
  $region43: #{forward.5} parent=0 // pred_check_branch
    %43 = sbr.rel (0) target = $region45
  $region44: #{forward.5} parent=0 // pred_region
    _
  $region45: #{forward.5} parent=0 // pred_fallthru
    _
  // Predicated region
  $region46: #{forward.5} parent=0 // pred_check
    _
  $region47: #{forward.5} parent=0 // pred_check_branch
    %45 = sbr.rel (0) target = $region49
  $region48: #{forward.5} parent=0 // pred_region
    _
  $region49: #{forward.5} parent=0 // pred_fallthru
    _
  // Predicated region
  $region50: #{forward.5} parent=0 // pred_check
    _
  $region51: #{forward.5} parent=0 // pred_check_branch
    %47 = sbr.rel (0) target = $region53
  $region52: #{forward.5} parent=0 // pred_region
    _
  $region53: #{forward.5} parent=0 // pred_fallthru
    _
  // Predicated region
  $region54: #{forward.5} parent=0 // pred_check
    _
  $region55: #{forward.5} parent=0 // pred_check_branch
    %49 = sbr.rel (0) target = $region57
  $region56: #{forward.5} parent=0 // pred_region
    _
  $region57: #{forward.5} parent=0 // pred_fallthru
    _
  // Predicated region
  $region58: #{forward.5} parent=0 // pred_check
    _
  $region59: #{forward.5} parent=0 // pred_check_branch
    %51 = sbr.rel (0) target = $region61
  $region60: #{forward.5} parent=0 // pred_region
    _
  $region61: #{forward.5} parent=0 // pred_fallthru
    _
  // Predicated region
  $region62: #{forward.5} parent=0 // pred_check
    _
  $region63: #{forward.5} parent=0 // pred_check_branch
    %53 = sbr.rel (0) target = $region65
  $region64: #{forward.5} parent=0 // pred_region
    _
  $region65: #{forward.5} parent=0 // pred_fallthru
    _
  // Predicated region
  $region66: #{forward.5} parent=0 // pred_check
    _
  $region67: #{forward.5} parent=0 // pred_check_branch
    %55 = sbr.rel (0) target = $region69
  $region68: #{forward.5} parent=0 // pred_region
    _
  $region69: #{forward.5} parent=0 // pred_fallthru
    _
  %v57 = vld [vmem:[%s0] sm:$0xff]
  %v58 = vld [vmem:[%s0 + $0x8] sm:$0xff]
  %v59 = vld [vmem:[%s0 + $0x10] sm:$0xff]
  %v60 = vld [vmem:[%s0 + $0x18] sm:$0xff]
  %v61 = vld [vmem:[%s0 + $0x20] sm:$0xff]
  %v62 = vld [vmem:[%s0 + $0x28] sm:$0xff]
  %v63 = vld [vmem:[%s0 + $0x30] sm:$0xff]
  %v64 = vld [vmem:[%s0 + $0x38] sm:$0xff]
  %v65 = vld [vmem:[%s0 + $0x40] sm:$0xff]
  %v66 = vld [vmem:[%s0 + $0x48] sm:$0xff]
  %v67 = vld [vmem:[%s0 + $0x50] sm:$0xff]
  %v68 = vld [vmem:[%s0 + $0x58] sm:$0xff]
  %v69 = vld [vmem:[%s0 + $0x60] sm:$0xf]
  %v70 = vld [vmem:[%s2] sm:$0xf]
  %v71 = vld [vmem:[%s2 + $0x4] sm:$0xf]
  %v72 = vld [vmem:[%s2 + $0x8] sm:$0xf]
  %v73 = vld [vmem:[%s2 + $0xc] sm:$0xf]
  %v74 = vld [vmem:[%s2 + $0x10] sm:$0xf]
  %v75 = vld [vmem:[%s2 + $0x14] sm:$0xf]
  %v76 = vld [vmem:[%s2 + $0x18] sm:$0xf]
  %v77 = vld [vmem:[%s2 + $0x1c] sm:$0xf]
  %v78 = vld [vmem:[%s2 + $0x20] sm:$0xf]
  %v79 = vld [vmem:[%s2 + $0x24] sm:$0xf]
  %v80 = vld [vmem:[%s2 + $0x28] sm:$0xf]
  %v81 = vld [vmem:[%s2 + $0x2c] sm:$0xf]
  %v82 = vld [vmem:[%s2 + $0x30] sm:$0xf]
  %v83 = vld [vmem:[%s2 + $0x34] sm:$0xf]
  %v84 = vld [vmem:[%s2 + $0x38] sm:$0xf]
  %v85 = vld [vmem:[%s2 + $0x3c] sm:$0xf]
  %v86 = vld [vmem:[%s2 + $0x40] sm:$0xf]
  %v87 = vld [vmem:[%s2 + $0x44] sm:$0xf]
  %v88 = vld [vmem:[%s2 + $0x48] sm:$0xf]
  %v89 = vld [vmem:[%s2 + $0x4c] sm:$0xf]
  %v90 = vld [vmem:[%s2 + $0x50] sm:$0xf]
  %v91 = vld [vmem:[%s2 + $0x54] sm:$0xf]
  %v92 = vld [vmem:[%s2 + $0x58] sm:$0xf]
  %v93 = vld [vmem:[%s2 + $0x5c] sm:$0xf]
  %v94 = vld [vmem:[%s2 + $0x60] sm:$0xf]
  %v95 = vld [vmem:[%s2 + $0x64] sm:$0xf]
  %v96 = vld [vmem:[%s2 + $0x68] sm:$0xf]
  %v97 = vld [vmem:[%s2 + $0x6c] sm:$0xf]
  %v98 = vld [vmem:[%s2 + $0x70] sm:$0xf]
  %v99 = vld [vmem:[%s2 + $0x74] sm:$0xf]
  %v100 = vld [vmem:[%s2 + $0x78] sm:$0xf]
  %v101 = vld [vmem:[%s2 + $0x7c] sm:$0xf]
  %v102 = vld [vmem:[%s2 + $0x80] sm:$0xf]
  %v103 = vld [vmem:[%s2 + $0x84] sm:$0xf]
  %v104 = vld [vmem:[%s2 + $0x88] sm:$0xf]
  %v105 = vld [vmem:[%s2 + $0x8c] sm:$0xf]
  %v106 = vld [vmem:[%s2 + $0x90] sm:$0xf]
  %v107 = vld [vmem:[%s2 + $0x94] sm:$0xf]
  %v108 = vld [vmem:[%s2 + $0x98] sm:$0xf]
  %v109 = vld [vmem:[%s2 + $0x9c] sm:$0xf]
  %v110 = vld [vmem:[%s2 + $0xa0] sm:$0xf]
  %v111 = vld [vmem:[%s2 + $0xa4] sm:$0xf]
  %v112 = vld [vmem:[%s2 + $0xa8] sm:$0xf]
  %v113 = vld [vmem:[%s2 + $0xac] sm:$0xf]
  %v114 = vld [vmem:[%s2 + $0xb0] sm:$0xf]
  %v115 = vld [vmem:[%s2 + $0xb4] sm:$0xf]
  %v116 = vld [vmem:[%s2 + $0xb8] sm:$0xf]
  %v117 = vld [vmem:[%s2 + $0xbc] sm:$0xf]
  %v118 = vld [vmem:[%s2 + $0xc0] sm:$0xf]
  %v119 = vld [vmem:[%s2 + $0xc4] sm:$0xf]
  %v120 = vld [vmem:[%s2 + $0xc8] sm:$0xf]
  %v121 = vld [vmem:[%s2 + $0xcc] sm:$0xf]
  %v122 = vld [vmem:[%s2 + $0xd0] sm:$0xf]
  %v123 = vld [vmem:[%s2 + $0xd4] sm:$0xf]
  %v124 = vld [vmem:[%s2 + $0xd8] sm:$0xf]
  %v125 = vld [vmem:[%s2 + $0xdc] sm:$0xf]
  %v126 = vld [vmem:[%s2 + $0xe0] sm:$0xf]
  %v127 = vld [vmem:[%s2 + $0xe4] sm:$0xf]
  %v128 = vld [vmem:[%s2 + $0xe8] sm:$0xf]
  %v129 = vld [vmem:[%s2 + $0xec] sm:$0xf]
  %v130 = vld [vmem:[%s2 + $0xf0] sm:$0xf]
  %v131 = vld [vmem:[%s2 + $0xf4] sm:$0xf]
  %v132 = vld [vmem:[%s2 + $0xf8] sm:$0xf]
  %v133 = vld [vmem:[%s2 + $0xfc] sm:$0xf]
  %v134 = vld [vmem:[%s2 + $0x100] sm:$0xf]
  %v135 = vld [vmem:[%s2 + $0x104] sm:$0xf]
  %v136 = vld [vmem:[%s2 + $0x108] sm:$0xf]
  %v137 = vld [vmem:[%s2 + $0x10c] sm:$0xf]
  %v138 = vld [vmem:[%s2 + $0x110] sm:$0xf]
  %v139 = vld [vmem:[%s2 + $0x114] sm:$0xf]
  %v140 = vld [vmem:[%s2 + $0x118] sm:$0xf]
  %v141 = vld [vmem:[%s2 + $0x11c] sm:$0xf]
  %v142 = vld [vmem:[%s2 + $0x120] sm:$0xf]
  %v143 = vld [vmem:[%s2 + $0x124] sm:$0xf]
  %v144 = vld [vmem:[%s2 + $0x128] sm:$0xf]
  %v145 = vld [vmem:[%s2 + $0x12c] sm:$0xf]
  %v146 = vld [vmem:[%s2 + $0x130] sm:$0xf]
  %v147 = vld [vmem:[%s2 + $0x134] sm:$0xf]
  %v148 = vld [vmem:[%s2 + $0x138] sm:$0xf]
  %v149 = vld [vmem:[%s2 + $0x13c] sm:$0xf]
  %v150 = vld [vmem:[%s2 + $0x140] sm:$0xf]
  %v151 = vld [vmem:[%s2 + $0x144] sm:$0xf]
  %v152 = vld [vmem:[%s2 + $0x148] sm:$0xf]
  %v153 = vld [vmem:[%s2 + $0x14c] sm:$0xf]
  %v154 = vld [vmem:[%s2 + $0x150] sm:$0xf]
  %v155 = vld [vmem:[%s2 + $0x154] sm:$0xf]
  %v156 = vld [vmem:[%s2 + $0x158] sm:$0xf]
  %v157 = vld [vmem:[%s2 + $0x15c] sm:$0xf]
  %v158 = vld [vmem:[%s2 + $0x160] sm:$0xf]
  %v159 = vld [vmem:[%s2 + $0x164] sm:$0xf]
  %v160 = vld [vmem:[%s2 + $0x168] sm:$0xf]
  %v161 = vld [vmem:[%s2 + $0x16c] sm:$0xf]
  %v162 = vld [vmem:[%s2 + $0x170] sm:$0xf]
  %v163 = vld [vmem:[%s2 + $0x174] sm:$0xf]
  %v164 = vld [vmem:[%s2 + $0x178] sm:$0xf]
  %v165 = vld [vmem:[%s2 + $0x17c] sm:$0xf]
  %v166 = vld [vmem:[%s2 + $0x180] sm:$0xf]
  %v167 = vld [vmem:[%s2 + $0x184] sm:$0xf]
  %v168 = vld [vmem:[%s2 + $0x188] sm:$0xf]
  %v169 = vld [vmem:[%s2 + $0x18c] sm:$0xf]
  %v170 = vld [vmem:[%s2 + $0x190] sm:$0xf]
  %v171 = vld [vmem:[%s2 + $0x194] sm:$0xf]
  %v172 = vld [vmem:[%s2 + $0x198] sm:$0xf]
  %v173 = vld [vmem:[%s2 + $0x19c] sm:$0xf]
  %v174 = vld [vmem:[%s2 + $0x1a0] sm:$0xf]
  %v175 = vld [vmem:[%s2 + $0x1a4] sm:$0xf]
  %v176 = vld [vmem:[%s2 + $0x1a8] sm:$0xf]
  %v177 = vld [vmem:[%s2 + $0x1ac] sm:$0xf]
  %v178 = vld [vmem:[%s2 + $0x1b0] sm:$0xf]
  %v179 = vld [vmem:[%s2 + $0x1b4] sm:$0xf]
  %v180 = vld [vmem:[%s2 + $0x1b8] sm:$0xf]
  %v181 = vld [vmem:[%s2 + $0x1bc] sm:$0xf]
  %v182 = vld [vmem:[%s2 + $0x1c0] sm:$0xf]
  %v183 = vld [vmem:[%s2 + $0x1c4] sm:$0xf]
  %v184 = vld [vmem:[%s2 + $0x1c8] sm:$0xf]
  %v185 = vld [vmem:[%s2 + $0x1cc] sm:$0xf]
  %v186 = vld [vmem:[%s2 + $0x1d0] sm:$0xf]
  %v187 = vld [vmem:[%s2 + $0x1d4] sm:$0xf]
  %v188 = vld [vmem:[%s2 + $0x1d8] sm:$0xf]
  %v189 = vld [vmem:[%s2 + $0x1dc] sm:$0xf]
  %v190 = vld [vmem:[%s2 + $0x1e0] sm:$0xf]
  %v191 = vld [vmem:[%s2 + $0x1e4] sm:$0xf]
  %v192 = vld [vmem:[%s2 + $0x1e8] sm:$0xf]
  %v193 = vld [vmem:[%s2 + $0x1ec] sm:$0xf]
  %v194 = vld [vmem:[%s2 + $0x1f0] sm:$0xf]
  %v195 = vld [vmem:[%s2 + $0x1f4] sm:$0xf]
  %v196 = vld [vmem:[%s2 + $0x1f8] sm:$0xf]
  %v197 = vld [vmem:[%s2 + $0x1fc] sm:$0xf]
  %v198 = vld [vmem:[%s2 + $0x200] sm:$0xf]
  %v199 = vld [vmem:[%s2 + $0x204] sm:$0xf]
  %v200 = vld [vmem:[%s2 + $0x208] sm:$0xf]
  %v201 = vld [vmem:[%s2 + $0x20c] sm:$0xf]
  %v202 = vld [vmem:[%s2 + $0x210] sm:$0xf]
  %v203 = vld [vmem:[%s2 + $0x214] sm:$0xf]
  %v204 = vld [vmem:[%s2 + $0x218] sm:$0xf]
  %v205 = vld [vmem:[%s2 + $0x21c] sm:$0xf]
  %v206 = vld [vmem:[%s2 + $0x220] sm:$0xf]
  %v207 = vld [vmem:[%s2 + $0x224] sm:$0xf]
  %v208 = vld [vmem:[%s2 + $0x228] sm:$0xf]
  %v209 = vld [vmem:[%s2 + $0x22c] sm:$0xf]
  %v210 = vld [vmem:[%s2 + $0x230] sm:$0xf]
  %v211 = vld [vmem:[%s2 + $0x234] sm:$0xf]
  %v212 = vld [vmem:[%s2 + $0x238] sm:$0xf]
  %v213 = vld [vmem:[%s2 + $0x23c] sm:$0xf]
  %v214 = vld [vmem:[%s2 + $0x240] sm:$0xf]
  %v215 = vld [vmem:[%s2 + $0x244] sm:$0xf]
  %v216 = vld [vmem:[%s2 + $0x248] sm:$0xf]
  %v217 = vld [vmem:[%s2 + $0x24c] sm:$0xf]
  %v218 = vld [vmem:[%s2 + $0x250] sm:$0xf]
  %v219 = vld [vmem:[%s2 + $0x254] sm:$0xf]
  %v220 = vld [vmem:[%s2 + $0x258] sm:$0xf]
  %v221 = vld [vmem:[%s2 + $0x25c] sm:$0xf]
  %v222 = vld [vmem:[%s2 + $0x260] sm:$0xf]
  %v223 = vld [vmem:[%s2 + $0x264] sm:$0xf]
  %v224 = vld [vmem:[%s2 + $0x268] sm:$0xf]
  %v225 = vld [vmem:[%s2 + $0x26c] sm:$0xf]
  %v226 = vld [vmem:[%s2 + $0x270] sm:$0xf]
  %v227 = vld [vmem:[%s2 + $0x274] sm:$0xf]
  %v228 = vld [vmem:[%s2 + $0x278] sm:$0xf]
  %v229 = vld [vmem:[%s2 + $0x27c] sm:$0xf]
  %v230 = vld [vmem:[%s2 + $0x280] sm:$0xf]
  %v231 = vld [vmem:[%s2 + $0x284] sm:$0xf]
  %v232 = vld [vmem:[%s2 + $0x288] sm:$0xf]
  %v233 = vld [vmem:[%s2 + $0x28c] sm:$0xf]
  %v234 = vld [vmem:[%s2 + $0x290] sm:$0xf]
  %v235 = vld [vmem:[%s2 + $0x294] sm:$0xf]
  %v236 = vld [vmem:[%s2 + $0x298] sm:$0xf]
  %v237 = vld [vmem:[%s2 + $0x29c] sm:$0xf]
  %v238 = vld [vmem:[%s2 + $0x2a0] sm:$0xf]
  %v239 = vld [vmem:[%s2 + $0x2a4] sm:$0xf]
  %v240 = vld [vmem:[%s2 + $0x2a8] sm:$0xf]
  %v241 = vld [vmem:[%s2 + $0x2ac] sm:$0xf]
  %v242 = vld [vmem:[%s2 + $0x2b0] sm:$0xf]
  %v243 = vld [vmem:[%s2 + $0x2b4] sm:$0xf]
  %v244 = vld [vmem:[%s2 + $0x2b8] sm:$0xf]
  %v245 = vld [vmem:[%s2 + $0x2bc] sm:$0xf]
  %v246 = vld [vmem:[%s2 + $0x2c0] sm:$0xf]
  %v247 = vld [vmem:[%s2 + $0x2c4] sm:$0xf]
  %v248 = vld [vmem:[%s2 + $0x2c8] sm:$0xf]
  %v249 = vld [vmem:[%s2 + $0x2cc] sm:$0xf]
  %v250 = vld [vmem:[%s2 + $0x2d0] sm:$0xf]
  %v251 = vld [vmem:[%s2 + $0x2d4] sm:$0xf]
  %v252 = vld [vmem:[%s2 + $0x2d8] sm:$0xf]
  %v253 = vld [vmem:[%s2 + $0x2dc] sm:$0xf]
  %v254 = vld [vmem:[%s2 + $0x2e0] sm:$0xf]
  %v255 = vld [vmem:[%s2 + $0x2e4] sm:$0xf]
  %v256 = vld [vmem:[%s2 + $0x2e8] sm:$0xf]
  %v257 = vld [vmem:[%s2 + $0x2ec] sm:$0xf]
  %v258 = vld [vmem:[%s2 + $0x2f0] sm:$0xf]
  %v259 = vld [vmem:[%s2 + $0x2f4] sm:$0xf]
  %v260 = vld [vmem:[%s2 + $0x2f8] sm:$0xf]
  %v261 = vld [vmem:[%s2 + $0x2fc] sm:$0xf]
  %v262 = vld [vmem:[%s2 + $0x300] sm:$0xf]
  %v263 = vld [vmem:[%s2 + $0x304] sm:$0xf]
  %v264 = vld [vmem:[%s2 + $0x308] sm:$0xf]
  %v265 = vld [vmem:[%s2 + $0x30c] sm:$0xf]
  %v266 = vld [vmem:[%s2 + $0x310] sm:$0xf]
  %v267 = vld [vmem:[%s2 + $0x314] sm:$0xf]
  %v268 = vld [vmem:[%s2 + $0x318] sm:$0xf]
  %v269 = vld [vmem:[%s2 + $0x31c] sm:$0xf]
  %v270 = vld [vmem:[%s2 + $0x320] sm:$0xf]
  %v271 = vld [vmem:[%s2 + $0x324] sm:$0xf]
  %v272 = vld [vmem:[%s2 + $0x328] sm:$0xf]
  %v273 = vld [vmem:[%s2 + $0x32c] sm:$0xf]
  %v274 = vld [vmem:[%s2 + $0x330] sm:$0xf]
  %v275 = vld [vmem:[%s2 + $0x334] sm:$0xf]
  %v276 = vld [vmem:[%s2 + $0x338] sm:$0xf]
  %v277 = vld [vmem:[%s2 + $0x33c] sm:$0xf]
  %v278 = vld [vmem:[%s2 + $0x340] sm:$0xf]
  %v279 = vld [vmem:[%s2 + $0x344] sm:$0xf]
  %v280 = vld [vmem:[%s2 + $0x348] sm:$0xf]
  %v281 = vld [vmem:[%s2 + $0x34c] sm:$0xf]
  %v282 = vld [vmem:[%s2 + $0x350] sm:$0xf]
  %v283 = vld [vmem:[%s2 + $0x354] sm:$0xf]
  %v284 = vld [vmem:[%s2 + $0x358] sm:$0xf]
  %v285 = vld [vmem:[%s2 + $0x35c] sm:$0xf]
  %v286 = vld [vmem:[%s2 + $0x360] sm:$0xf]
  %v287 = vld [vmem:[%s2 + $0x364] sm:$0xf]
  %v288 = vld [vmem:[%s2 + $0x368] sm:$0xf]
  %v289 = vld [vmem:[%s2 + $0x36c] sm:$0xf]
  %v290 = vld [vmem:[%s2 + $0x370] sm:$0xf]
  %v291 = vld [vmem:[%s2 + $0x374] sm:$0xf]
  %v292 = vld [vmem:[%s2 + $0x378] sm:$0xf]
  %v293 = vld [vmem:[%s2 + $0x37c] sm:$0xf]
  %v294 = vld [vmem:[%s2 + $0x380] sm:$0xf]
  %v295 = vld [vmem:[%s2 + $0x384] sm:$0xf]
  %v296 = vld [vmem:[%s2 + $0x388] sm:$0xf]
  %v297 = vld [vmem:[%s2 + $0x38c] sm:$0xf]
  %v298 = vld [vmem:[%s2 + $0x390] sm:$0xf]
  %v299 = vld [vmem:[%s2 + $0x394] sm:$0xf]
  %v300 = vld [vmem:[%s2 + $0x398] sm:$0xf]
  %v301 = vld [vmem:[%s2 + $0x39c] sm:$0xf]
  %v302 = vld [vmem:[%s2 + $0x3a0] sm:$0xf]
  %v303 = vld [vmem:[%s2 + $0x3a4] sm:$0xf]
  %v304 = vld [vmem:[%s2 + $0x3a8] sm:$0xf]
  %v305 = vld [vmem:[%s2 + $0x3ac] sm:$0xf]
  %v306 = vld [vmem:[%s2 + $0x3b0] sm:$0xf]
  %v307 = vld [vmem:[%s2 + $0x3b4] sm:$0xf]
  %v308 = vld [vmem:[%s2 + $0x3b8] sm:$0xf]
  %v309 = vld [vmem:[%s2 + $0x3bc] sm:$0xf]
  %v310 = vld [vmem:[%s2 + $0x3c0] sm:$0xf]
  %v311 = vld [vmem:[%s2 + $0x3c4] sm:$0xf]
  %v312 = vld [vmem:[%s2 + $0x3c8] sm:$0xf]
  %v313 = vld [vmem:[%s2 + $0x3cc] sm:$0xf]
  %v314 = vld [vmem:[%s2 + $0x3d0] sm:$0xf]
  %v315 = vld [vmem:[%s2 + $0x3d4] sm:$0xf]
  %v316 = vld [vmem:[%s2 + $0x3d8] sm:$0xf]
  %v317 = vld [vmem:[%s2 + $0x3dc] sm:$0xf]
  %v318 = vld [vmem:[%s2 + $0x3e0] sm:$0xf]
  %v319 = vld [vmem:[%s2 + $0x3e4] sm:$0xf]
  %v320 = vld [vmem:[%s2 + $0x3e8] sm:$0xf]
  %v321 = vld [vmem:[%s2 + $0x3ec] sm:$0xf]
  %v322 = vld [vmem:[%s2 + $0x3f0] sm:$0xf]
  %v323 = vld [vmem:[%s2 + $0x3f4] sm:$0xf]
  %v324 = vld [vmem:[%s2 + $0x3f8] sm:$0xf]
  %v325 = vld [vmem:[%s2 + $0x3fc] sm:$0xf]
  %v326 = vld [vmem:[%s2 + $0x400] sm:$0xf]
  %v327 = vld [vmem:[%s2 + $0x404] sm:$0xf]
  %v328 = vld [vmem:[%s2 + $0x408] sm:$0xf]
  %v329 = vld [vmem:[%s2 + $0x40c] sm:$0xf]
  %v330 = vld [vmem:[%s2 + $0x410] sm:$0xf]
  %v331 = vld [vmem:[%s2 + $0x414] sm:$0xf]
  %v332 = vld [vmem:[%s2 + $0x418] sm:$0xf]
  %v333 = vld [vmem:[%s2 + $0x41c] sm:$0xf]
  %v334 = vld [vmem:[%s2 + $0x420] sm:$0xf]
  %v335 = vld [vmem:[%s2 + $0x424] sm:$0xf]
  %v336 = vld [vmem:[%s2 + $0x428] sm:$0xf]
  %v337 = vld [vmem:[%s2 + $0x42c] sm:$0xf]
  %v338 = vld [vmem:[%s2 + $0x430] sm:$0xf]
  %v339 = vld [vmem:[%s2 + $0x434] sm:$0xf]
  %v340 = vld [vmem:[%s2 + $0x438] sm:$0xf]
  %v341 = vld [vmem:[%s2 + $0x43c] sm:$0xf]
  %v342 = vld [vmem:[%s2 + $0x440] sm:$0xf]
  %v343 = vld [vmem:[%s2 + $0x444] sm:$0xf]
  %v344 = vld [vmem:[%s2 + $0x448] sm:$0xf]
  %v345 = vld [vmem:[%s2 + $0x44c] sm:$0xf]
  %v346 = vld [vmem:[%s2 + $0x450] sm:$0xf]
  %v347 = vld [vmem:[%s2 + $0x454] sm:$0xf]
  %v348 = vld [vmem:[%s2 + $0x458] sm:$0xf]
  %v349 = vld [vmem:[%s2 + $0x45c] sm:$0xf]
  %v350 = vld [vmem:[%s2 + $0x460] sm:$0xf]
  %v351 = vld [vmem:[%s2 + $0x464] sm:$0xf]
  %v352 = vld [vmem:[%s2 + $0x468] sm:$0xf]
  %v353 = vld [vmem:[%s2 + $0x46c] sm:$0xf]
  %v354 = vld [vmem:[%s2 + $0x470] sm:$0xf]
  %v355 = vld [vmem:[%s2 + $0x474] sm:$0xf]
  %v356 = vld [vmem:[%s2 + $0x478] sm:$0xf]
  %v357 = vld [vmem:[%s2 + $0x47c] sm:$0xf]
  %v358 = vld [vmem:[%s2 + $0x480] sm:$0xf]
  %v359 = vld [vmem:[%s2 + $0x484] sm:$0xf]
  %v360 = vld [vmem:[%s2 + $0x488] sm:$0xf]
  %v361 = vld [vmem:[%s2 + $0x48c] sm:$0xf]
  %v362 = vld [vmem:[%s2 + $0x490] sm:$0xf]
  %v363 = vld [vmem:[%s2 + $0x494] sm:$0xf]
  %v364 = vld [vmem:[%s2 + $0x498] sm:$0xf]
  %v365 = vld [vmem:[%s2 + $0x49c] sm:$0xf]
  %v366 = vld [vmem:[%s2 + $0x4a0] sm:$0xf]
  %v367 = vld [vmem:[%s2 + $0x4a4] sm:$0xf]
  %v368 = vld [vmem:[%s2 + $0x4a8] sm:$0xf]
  %v369 = vld [vmem:[%s2 + $0x4ac] sm:$0xf]
  %v370 = vld [vmem:[%s2 + $0x4b0] sm:$0xf]
  %v371 = vld [vmem:[%s2 + $0x4b4] sm:$0xf]
  %v372 = vld [vmem:[%s2 + $0x4b8] sm:$0xf]
  %v373 = vld [vmem:[%s2 + $0x4bc] sm:$0xf]
  %v374 = vld [vmem:[%s2 + $0x4c0] sm:$0xf]
  %v375 = vld [vmem:[%s2 + $0x4c4] sm:$0xf]
  %v376 = vld [vmem:[%s2 + $0x4c8] sm:$0xf]
  %v377 = vld [vmem:[%s2 + $0x4cc] sm:$0xf]
  %v378 = vld [vmem:[%s2 + $0x4d0] sm:$0xf]
  %v379 = vld [vmem:[%s2 + $0x4d4] sm:$0xf]
  %v380 = vld [vmem:[%s2 + $0x4d8] sm:$0xf]
  %v381 = vld [vmem:[%s2 + $0x4dc] sm:$0xf]
  %v382 = vld [vmem:[%s2 + $0x4e0] sm:$0xf]
  %v383 = vld [vmem:[%s2 + $0x4e4] sm:$0xf]
  %v384 = vld [vmem:[%s2 + $0x4e8] sm:$0xf]
  %v385 = vld [vmem:[%s2 + $0x4ec] sm:$0xf]
  %v386 = vld [vmem:[%s2 + $0x4f0] sm:$0xf]
  %v387 = vld [vmem:[%s2 + $0x4f4] sm:$0xf]
  %v388 = vld [vmem:[%s2 + $0x4f8] sm:$0xf]
  %v389 = vld [vmem:[%s2 + $0x4fc] sm:$0xf]
  %v390 = vld [vmem:[%s2 + $0x500] sm:$0xf]
  %v391 = vld [vmem:[%s2 + $0x504] sm:$0xf]
  %v392 = vld [vmem:[%s2 + $0x508] sm:$0xf]
  %v393 = vld [vmem:[%s2 + $0x50c] sm:$0xf]
  %v394 = vld [vmem:[%s2 + $0x510] sm:$0xf]
  %v395 = vld [vmem:[%s2 + $0x514] sm:$0xf]
  %v396 = vld [vmem:[%s2 + $0x518] sm:$0xf]
  %v397 = vld [vmem:[%s2 + $0x51c] sm:$0xf]
  %v398 = vld [vmem:[%s2 + $0x520] sm:$0xf]
  %v399 = vld [vmem:[%s2 + $0x524] sm:$0xf]
  %v400 = vld [vmem:[%s2 + $0x528] sm:$0xf]
  %v401 = vld [vmem:[%s2 + $0x52c] sm:$0xf]
  %v402 = vld [vmem:[%s2 + $0x530] sm:$0xf]
  %v403 = vld [vmem:[%s2 + $0x534] sm:$0xf]
  %v404 = vld [vmem:[%s2 + $0x538] sm:$0xf]
  %v405 = vld [vmem:[%s2 + $0x53c] sm:$0xf]
  %v406 = vld [vmem:[%s2 + $0x540] sm:$0xf]
  %v407 = vld [vmem:[%s2 + $0x544] sm:$0xf]
  %v408 = vld [vmem:[%s2 + $0x548] sm:$0xf]
  %v409 = vld [vmem:[%s2 + $0x54c] sm:$0xf]
  %v410 = vld [vmem:[%s2 + $0x550] sm:$0xf]
  %v411 = vld [vmem:[%s2 + $0x554] sm:$0xf]
  %v412 = vld [vmem:[%s2 + $0x558] sm:$0xf]
  %v413 = vld [vmem:[%s2 + $0x55c] sm:$0xf]
  %v414 = vld [vmem:[%s2 + $0x560] sm:$0xf]
  %v415 = vld [vmem:[%s2 + $0x564] sm:$0xf]
  %v416 = vld [vmem:[%s2 + $0x568] sm:$0xf]
  %v417 = vld [vmem:[%s2 + $0x56c] sm:$0xf]
  %v418 = vld [vmem:[%s2 + $0x570] sm:$0xf]
  %v419 = vld [vmem:[%s2 + $0x574] sm:$0xf]
  %v420 = vld [vmem:[%s2 + $0x578] sm:$0xf]
  %v421 = vld [vmem:[%s2 + $0x57c] sm:$0xf]
  %v422 = vld [vmem:[%s2 + $0x580] sm:$0xf]
  %v423 = vld [vmem:[%s2 + $0x584] sm:$0xf]
  %v424 = vld [vmem:[%s2 + $0x588] sm:$0xf]
  %v425 = vld [vmem:[%s2 + $0x58c] sm:$0xf]
  %v426 = vld [vmem:[%s2 + $0x590] sm:$0xf]
  %v427 = vld [vmem:[%s2 + $0x594] sm:$0xf]
  %v428 = vld [vmem:[%s2 + $0x598] sm:$0xf]
  %v429 = vld [vmem:[%s2 + $0x59c] sm:$0xf]
  %v430 = vld [vmem:[%s2 + $0x5a0] sm:$0xf]
  %v431 = vld [vmem:[%s2 + $0x5a4] sm:$0xf]
  %v432 = vld [vmem:[%s2 + $0x5a8] sm:$0xf]
  %v433 = vld [vmem:[%s2 + $0x5ac] sm:$0xf]
  %v434 = vld [vmem:[%s2 + $0x5b0] sm:$0xf]
  %v435 = vld [vmem:[%s2 + $0x5b4] sm:$0xf]
  %v436 = vld [vmem:[%s2 + $0x5b8] sm:$0xf]
  %v437 = vld [vmem:[%s2 + $0x5bc] sm:$0xf]
  %v438 = vld [vmem:[%s2 + $0x5c0] sm:$0xf]
  %v439 = vld [vmem:[%s2 + $0x5c4] sm:$0xf]
  %v440 = vld [vmem:[%s2 + $0x5c8] sm:$0xf]
  %v441 = vld [vmem:[%s2 + $0x5cc] sm:$0xf]
  %v442 = vld [vmem:[%s2 + $0x5d0] sm:$0xf]
  %v443 = vld [vmem:[%s2 + $0x5d4] sm:$0xf]
  %v444 = vld [vmem:[%s2 + $0x5d8] sm:$0xf]
  %v445 = vld [vmem:[%s2 + $0x5dc] sm:$0xf]
  %v446 = vld [vmem:[%s2 + $0x5e0] sm:$0xf]
  %v447 = vld [vmem:[%s2 + $0x5e4] sm:$0xf]
  %v448 = vld [vmem:[%s2 + $0x5e8] sm:$0xf]
  %v449 = vld [vmem:[%s2 + $0x5ec] sm:$0xf]
  %v450 = vld [vmem:[%s2 + $0x5f0] sm:$0xf]
  %v451 = vld [vmem:[%s2 + $0x5f4] sm:$0xf]
  %v452 = vld [vmem:[%s2 + $0x5f8] sm:$0xf]
  %v453 = vld [vmem:[%s2 + $0x5fc] sm:$0xf]
  %v454 = vld [vmem:[%s2 + $0x600] sm:$0xf]
  %v455 = vld [vmem:[%s2 + $0x604] sm:$0xf]
  %v456 = vld [vmem:[%s2 + $0x608] sm:$0xf]
  %v457 = vld [vmem:[%s2 + $0x60c] sm:$0xf]
  %v458 = vld [vmem:[%s2 + $0x610] sm:$0xf]
  %v459 = vld [vmem:[%s2 + $0x614] sm:$0xf]
  %v460 = vld [vmem:[%s2 + $0x618] sm:$0xf]
  %v461 = vld [vmem:[%s2 + $0x61c] sm:$0xf]
  %v462 = vld [vmem:[%s2 + $0x620] sm:$0xf]
  %v463 = vld [vmem:[%s2 + $0x624] sm:$0xf]
  %v464 = vld [vmem:[%s2 + $0x628] sm:$0xf]
  %v465 = vld [vmem:[%s2 + $0x62c] sm:$0xf]
  %v466 = vld [vmem:[%s2 + $0x630] sm:$0xf]
  %v467 = vld [vmem:[%s2 + $0x634] sm:$0xf]
  %v468 = vld [vmem:[%s2 + $0x638] sm:$0xf]
  %v469 = vld [vmem:[%s2 + $0x63c] sm:$0xf]
  %v470 = vld [vmem:[%s3] sm:$0x1]
  %v472 = vlaneseq
  %v473 = vshrl.u32 %v472, 7
  %v474 = vsub.s32 0, %v473
  %v475 = vrot.slane %v470, %v474
  %v490 = vunpack.c.l.b16 %v57
  %v491 = vunpack.c.h.b16 %v57
  %v492 = vunpack.c.l.b16 %v58
  %v493 = vunpack.c.h.b16 %v58
  %v494 = vunpack.c.l.b16 %v59
  %v495 = vunpack.c.h.b16 %v59
  %v496 = vunpack.c.l.b16 %v60
  %v497 = vunpack.c.h.b16 %v60
  %v498 = vunpack.c.l.b16 %v61
  %v499 = vunpack.c.h.b16 %v61
  %v500 = vunpack.c.l.b16 %v62
  %v501 = vunpack.c.h.b16 %v62
  %v502 = vunpack.c.l.b16 %v63
  %v503 = vunpack.c.h.b16 %v63
  %v504 = vunpack.c.l.b16 %v64
  %v505 = vunpack.c.h.b16 %v64
  %v506 = vunpack.c.l.b16 %v65
  %v507 = vunpack.c.h.b16 %v65
  %v508 = vunpack.c.l.b16 %v66
  %v509 = vunpack.c.h.b16 %v66
  %v510 = vunpack.c.l.b16 %v67
  %v511 = vunpack.c.h.b16 %v67
  %v512 = vunpack.c.l.b16 %v68
  %v513 = vunpack.c.h.b16 %v68
  %v514 = vunpack.c.l.b16 %v69
  %v515 = vpack.c.b16 %v490, %v490
  %v516 = vpack.c.b16 %v491, %v491
  %v517 = vpack.c.b16 %v492, %v492
  %v518 = vpack.c.b16 %v493, %v493
  %v519 = vpack.c.b16 %v494, %v494
  %v520 = vpack.c.b16 %v495, %v495
  %v521 = vpack.c.b16 %v496, %v496
  %v522 = vpack.c.b16 %v497, %v497
  %v523 = vpack.c.b16 %v498, %v498
  %v524 = vpack.c.b16 %v499, %v499
  %v525 = vpack.c.b16 %v500, %v500
  %v526 = vpack.c.b16 %v501, %v501
  %v527 = vpack.c.b16 %v502, %v502
  %v528 = vpack.c.b16 %v503, %v503
  %v529 = vpack.c.b16 %v504, %v504
  %v530 = vpack.c.b16 %v505, %v505
  %v531 = vpack.c.b16 %v506, %v506
  %v532 = vpack.c.b16 %v507, %v507
  %v533 = vpack.c.b16 %v508, %v508
  %v534 = vpack.c.b16 %v509, %v509
  %v535 = vpack.c.b16 %v510, %v510
  %v536 = vpack.c.b16 %v511, %v511
  %v537 = vpack.c.b16 %v512, %v512
  %v538 = vpack.c.b16 %v513, %v513
  %v539 = vpack.c.b16 %v514, %v514
  %v965 = vunpack.c.l.b16 %v70
  %v966 = vunpack.c.l.b16 %v71
  %v967 = vunpack.c.l.b16 %v72
  %v968 = vunpack.c.l.b16 %v73
  %v969 = vunpack.c.l.b16 %v74
  %v970 = vunpack.c.l.b16 %v75
  %v971 = vunpack.c.l.b16 %v76
  %v972 = vunpack.c.l.b16 %v77
  %v973 = vunpack.c.l.b16 %v78
  %v974 = vunpack.c.l.b16 %v79
  %v975 = vunpack.c.l.b16 %v80
  %v976 = vunpack.c.l.b16 %v81
  %v977 = vunpack.c.l.b16 %v82
  %v978 = vunpack.c.l.b16 %v83
  %v979 = vunpack.c.l.b16 %v84
  %v980 = vunpack.c.l.b16 %v85
  %v981 = vunpack.c.l.b16 %v86
  %v982 = vunpack.c.l.b16 %v87
  %v983 = vunpack.c.l.b16 %v88
  %v984 = vunpack.c.l.b16 %v89
  %v985 = vunpack.c.l.b16 %v90
  %v986 = vunpack.c.l.b16 %v91
  %v987 = vunpack.c.l.b16 %v92
  %v988 = vunpack.c.l.b16 %v93
  %v989 = vunpack.c.l.b16 %v94
  %v990 = vunpack.c.l.b16 %v95
  %v991 = vunpack.c.l.b16 %v96
  %v992 = vunpack.c.l.b16 %v97
  %v993 = vunpack.c.l.b16 %v98
  %v994 = vunpack.c.l.b16 %v99
  %v995 = vunpack.c.l.b16 %v100
  %v996 = vunpack.c.l.b16 %v101
  %v997 = vunpack.c.l.b16 %v102
  %v998 = vunpack.c.l.b16 %v103
  %v999 = vunpack.c.l.b16 %v104
  %v1000 = vunpack.c.l.b16 %v105
  %v1001 = vunpack.c.l.b16 %v106
  %v1002 = vunpack.c.l.b16 %v107
  %v1003 = vunpack.c.l.b16 %v108
  %v1004 = vunpack.c.l.b16 %v109
  %v1005 = vunpack.c.l.b16 %v110
  %v1006 = vunpack.c.l.b16 %v111
  %v1007 = vunpack.c.l.b16 %v112
  %v1008 = vunpack.c.l.b16 %v113
  %v1009 = vunpack.c.l.b16 %v114
  %v1010 = vunpack.c.l.b16 %v115
  %v1011 = vunpack.c.l.b16 %v116
  %v1012 = vunpack.c.l.b16 %v117
  %v1013 = vunpack.c.l.b16 %v118
  %v1014 = vunpack.c.l.b16 %v119
  %v1015 = vunpack.c.l.b16 %v120
  %v1016 = vunpack.c.l.b16 %v121
  %v1017 = vunpack.c.l.b16 %v122
  %v1018 = vunpack.c.l.b16 %v123
  %v1019 = vunpack.c.l.b16 %v124
  %v1020 = vunpack.c.l.b16 %v125
  %v1021 = vunpack.c.l.b16 %v126
  %v1022 = vunpack.c.l.b16 %v127
  %v1023 = vunpack.c.l.b16 %v128
  %v1024 = vunpack.c.l.b16 %v129
  %v1025 = vunpack.c.l.b16 %v130
  %v1026 = vunpack.c.l.b16 %v131
  %v1027 = vunpack.c.l.b16 %v132
  %v1028 = vunpack.c.l.b16 %v133
  %v1029 = vunpack.c.l.b16 %v134
  %v1030 = vunpack.c.l.b16 %v135
  %v1031 = vunpack.c.l.b16 %v136
  %v1032 = vunpack.c.l.b16 %v137
  %v1033 = vunpack.c.l.b16 %v138
  %v1034 = vunpack.c.l.b16 %v139
  %v1035 = vunpack.c.l.b16 %v140
  %v1036 = vunpack.c.l.b16 %v141
  %v1037 = vunpack.c.l.b16 %v142
  %v1038 = vunpack.c.l.b16 %v143
  %v1039 = vunpack.c.l.b16 %v144
  %v1040 = vunpack.c.l.b16 %v145
  %v1041 = vunpack.c.l.b16 %v146
  %v1042 = vunpack.c.l.b16 %v147
  %v1043 = vunpack.c.l.b16 %v148
  %v1044 = vunpack.c.l.b16 %v149
  %v1045 = vunpack.c.l.b16 %v150
  %v1046 = vunpack.c.l.b16 %v151
  %v1047 = vunpack.c.l.b16 %v152
  %v1048 = vunpack.c.l.b16 %v153
  %v1049 = vunpack.c.l.b16 %v154
  %v1050 = vunpack.c.l.b16 %v155
  %v1051 = vunpack.c.l.b16 %v156
  %v1052 = vunpack.c.l.b16 %v157
  %v1053 = vunpack.c.l.b16 %v158
  %v1054 = vunpack.c.l.b16 %v159
  %v1055 = vunpack.c.l.b16 %v160
  %v1056 = vunpack.c.l.b16 %v161
  %v1057 = vunpack.c.l.b16 %v162
  %v1058 = vunpack.c.l.b16 %v163
  %v1059 = vunpack.c.l.b16 %v164
  %v1060 = vunpack.c.l.b16 %v165
  %v1061 = vunpack.c.l.b16 %v166
  %v1062 = vunpack.c.l.b16 %v167
  %v1063 = vunpack.c.l.b16 %v168
  %v1064 = vunpack.c.l.b16 %v169
  %v1065 = vunpack.c.l.b16 %v170
  %v1066 = vunpack.c.l.b16 %v171
  %v1067 = vunpack.c.l.b16 %v172
  %v1068 = vunpack.c.l.b16 %v173
  %v1069 = vunpack.c.l.b16 %v174
  %v1070 = vunpack.c.l.b16 %v175
  %v1071 = vunpack.c.l.b16 %v176
  %v1072 = vunpack.c.l.b16 %v177
  %v1073 = vunpack.c.l.b16 %v178
  %v1074 = vunpack.c.l.b16 %v179
  %v1075 = vunpack.c.l.b16 %v180
  %v1076 = vunpack.c.l.b16 %v181
  %v1077 = vunpack.c.l.b16 %v182
  %v1078 = vunpack.c.l.b16 %v183
  %v1079 = vunpack.c.l.b16 %v184
  %v1080 = vunpack.c.l.b16 %v185
  %v1081 = vunpack.c.l.b16 %v186
  %v1082 = vunpack.c.l.b16 %v187
  %v1083 = vunpack.c.l.b16 %v188
  %v1084 = vunpack.c.l.b16 %v189
  %v1085 = vunpack.c.l.b16 %v190
  %v1086 = vunpack.c.l.b16 %v191
  %v1087 = vunpack.c.l.b16 %v192
  %v1088 = vunpack.c.l.b16 %v193
  %v1089 = vunpack.c.l.b16 %v194
  %v1090 = vunpack.c.l.b16 %v195
  %v1091 = vunpack.c.l.b16 %v196
  %v1092 = vunpack.c.l.b16 %v197
  %v1093 = vunpack.c.l.b16 %v198
  %v1094 = vunpack.c.l.b16 %v199
  %v1095 = vunpack.c.l.b16 %v200
  %v1096 = vunpack.c.l.b16 %v201
  %v1097 = vunpack.c.l.b16 %v202
  %v1098 = vunpack.c.l.b16 %v203
  %v1099 = vunpack.c.l.b16 %v204
  %v1100 = vunpack.c.l.b16 %v205
  %v1101 = vunpack.c.l.b16 %v206
  %v1102 = vunpack.c.l.b16 %v207
  %v1103 = vunpack.c.l.b16 %v208
  %v1104 = vunpack.c.l.b16 %v209
  %v1105 = vunpack.c.l.b16 %v210
  %v1106 = vunpack.c.l.b16 %v211
  %v1107 = vunpack.c.l.b16 %v212
  %v1108 = vunpack.c.l.b16 %v213
  %v1109 = vunpack.c.l.b16 %v214
  %v1110 = vunpack.c.l.b16 %v215
  %v1111 = vunpack.c.l.b16 %v216
  %v1112 = vunpack.c.l.b16 %v217
  %v1113 = vunpack.c.l.b16 %v218
  %v1114 = vunpack.c.l.b16 %v219
  %v1115 = vunpack.c.l.b16 %v220
  %v1116 = vunpack.c.l.b16 %v221
  %v1117 = vunpack.c.l.b16 %v222
  %v1118 = vunpack.c.l.b16 %v223
  %v1119 = vunpack.c.l.b16 %v224
  %v1120 = vunpack.c.l.b16 %v225
  %v1121 = vunpack.c.l.b16 %v226
  %v1122 = vunpack.c.l.b16 %v227
  %v1123 = vunpack.c.l.b16 %v228
  %v1124 = vunpack.c.l.b16 %v229
  %v1125 = vunpack.c.l.b16 %v230
  %v1126 = vunpack.c.l.b16 %v231
  %v1127 = vunpack.c.l.b16 %v232
  %v1128 = vunpack.c.l.b16 %v233
  %v1129 = vunpack.c.l.b16 %v234
  %v1130 = vunpack.c.l.b16 %v235
  %v1131 = vunpack.c.l.b16 %v236
  %v1132 = vunpack.c.l.b16 %v237
  %v1133 = vunpack.c.l.b16 %v238
  %v1134 = vunpack.c.l.b16 %v239
  %v1135 = vunpack.c.l.b16 %v240
  %v1136 = vunpack.c.l.b16 %v241
  %v1137 = vunpack.c.l.b16 %v242
  %v1138 = vunpack.c.l.b16 %v243
  %v1139 = vunpack.c.l.b16 %v244
  %v1140 = vunpack.c.l.b16 %v245
  %v1141 = vunpack.c.l.b16 %v246
  %v1142 = vunpack.c.l.b16 %v247
  %v1143 = vunpack.c.l.b16 %v248
  %v1144 = vunpack.c.l.b16 %v249
  %v1145 = vunpack.c.l.b16 %v250
  %v1146 = vunpack.c.l.b16 %v251
  %v1147 = vunpack.c.l.b16 %v252
  %v1148 = vunpack.c.l.b16 %v253
  %v1149 = vunpack.c.l.b16 %v254
  %v1150 = vunpack.c.l.b16 %v255
  %v1151 = vunpack.c.l.b16 %v256
  %v1152 = vunpack.c.l.b16 %v257
  %v1153 = vunpack.c.l.b16 %v258
  %v1154 = vunpack.c.l.b16 %v259
  %v1155 = vunpack.c.l.b16 %v260
  %v1156 = vunpack.c.l.b16 %v261
  %v1157 = vunpack.c.l.b16 %v262
  %v1158 = vunpack.c.l.b16 %v263
  %v1159 = vunpack.c.l.b16 %v264
  %v1160 = vunpack.c.l.b16 %v265
  %v1161 = vunpack.c.l.b16 %v266
  %v1162 = vunpack.c.l.b16 %v267
  %v1163 = vunpack.c.l.b16 %v268
  %v1164 = vunpack.c.l.b16 %v269
  %v1165 = vunpack.c.l.b16 %v270
  %v1166 = vunpack.c.l.b16 %v271
  %v1167 = vunpack.c.l.b16 %v272
  %v1168 = vunpack.c.l.b16 %v273
  %v1169 = vunpack.c.l.b16 %v274
  %v1170 = vunpack.c.l.b16 %v275
  %v1171 = vunpack.c.l.b16 %v276
  %v1172 = vunpack.c.l.b16 %v277
  %v1173 = vunpack.c.l.b16 %v278
  %v1174 = vunpack.c.l.b16 %v279
  %v1175 = vunpack.c.l.b16 %v280
  %v1176 = vunpack.c.l.b16 %v281
  %v1177 = vunpack.c.l.b16 %v282
  %v1178 = vunpack.c.l.b16 %v283
  %v1179 = vunpack.c.l.b16 %v284
  %v1180 = vunpack.c.l.b16 %v285
  %v1181 = vunpack.c.l.b16 %v286
  %v1182 = vunpack.c.l.b16 %v287
  %v1183 = vunpack.c.l.b16 %v288
  %v1184 = vunpack.c.l.b16 %v289
  %v1185 = vunpack.c.l.b16 %v290
  %v1186 = vunpack.c.l.b16 %v291
  %v1187 = vunpack.c.l.b16 %v292
  %v1188 = vunpack.c.l.b16 %v293
  %v1189 = vunpack.c.l.b16 %v294
  %v1190 = vunpack.c.l.b16 %v295
  %v1191 = vunpack.c.l.b16 %v296
  %v1192 = vunpack.c.l.b16 %v297
  %v1193 = vunpack.c.l.b16 %v298
  %v1194 = vunpack.c.l.b16 %v299
  %v1195 = vunpack.c.l.b16 %v300
  %v1196 = vunpack.c.l.b16 %v301
  %v1197 = vunpack.c.l.b16 %v302
  %v1198 = vunpack.c.l.b16 %v303
  %v1199 = vunpack.c.l.b16 %v304
  %v1200 = vunpack.c.l.b16 %v305
  %v1201 = vunpack.c.l.b16 %v306
  %v1202 = vunpack.c.l.b16 %v307
  %v1203 = vunpack.c.l.b16 %v308
  %v1204 = vunpack.c.l.b16 %v309
  %v1205 = vunpack.c.l.b16 %v310
  %v1206 = vunpack.c.l.b16 %v311
  %v1207 = vunpack.c.l.b16 %v312
  %v1208 = vunpack.c.l.b16 %v313
  %v1209 = vunpack.c.l.b16 %v314
  %v1210 = vunpack.c.l.b16 %v315
  %v1211 = vunpack.c.l.b16 %v316
  %v1212 = vunpack.c.l.b16 %v317
  %v1213 = vunpack.c.l.b16 %v318
  %v1214 = vunpack.c.l.b16 %v319
  %v1215 = vunpack.c.l.b16 %v320
  %v1216 = vunpack.c.l.b16 %v321
  %v1217 = vunpack.c.l.b16 %v322
  %v1218 = vunpack.c.l.b16 %v323
  %v1219 = vunpack.c.l.b16 %v324
  %v1220 = vunpack.c.l.b16 %v325
  %v1221 = vunpack.c.l.b16 %v326
  %v1222 = vunpack.c.l.b16 %v327
  %v1223 = vunpack.c.l.b16 %v328
  %v1224 = vunpack.c.l.b16 %v329
  %v1225 = vunpack.c.l.b16 %v330
  %v1226 = vunpack.c.l.b16 %v331
  %v1227 = vunpack.c.l.b16 %v332
  %v1228 = vunpack.c.l.b16 %v333
  %v1229 = vunpack.c.l.b16 %v334
  %v1230 = vunpack.c.l.b16 %v335
  %v1231 = vunpack.c.l.b16 %v336
  %v1232 = vunpack.c.l.b16 %v337
  %v1233 = vunpack.c.l.b16 %v338
  %v1234 = vunpack.c.l.b16 %v339
  %v1235 = vunpack.c.l.b16 %v340
  %v1236 = vunpack.c.l.b16 %v341
  %v1237 = vunpack.c.l.b16 %v342
  %v1238 = vunpack.c.l.b16 %v343
  %v1239 = vunpack.c.l.b16 %v344
  %v1240 = vunpack.c.l.b16 %v345
  %v1241 = vunpack.c.l.b16 %v346
  %v1242 = vunpack.c.l.b16 %v347
  %v1243 = vunpack.c.l.b16 %v348
  %v1244 = vunpack.c.l.b16 %v349
  %v1245 = vunpack.c.l.b16 %v350
  %v1246 = vunpack.c.l.b16 %v351
  %v1247 = vunpack.c.l.b16 %v352
  %v1248 = vunpack.c.l.b16 %v353
  %v1249 = vunpack.c.l.b16 %v354
  %v1250 = vunpack.c.l.b16 %v355
  %v1251 = vunpack.c.l.b16 %v356
  %v1252 = vunpack.c.l.b16 %v357
  %v1253 = vunpack.c.l.b16 %v358
  %v1254 = vunpack.c.l.b16 %v359
  %v1255 = vunpack.c.l.b16 %v360
  %v1256 = vunpack.c.l.b16 %v361
  %v1257 = vunpack.c.l.b16 %v362
  %v1258 = vunpack.c.l.b16 %v363
  %v1259 = vunpack.c.l.b16 %v364
  %v1260 = vunpack.c.l.b16 %v365
  %v1261 = vunpack.c.l.b16 %v366
  %v1262 = vunpack.c.l.b16 %v367
  %v1263 = vunpack.c.l.b16 %v368
  %v1264 = vunpack.c.l.b16 %v369
  %v1265 = vunpack.c.l.b16 %v370
  %v1266 = vunpack.c.l.b16 %v371
  %v1267 = vunpack.c.l.b16 %v372
  %v1268 = vunpack.c.l.b16 %v373
  %v1269 = vunpack.c.l.b16 %v374
  %v1270 = vunpack.c.l.b16 %v375
  %v1271 = vunpack.c.l.b16 %v376
  %v1272 = vunpack.c.l.b16 %v377
  %v1273 = vunpack.c.l.b16 %v378
  %v1274 = vunpack.c.l.b16 %v379
  %v1275 = vunpack.c.l.b16 %v380
  %v1276 = vunpack.c.l.b16 %v381
  %v1277 = vunpack.c.l.b16 %v382
  %v1278 = vunpack.c.l.b16 %v383
  %v1279 = vunpack.c.l.b16 %v384
  %v1280 = vunpack.c.l.b16 %v385
  %v1281 = vunpack.c.l.b16 %v386
  %v1282 = vunpack.c.l.b16 %v387
  %v1283 = vunpack.c.l.b16 %v388
  %v1284 = vunpack.c.l.b16 %v389
  %v1285 = vunpack.c.l.b16 %v390
  %v1286 = vunpack.c.l.b16 %v391
  %v1287 = vunpack.c.l.b16 %v392
  %v1288 = vunpack.c.l.b16 %v393
  %v1289 = vunpack.c.l.b16 %v394
  %v1290 = vunpack.c.l.b16 %v395
  %v1291 = vunpack.c.l.b16 %v396
  %v1292 = vunpack.c.l.b16 %v397
  %v1293 = vunpack.c.l.b16 %v398
  %v1294 = vunpack.c.l.b16 %v399
  %v1295 = vunpack.c.l.b16 %v400
  %v1296 = vunpack.c.l.b16 %v401
  %v1297 = vunpack.c.l.b16 %v402
  %v1298 = vunpack.c.l.b16 %v403
  %v1299 = vunpack.c.l.b16 %v404
  %v1300 = vunpack.c.l.b16 %v405
  %v1301 = vunpack.c.l.b16 %v406
  %v1302 = vunpack.c.l.b16 %v407
  %v1303 = vunpack.c.l.b16 %v408
  %v1304 = vunpack.c.l.b16 %v409
  %v1305 = vunpack.c.l.b16 %v410
  %v1306 = vunpack.c.l.b16 %v411
  %v1307 = vunpack.c.l.b16 %v412
  %v1308 = vunpack.c.l.b16 %v413
  %v1309 = vunpack.c.l.b16 %v414
  %v1310 = vunpack.c.l.b16 %v415
  %v1311 = vunpack.c.l.b16 %v416
  %v1312 = vunpack.c.l.b16 %v417
  %v1313 = vunpack.c.l.b16 %v418
  %v1314 = vunpack.c.l.b16 %v419
  %v1315 = vunpack.c.l.b16 %v420
  %v1316 = vunpack.c.l.b16 %v421
  %v1317 = vunpack.c.l.b16 %v422
  %v1318 = vunpack.c.l.b16 %v423
  %v1319 = vunpack.c.l.b16 %v424
  %v1320 = vunpack.c.l.b16 %v425
  %v1321 = vunpack.c.l.b16 %v426
  %v1322 = vunpack.c.l.b16 %v427
  %v1323 = vunpack.c.l.b16 %v428
  %v1324 = vunpack.c.l.b16 %v429
  %v1325 = vunpack.c.l.b16 %v430
  %v1326 = vunpack.c.l.b16 %v431
  %v1327 = vunpack.c.l.b16 %v432
  %v1328 = vunpack.c.l.b16 %v433
  %v1329 = vunpack.c.l.b16 %v434
  %v1330 = vunpack.c.l.b16 %v435
  %v1331 = vunpack.c.l.b16 %v436
  %v1332 = vunpack.c.l.b16 %v437
  %v1333 = vunpack.c.l.b16 %v438
  %v1334 = vunpack.c.l.b16 %v439
  %v1335 = vunpack.c.l.b16 %v440
  %v1336 = vunpack.c.l.b16 %v441
  %v1337 = vunpack.c.l.b16 %v442
  %v1338 = vunpack.c.l.b16 %v443
  %v1339 = vunpack.c.l.b16 %v444
  %v1340 = vunpack.c.l.b16 %v445
  %v1341 = vunpack.c.l.b16 %v446
  %v1342 = vunpack.c.l.b16 %v447
  %v1343 = vunpack.c.l.b16 %v448
  %v1344 = vunpack.c.l.b16 %v449
  %v1345 = vunpack.c.l.b16 %v450
  %v1346 = vunpack.c.l.b16 %v451
  %v1347 = vunpack.c.l.b16 %v452
  %v1348 = vunpack.c.l.b16 %v453
  %v1349 = vunpack.c.l.b16 %v454
  %v1350 = vunpack.c.l.b16 %v455
  %v1351 = vunpack.c.l.b16 %v456
  %v1352 = vunpack.c.l.b16 %v457
  %v1353 = vunpack.c.l.b16 %v458
  %v1354 = vunpack.c.l.b16 %v459
  %v1355 = vunpack.c.l.b16 %v460
  %v1356 = vunpack.c.l.b16 %v461
  %v1357 = vunpack.c.l.b16 %v462
  %v1358 = vunpack.c.l.b16 %v463
  %v1359 = vunpack.c.l.b16 %v464
  %v1360 = vunpack.c.l.b16 %v465
  %v1361 = vunpack.c.l.b16 %v466
  %v1362 = vunpack.c.l.b16 %v467
  %v1363 = vunpack.c.l.b16 %v468
  %v1364 = vunpack.c.l.b16 %v469
  %v1365 = vpack.c.b16 %v966, %v965
  %v1366 = vpack.c.b16 %v968, %v967
  %v1367 = vpack.c.b16 %v970, %v969
  %v1368 = vpack.c.b16 %v972, %v971
  %v1369 = vpack.c.b16 %v974, %v973
  %v1370 = vpack.c.b16 %v976, %v975
  %v1371 = vpack.c.b16 %v978, %v977
  %v1372 = vpack.c.b16 %v980, %v979
  %v1373 = vpack.c.b16 %v982, %v981
  %v1374 = vpack.c.b16 %v984, %v983
  %v1375 = vpack.c.b16 %v986, %v985
  %v1376 = vpack.c.b16 %v988, %v987
  %v1377 = vpack.c.b16 %v990, %v989
  %v1378 = vpack.c.b16 %v992, %v991
  %v1379 = vpack.c.b16 %v994, %v993
  %v1380 = vpack.c.b16 %v996, %v995
  %v1381 = vpack.c.b16 %v998, %v997
  %v1382 = vpack.c.b16 %v1000, %v999
  %v1383 = vpack.c.b16 %v1002, %v1001
  %v1384 = vpack.c.b16 %v1004, %v1003
  %v1385 = vpack.c.b16 %v1006, %v1005
  %v1386 = vpack.c.b16 %v1008, %v1007
  %v1387 = vpack.c.b16 %v1010, %v1009
  %v1388 = vpack.c.b16 %v1012, %v1011
  %v1389 = vpack.c.b16 %v1014, %v1013
  %v1390 = vpack.c.b16 %v1016, %v1015
  %v1391 = vpack.c.b16 %v1018, %v1017
  %v1392 = vpack.c.b16 %v1020, %v1019
  %v1393 = vpack.c.b16 %v1022, %v1021
  %v1394 = vpack.c.b16 %v1024, %v1023
  %v1395 = vpack.c.b16 %v1026, %v1025
  %v1396 = vpack.c.b16 %v1028, %v1027
  %v1397 = vpack.c.b16 %v1030, %v1029
  %v1398 = vpack.c.b16 %v1032, %v1031
  %v1399 = vpack.c.b16 %v1034, %v1033
  %v1400 = vpack.c.b16 %v1036, %v1035
  %v1401 = vpack.c.b16 %v1038, %v1037
  %v1402 = vpack.c.b16 %v1040, %v1039
  %v1403 = vpack.c.b16 %v1042, %v1041
  %v1404 = vpack.c.b16 %v1044, %v1043
  %v1405 = vpack.c.b16 %v1046, %v1045
  %v1406 = vpack.c.b16 %v1048, %v1047
  %v1407 = vpack.c.b16 %v1050, %v1049
  %v1408 = vpack.c.b16 %v1052, %v1051
  %v1409 = vpack.c.b16 %v1054, %v1053
  %v1410 = vpack.c.b16 %v1056, %v1055
  %v1411 = vpack.c.b16 %v1058, %v1057
  %v1412 = vpack.c.b16 %v1060, %v1059
  %v1413 = vpack.c.b16 %v1062, %v1061
  %v1414 = vpack.c.b16 %v1064, %v1063
  %v1415 = vpack.c.b16 %v1066, %v1065
  %v1416 = vpack.c.b16 %v1068, %v1067
  %v1417 = vpack.c.b16 %v1070, %v1069
  %v1418 = vpack.c.b16 %v1072, %v1071
  %v1419 = vpack.c.b16 %v1074, %v1073
  %v1420 = vpack.c.b16 %v1076, %v1075
  %v1421 = vpack.c.b16 %v1078, %v1077
  %v1422 = vpack.c.b16 %v1080, %v1079
  %v1423 = vpack.c.b16 %v1082, %v1081
  %v1424 = vpack.c.b16 %v1084, %v1083
  %v1425 = vpack.c.b16 %v1086, %v1085
  %v1426 = vpack.c.b16 %v1088, %v1087
  %v1427 = vpack.c.b16 %v1090, %v1089
  %v1428 = vpack.c.b16 %v1092, %v1091
  %v1429 = vpack.c.b16 %v1094, %v1093
  %v1430 = vpack.c.b16 %v1096, %v1095
  %v1431 = vpack.c.b16 %v1098, %v1097
  %v1432 = vpack.c.b16 %v1100, %v1099
  %v1433 = vpack.c.b16 %v1102, %v1101
  %v1434 = vpack.c.b16 %v1104, %v1103
  %v1435 = vpack.c.b16 %v1106, %v1105
  %v1436 = vpack.c.b16 %v1108, %v1107
  %v1437 = vpack.c.b16 %v1110, %v1109
  %v1438 = vpack.c.b16 %v1112, %v1111
  %v1439 = vpack.c.b16 %v1114, %v1113
  %v1440 = vpack.c.b16 %v1116, %v1115
  %v1441 = vpack.c.b16 %v1118, %v1117
  %v1442 = vpack.c.b16 %v1120, %v1119
  %v1443 = vpack.c.b16 %v1122, %v1121
  %v1444 = vpack.c.b16 %v1124, %v1123
  %v1445 = vpack.c.b16 %v1126, %v1125
  %v1446 = vpack.c.b16 %v1128, %v1127
  %v1447 = vpack.c.b16 %v1130, %v1129
  %v1448 = vpack.c.b16 %v1132, %v1131
  %v1449 = vpack.c.b16 %v1134, %v1133
  %v1450 = vpack.c.b16 %v1136, %v1135
  %v1451 = vpack.c.b16 %v1138, %v1137
  %v1452 = vpack.c.b16 %v1140, %v1139
  %v1453 = vpack.c.b16 %v1142, %v1141
  %v1454 = vpack.c.b16 %v1144, %v1143
  %v1455 = vpack.c.b16 %v1146, %v1145
  %v1456 = vpack.c.b16 %v1148, %v1147
  %v1457 = vpack.c.b16 %v1150, %v1149
  %v1458 = vpack.c.b16 %v1152, %v1151
  %v1459 = vpack.c.b16 %v1154, %v1153
  %v1460 = vpack.c.b16 %v1156, %v1155
  %v1461 = vpack.c.b16 %v1158, %v1157
  %v1462 = vpack.c.b16 %v1160, %v1159
  %v1463 = vpack.c.b16 %v1162, %v1161
  %v1464 = vpack.c.b16 %v1164, %v1163
  %v1465 = vpack.c.b16 %v1166, %v1165
  %v1466 = vpack.c.b16 %v1168, %v1167
  %v1467 = vpack.c.b16 %v1170, %v1169
  %v1468 = vpack.c.b16 %v1172, %v1171
  %v1469 = vpack.c.b16 %v1174, %v1173
  %v1470 = vpack.c.b16 %v1176, %v1175
  %v1471 = vpack.c.b16 %v1178, %v1177
  %v1472 = vpack.c.b16 %v1180, %v1179
  %v1473 = vpack.c.b16 %v1182, %v1181
  %v1474 = vpack.c.b16 %v1184, %v1183
  %v1475 = vpack.c.b16 %v1186, %v1185
  %v1476 = vpack.c.b16 %v1188, %v1187
  %v1477 = vpack.c.b16 %v1190, %v1189
  %v1478 = vpack.c.b16 %v1192, %v1191
  %v1479 = vpack.c.b16 %v1194, %v1193
  %v1480 = vpack.c.b16 %v1196, %v1195
  %v1481 = vpack.c.b16 %v1198, %v1197
  %v1482 = vpack.c.b16 %v1200, %v1199
  %v1483 = vpack.c.b16 %v1202, %v1201
  %v1484 = vpack.c.b16 %v1204, %v1203
  %v1485 = vpack.c.b16 %v1206, %v1205
  %v1486 = vpack.c.b16 %v1208, %v1207
  %v1487 = vpack.c.b16 %v1210, %v1209
  %v1488 = vpack.c.b16 %v1212, %v1211
  %v1489 = vpack.c.b16 %v1214, %v1213
  %v1490 = vpack.c.b16 %v1216, %v1215
  %v1491 = vpack.c.b16 %v1218, %v1217
  %v1492 = vpack.c.b16 %v1220, %v1219
  %v1493 = vpack.c.b16 %v1222, %v1221
  %v1494 = vpack.c.b16 %v1224, %v1223
  %v1495 = vpack.c.b16 %v1226, %v1225
  %v1496 = vpack.c.b16 %v1228, %v1227
  %v1497 = vpack.c.b16 %v1230, %v1229
  %v1498 = vpack.c.b16 %v1232, %v1231
  %v1499 = vpack.c.b16 %v1234, %v1233
  %v1500 = vpack.c.b16 %v1236, %v1235
  %v1501 = vpack.c.b16 %v1238, %v1237
  %v1502 = vpack.c.b16 %v1240, %v1239
  %v1503 = vpack.c.b16 %v1242, %v1241
  %v1504 = vpack.c.b16 %v1244, %v1243
  %v1505 = vpack.c.b16 %v1246, %v1245
  %v1506 = vpack.c.b16 %v1248, %v1247
  %v1507 = vpack.c.b16 %v1250, %v1249
  %v1508 = vpack.c.b16 %v1252, %v1251
  %v1509 = vpack.c.b16 %v1254, %v1253
  %v1510 = vpack.c.b16 %v1256, %v1255
  %v1511 = vpack.c.b16 %v1258, %v1257
  %v1512 = vpack.c.b16 %v1260, %v1259
  %v1513 = vpack.c.b16 %v1262, %v1261
  %v1514 = vpack.c.b16 %v1264, %v1263
  %v1515 = vpack.c.b16 %v1266, %v1265
  %v1516 = vpack.c.b16 %v1268, %v1267
  %v1517 = vpack.c.b16 %v1270, %v1269
  %v1518 = vpack.c.b16 %v1272, %v1271
  %v1519 = vpack.c.b16 %v1274, %v1273
  %v1520 = vpack.c.b16 %v1276, %v1275
  %v1521 = vpack.c.b16 %v1278, %v1277
  %v1522 = vpack.c.b16 %v1280, %v1279
  %v1523 = vpack.c.b16 %v1282, %v1281
  %v1524 = vpack.c.b16 %v1284, %v1283
  %v1525 = vpack.c.b16 %v1286, %v1285
  %v1526 = vpack.c.b16 %v1288, %v1287
  %v1527 = vpack.c.b16 %v1290, %v1289
  %v1528 = vpack.c.b16 %v1292, %v1291
  %v1529 = vpack.c.b16 %v1294, %v1293
  %v1530 = vpack.c.b16 %v1296, %v1295
  %v1531 = vpack.c.b16 %v1298, %v1297
  %v1532 = vpack.c.b16 %v1300, %v1299
  %v1533 = vpack.c.b16 %v1302, %v1301
  %v1534 = vpack.c.b16 %v1304, %v1303
  %v1535 = vpack.c.b16 %v1306, %v1305
  %v1536 = vpack.c.b16 %v1308, %v1307
  %v1537 = vpack.c.b16 %v1310, %v1309
  %v1538 = vpack.c.b16 %v1312, %v1311
  %v1539 = vpack.c.b16 %v1314, %v1313
  %v1540 = vpack.c.b16 %v1316, %v1315
  %v1541 = vpack.c.b16 %v1318, %v1317
  %v1542 = vpack.c.b16 %v1320, %v1319
  %v1543 = vpack.c.b16 %v1322, %v1321
  %v1544 = vpack.c.b16 %v1324, %v1323
  %v1545 = vpack.c.b16 %v1326, %v1325
  %v1546 = vpack.c.b16 %v1328, %v1327
  %v1547 = vpack.c.b16 %v1330, %v1329
  %v1548 = vpack.c.b16 %v1332, %v1331
  %v1549 = vpack.c.b16 %v1334, %v1333
  %v1550 = vpack.c.b16 %v1336, %v1335
  %v1551 = vpack.c.b16 %v1338, %v1337
  %v1552 = vpack.c.b16 %v1340, %v1339
  %v1553 = vpack.c.b16 %v1342, %v1341
  %v1554 = vpack.c.b16 %v1344, %v1343
  %v1555 = vpack.c.b16 %v1346, %v1345
  %v1556 = vpack.c.b16 %v1348, %v1347
  %v1557 = vpack.c.b16 %v1350, %v1349
  %v1558 = vpack.c.b16 %v1352, %v1351
  %v1559 = vpack.c.b16 %v1354, %v1353
  %v1560 = vpack.c.b16 %v1356, %v1355
  %v1561 = vpack.c.b16 %v1358, %v1357
  %v1562 = vpack.c.b16 %v1360, %v1359
  %v1563 = vpack.c.b16 %v1362, %v1361
  %v1564 = vpack.c.b16 %v1364, %v1363
  %1765 = vmatprep.subr.bf16.mxu0 0
  %1766 = vmatpush1.bf16.msra.mxu0 %v1365
  %1767 = vmatprep.subr.bf16.mxu0 0
  %1768 = vmatpush1.bf16.msra.mxu0 %v1366
  %1769 = vmatprep.subr.bf16.mxu0 0
  %1770 = vmatpush1.bf16.msra.mxu0 %v1367
  %1771 = vmatprep.subr.bf16.mxu0 0
  %1772 = vmatpush1.bf16.msra.mxu0 %v1368
  %1773 = vmatprep.subr.bf16.mxu0 0
  %1774 = vmatpush1.bf16.msra.mxu0 %v1369
  %1775 = vmatprep.subr.bf16.mxu0 0
  %1776 = vmatpush1.bf16.msra.mxu0 %v1370
  %1777 = vmatprep.subr.bf16.mxu0 0
  %1778 = vmatpush1.bf16.msra.mxu0 %v1371
  %1779 = vmatprep.subr.bf16.mxu0 0
  %1780 = vmatpush1.bf16.msra.mxu0 %v1372
  %1781 = vmatprep.subr.bf16.mxu0 0
  %1782 = vmatpush1.bf16.msra.mxu0 %v1373
  %1783 = vmatprep.subr.bf16.mxu0 0
  %1784 = vmatpush1.bf16.msra.mxu0 %v1374
  %1785 = vmatprep.subr.bf16.mxu0 0
  %1786 = vmatpush1.bf16.msra.mxu0 %v1375
  %1787 = vmatprep.subr.bf16.mxu0 0
  %1788 = vmatpush1.bf16.msra.mxu0 %v1376
  %1789 = vmatprep.subr.bf16.mxu0 0
  %1790 = vmatpush1.bf16.msra.mxu0 %v1377
  %1791 = vmatprep.subr.bf16.mxu0 0
  %1792 = vmatpush1.bf16.msra.mxu0 %v1378
  %1793 = vmatprep.subr.bf16.mxu0 0
  %1794 = vmatpush1.bf16.msra.mxu0 %v1379
  %1795 = vmatprep.subr.bf16.mxu0 0
  %1796 = vmatpush1.bf16.msra.mxu0 %v1380
  %1797 = vmatprep.mubr.bf16.mxu0 %v516
  %1798 = vmatmul.mubr.bf16.gmra.mrb[0].mxu0 %v515
  %v1799 = vpop.f32.mrb[0].mxu0
  %v1800 = vadd.f32 %v475, %v1799
  %v1801 = vpop.f32.mrb[0].mxu0
  %v1802 = vpop.f32.mrb[0].mxu0
  %v1803 = vpop.f32.mrb[0].mxu0
  %1804 = vdwg.mxu0
  %1805 = vmatprep.subr.bf16.mxu0 0
  %1806 = vmatpush1.bf16.msra.mxu0 %v1381
  %1807 = vmatprep.subr.bf16.mxu0 0
  %1808 = vmatpush1.bf16.msra.mxu0 %v1382
  %1809 = vmatprep.subr.bf16.mxu0 0
  %1810 = vmatpush1.bf16.msra.mxu0 %v1383
  %1811 = vmatprep.subr.bf16.mxu0 0
  %1812 = vmatpush1.bf16.msra.mxu0 %v1384
  %1813 = vmatprep.subr.bf16.mxu0 0
  %1814 = vmatpush1.bf16.msra.mxu0 %v1385
  %1815 = vmatprep.subr.bf16.mxu0 0
  %1816 = vmatpush1.bf16.msra.mxu0 %v1386
  %1817 = vmatprep.subr.bf16.mxu0 0
  %1818 = vmatpush1.bf16.msra.mxu0 %v1387
  %1819 = vmatprep.subr.bf16.mxu0 0
  %1820 = vmatpush1.bf16.msra.mxu0 %v1388
  %1821 = vmatprep.subr.bf16.mxu0 0
  %1822 = vmatpush1.bf16.msra.mxu0 %v1389
  %1823 = vmatprep.subr.bf16.mxu0 0
  %1824 = vmatpush1.bf16.msra.mxu0 %v1390
  %1825 = vmatprep.subr.bf16.mxu0 0
  %1826 = vmatpush1.bf16.msra.mxu0 %v1391
  %1827 = vmatprep.subr.bf16.mxu0 0
  %1828 = vmatpush1.bf16.msra.mxu0 %v1392
  %1829 = vmatprep.subr.bf16.mxu0 0
  %1830 = vmatpush1.bf16.msra.mxu0 %v1393
  %1831 = vmatprep.subr.bf16.mxu0 0
  %1832 = vmatpush1.bf16.msra.mxu0 %v1394
  %1833 = vmatprep.subr.bf16.mxu0 0
  %1834 = vmatpush1.bf16.msra.mxu0 %v1395
  %1835 = vmatprep.subr.bf16.mxu0 0
  %1836 = vmatpush1.bf16.msra.mxu0 %v1396
  %1837 = vmatprep.mubr.bf16.mxu0 %v518
  %1838 = vmatmul.mubr.bf16.gmra.mrb[0].mxu0 %v517
  %v1839 = vpop.f32.mrb[0].mxu0
  %v1840 = vadd.f32 %v1800, %v1839
  %v1841 = vpop.f32.mrb[0].mxu0
  %v1842 = vpop.f32.mrb[0].mxu0
  %v1843 = vpop.f32.mrb[0].mxu0
  %1844 = vdwg.mxu0
  %1845 = vmatprep.subr.bf16.mxu0 0
  %1846 = vmatpush1.bf16.msra.mxu0 %v1397
  %1847 = vmatprep.subr.bf16.mxu0 0
  %1848 = vmatpush1.bf16.msra.mxu0 %v1398
  %1849 = vmatprep.subr.bf16.mxu0 0
  %1850 = vmatpush1.bf16.msra.mxu0 %v1399
  %1851 = vmatprep.subr.bf16.mxu0 0
  %1852 = vmatpush1.bf16.msra.mxu0 %v1400
  %1853 = vmatprep.subr.bf16.mxu0 0
  %1854 = vmatpush1.bf16.msra.mxu0 %v1401
  %1855 = vmatprep.subr.bf16.mxu0 0
  %1856 = vmatpush1.bf16.msra.mxu0 %v1402
  %1857 = vmatprep.subr.bf16.mxu0 0
  %1858 = vmatpush1.bf16.msra.mxu0 %v1403
  %1859 = vmatprep.subr.bf16.mxu0 0
  %1860 = vmatpush1.bf16.msra.mxu0 %v1404
  %1861 = vmatprep.subr.bf16.mxu0 0
  %1862 = vmatpush1.bf16.msra.mxu0 %v1405
  %1863 = vmatprep.subr.bf16.mxu0 0
  %1864 = vmatpush1.bf16.msra.mxu0 %v1406
  %1865 = vmatprep.subr.bf16.mxu0 0
  %1866 = vmatpush1.bf16.msra.mxu0 %v1407
  %1867 = vmatprep.subr.bf16.mxu0 0
  %1868 = vmatpush1.bf16.msra.mxu0 %v1408
  %1869 = vmatprep.subr.bf16.mxu0 0
  %1870 = vmatpush1.bf16.msra.mxu0 %v1409
  %1871 = vmatprep.subr.bf16.mxu0 0
  %1872 = vmatpush1.bf16.msra.mxu0 %v1410
  %1873 = vmatprep.subr.bf16.mxu0 0
  %1874 = vmatpush1.bf16.msra.mxu0 %v1411
  %1875 = vmatprep.subr.bf16.mxu0 0
  %1876 = vmatpush1.bf16.msra.mxu0 %v1412
  %1877 = vmatprep.mubr.bf16.mxu0 %v520
  %1878 = vmatmul.mubr.bf16.gmra.mrb[0].mxu0 %v519
  %v1879 = vpop.f32.mrb[0].mxu0
  %v1880 = vadd.f32 %v1840, %v1879
  %v1881 = vpop.f32.mrb[0].mxu0
  %v1882 = vpop.f32.mrb[0].mxu0
  %v1883 = vpop.f32.mrb[0].mxu0
  %1884 = vdwg.mxu0
  %1885 = vmatprep.subr.bf16.mxu0 0
  %1886 = vmatpush1.bf16.msra.mxu0 %v1413
  %1887 = vmatprep.subr.bf16.mxu0 0
  %1888 = vmatpush1.bf16.msra.mxu0 %v1414
  %1889 = vmatprep.subr.bf16.mxu0 0
  %1890 = vmatpush1.bf16.msra.mxu0 %v1415
  %1891 = vmatprep.subr.bf16.mxu0 0
  %1892 = vmatpush1.bf16.msra.mxu0 %v1416
  %1893 = vmatprep.subr.bf16.mxu0 0
  %1894 = vmatpush1.bf16.msra.mxu0 %v1417
  %1895 = vmatprep.subr.bf16.mxu0 0
  %1896 = vmatpush1.bf16.msra.mxu0 %v1418
  %1897 = vmatprep.subr.bf16.mxu0 0
  %1898 = vmatpush1.bf16.msra.mxu0 %v1419
  %1899 = vmatprep.subr.bf16.mxu0 0
  %1900 = vmatpush1.bf16.msra.mxu0 %v1420
  %1901 = vmatprep.subr.bf16.mxu0 0
  %1902 = vmatpush1.bf16.msra.mxu0 %v1421
  %1903 = vmatprep.subr.bf16.mxu0 0
  %1904 = vmatpush1.bf16.msra.mxu0 %v1422
  %1905 = vmatprep.subr.bf16.mxu0 0
  %1906 = vmatpush1.bf16.msra.mxu0 %v1423
  %1907 = vmatprep.subr.bf16.mxu0 0
  %1908 = vmatpush1.bf16.msra.mxu0 %v1424
  %1909 = vmatprep.subr.bf16.mxu0 0
  %1910 = vmatpush1.bf16.msra.mxu0 %v1425
  %1911 = vmatprep.subr.bf16.mxu0 0
  %1912 = vmatpush1.bf16.msra.mxu0 %v1426
  %1913 = vmatprep.subr.bf16.mxu0 0
  %1914 = vmatpush1.bf16.msra.mxu0 %v1427
  %1915 = vmatprep.subr.bf16.mxu0 0
  %1916 = vmatpush1.bf16.msra.mxu0 %v1428
  %1917 = vmatprep.mubr.bf16.mxu0 %v522
  %1918 = vmatmul.mubr.bf16.gmra.mrb[0].mxu0 %v521
  %v1919 = vpop.f32.mrb[0].mxu0
  %v1920 = vadd.f32 %v1880, %v1919
  %v1921 = vpop.f32.mrb[0].mxu0
  %v1922 = vpop.f32.mrb[0].mxu0
  %v1923 = vpop.f32.mrb[0].mxu0
  %1924 = vdwg.mxu0
  %1925 = vmatprep.subr.bf16.mxu0 0
  %1926 = vmatpush1.bf16.msra.mxu0 %v1429
  %1927 = vmatprep.subr.bf16.mxu0 0
  %1928 = vmatpush1.bf16.msra.mxu0 %v1430
  %1929 = vmatprep.subr.bf16.mxu0 0
  %1930 = vmatpush1.bf16.msra.mxu0 %v1431
  %1931 = vmatprep.subr.bf16.mxu0 0
  %1932 = vmatpush1.bf16.msra.mxu0 %v1432
  %1933 = vmatprep.subr.bf16.mxu0 0
  %1934 = vmatpush1.bf16.msra.mxu0 %v1433
  %1935 = vmatprep.subr.bf16.mxu0 0
  %1936 = vmatpush1.bf16.msra.mxu0 %v1434
  %1937 = vmatprep.subr.bf16.mxu0 0
  %1938 = vmatpush1.bf16.msra.mxu0 %v1435
  %1939 = vmatprep.subr.bf16.mxu0 0
  %1940 = vmatpush1.bf16.msra.mxu0 %v1436
  %1941 = vmatprep.subr.bf16.mxu0 0
  %1942 = vmatpush1.bf16.msra.mxu0 %v1437
  %1943 = vmatprep.subr.bf16.mxu0 0
  %1944 = vmatpush1.bf16.msra.mxu0 %v1438
  %1945 = vmatprep.subr.bf16.mxu0 0
  %1946 = vmatpush1.bf16.msra.mxu0 %v1439
  %1947 = vmatprep.subr.bf16.mxu0 0
  %1948 = vmatpush1.bf16.msra.mxu0 %v1440
  %1949 = vmatprep.subr.bf16.mxu0 0
  %1950 = vmatpush1.bf16.msra.mxu0 %v1441
  %1951 = vmatprep.subr.bf16.mxu0 0
  %1952 = vmatpush1.bf16.msra.mxu0 %v1442
  %1953 = vmatprep.subr.bf16.mxu0 0
  %1954 = vmatpush1.bf16.msra.mxu0 %v1443
  %1955 = vmatprep.subr.bf16.mxu0 0
  %1956 = vmatpush1.bf16.msra.mxu0 %v1444
  %1957 = vmatprep.mubr.bf16.mxu0 %v524
  %1958 = vmatmul.mubr.bf16.gmra.mrb[0].mxu0 %v523
  %v1959 = vpop.f32.mrb[0].mxu0
  %v1960 = vadd.f32 %v1920, %v1959
  %v1961 = vpop.f32.mrb[0].mxu0
  %v1962 = vpop.f32.mrb[0].mxu0
  %v1963 = vpop.f32.mrb[0].mxu0
  %1964 = vdwg.mxu0
  %1965 = vmatprep.subr.bf16.mxu0 0
  %1966 = vmatpush1.bf16.msra.mxu0 %v1445
  %1967 = vmatprep.subr.bf16.mxu0 0
  %1968 = vmatpush1.bf16.msra.mxu0 %v1446
  %1969 = vmatprep.subr.bf16.mxu0 0
  %1970 = vmatpush1.bf16.msra.mxu0 %v1447
  %1971 = vmatprep.subr.bf16.mxu0 0
  %1972 = vmatpush1.bf16.msra.mxu0 %v1448
  %1973 = vmatprep.subr.bf16.mxu0 0
  %1974 = vmatpush1.bf16.msra.mxu0 %v1449
  %1975 = vmatprep.subr.bf16.mxu0 0
  %1976 = vmatpush1.bf16.msra.mxu0 %v1450
  %1977 = vmatprep.subr.bf16.mxu0 0
  %1978 = vmatpush1.bf16.msra.mxu0 %v1451
  %1979 = vmatprep.subr.bf16.mxu0 0
  %1980 = vmatpush1.bf16.msra.mxu0 %v1452
  %1981 = vmatprep.subr.bf16.mxu0 0
  %1982 = vmatpush1.bf16.msra.mxu0 %v1453
  %1983 = vmatprep.subr.bf16.mxu0 0
  %1984 = vmatpush1.bf16.msra.mxu0 %v1454
  %1985 = vmatprep.subr.bf16.mxu0 0
  %1986 = vmatpush1.bf16.msra.mxu0 %v1455
  %1987 = vmatprep.subr.bf16.mxu0 0
  %1988 = vmatpush1.bf16.msra.mxu0 %v1456
  %1989 = vmatprep.subr.bf16.mxu0 0
  %1990 = vmatpush1.bf16.msra.mxu0 %v1457
  %1991 = vmatprep.subr.bf16.mxu0 0
  %1992 = vmatpush1.bf16.msra.mxu0 %v1458
  %1993 = vmatprep.subr.bf16.mxu0 0
  %1994 = vmatpush1.bf16.msra.mxu0 %v1459
  %1995 = vmatprep.subr.bf16.mxu0 0
  %1996 = vmatpush1.bf16.msra.mxu0 %v1460
  %1997 = vmatprep.mubr.bf16.mxu0 %v526
  %1998 = vmatmul.mubr.bf16.gmra.mrb[0].mxu0 %v525
  %v1999 = vpop.f32.mrb[0].mxu0
  %v2000 = vadd.f32 %v1960, %v1999
  %v2001 = vpop.f32.mrb[0].mxu0
  %v2002 = vpop.f32.mrb[0].mxu0
  %v2003 = vpop.f32.mrb[0].mxu0
  %2004 = vdwg.mxu0
  %2005 = vmatprep.subr.bf16.mxu0 0
  %2006 = vmatpush1.bf16.msra.mxu0 %v1461
  %2007 = vmatprep.subr.bf16.mxu0 0
  %2008 = vmatpush1.bf16.msra.mxu0 %v1462
  %2009 = vmatprep.subr.bf16.mxu0 0
  %2010 = vmatpush1.bf16.msra.mxu0 %v1463
  %2011 = vmatprep.subr.bf16.mxu0 0
  %2012 = vmatpush1.bf16.msra.mxu0 %v1464
  %2013 = vmatprep.subr.bf16.mxu0 0
  %2014 = vmatpush1.bf16.msra.mxu0 %v1465
  %2015 = vmatprep.subr.bf16.mxu0 0
  %2016 = vmatpush1.bf16.msra.mxu0 %v1466
  %2017 = vmatprep.subr.bf16.mxu0 0
  %2018 = vmatpush1.bf16.msra.mxu0 %v1467
  %2019 = vmatprep.subr.bf16.mxu0 0
  %2020 = vmatpush1.bf16.msra.mxu0 %v1468
  %2021 = vmatprep.subr.bf16.mxu0 0
  %2022 = vmatpush1.bf16.msra.mxu0 %v1469
  %2023 = vmatprep.subr.bf16.mxu0 0
  %2024 = vmatpush1.bf16.msra.mxu0 %v1470
  %2025 = vmatprep.subr.bf16.mxu0 0
  %2026 = vmatpush1.bf16.msra.mxu0 %v1471
  %2027 = vmatprep.subr.bf16.mxu0 0
  %2028 = vmatpush1.bf16.msra.mxu0 %v1472
  %2029 = vmatprep.subr.bf16.mxu0 0
  %2030 = vmatpush1.bf16.msra.mxu0 %v1473
  %2031 = vmatprep.subr.bf16.mxu0 0
  %2032 = vmatpush1.bf16.msra.mxu0 %v1474
  %2033 = vmatprep.subr.bf16.mxu0 0
  %2034 = vmatpush1.bf16.msra.mxu0 %v1475
  %2035 = vmatprep.subr.bf16.mxu0 0
  %2036 = vmatpush1.bf16.msra.mxu0 %v1476
  %2037 = vmatprep.mubr.bf16.mxu0 %v528
  %2038 = vmatmul.mubr.bf16.gmra.mrb[0].mxu0 %v527
  %v2039 = vpop.f32.mrb[0].mxu0
  %v2040 = vadd.f32 %v2000, %v2039
  %v2041 = vpop.f32.mrb[0].mxu0
  %v2042 = vpop.f32.mrb[0].mxu0
  %v2043 = vpop.f32.mrb[0].mxu0
  %2044 = vdwg.mxu0
  %2045 = vmatprep.subr.bf16.mxu0 0
  %2046 = vmatpush1.bf16.msra.mxu0 %v1477
  %2047 = vmatprep.subr.bf16.mxu0 0
  %2048 = vmatpush1.bf16.msra.mxu0 %v1478
  %2049 = vmatprep.subr.bf16.mxu0 0
  %2050 = vmatpush1.bf16.msra.mxu0 %v1479
  %2051 = vmatprep.subr.bf16.mxu0 0
  %2052 = vmatpush1.bf16.msra.mxu0 %v1480
  %2053 = vmatprep.subr.bf16.mxu0 0
  %2054 = vmatpush1.bf16.msra.mxu0 %v1481
  %2055 = vmatprep.subr.bf16.mxu0 0
  %2056 = vmatpush1.bf16.msra.mxu0 %v1482
  %2057 = vmatprep.subr.bf16.mxu0 0
  %2058 = vmatpush1.bf16.msra.mxu0 %v1483
  %2059 = vmatprep.subr.bf16.mxu0 0
  %2060 = vmatpush1.bf16.msra.mxu0 %v1484
  %2061 = vmatprep.subr.bf16.mxu0 0
  %2062 = vmatpush1.bf16.msra.mxu0 %v1485
  %2063 = vmatprep.subr.bf16.mxu0 0
  %2064 = vmatpush1.bf16.msra.mxu0 %v1486
  %2065 = vmatprep.subr.bf16.mxu0 0
  %2066 = vmatpush1.bf16.msra.mxu0 %v1487
  %2067 = vmatprep.subr.bf16.mxu0 0
  %2068 = vmatpush1.bf16.msra.mxu0 %v1488
  %2069 = vmatprep.subr.bf16.mxu0 0
  %2070 = vmatpush1.bf16.msra.mxu0 %v1489
  %2071 = vmatprep.subr.bf16.mxu0 0
  %2072 = vmatpush1.bf16.msra.mxu0 %v1490
  %2073 = vmatprep.subr.bf16.mxu0 0
  %2074 = vmatpush1.bf16.msra.mxu0 %v1491
  %2075 = vmatprep.subr.bf16.mxu0 0
  %2076 = vmatpush1.bf16.msra.mxu0 %v1492
  %2077 = vmatprep.mubr.bf16.mxu0 %v530
  %2078 = vmatmul.mubr.bf16.gmra.mrb[0].mxu0 %v529
  %v2079 = vpop.f32.mrb[0].mxu0
  %v2080 = vadd.f32 %v2040, %v2079
  %v2081 = vpop.f32.mrb[0].mxu0
  %v2082 = vpop.f32.mrb[0].mxu0
  %v2083 = vpop.f32.mrb[0].mxu0
  %2084 = vdwg.mxu0
  %2085 = vmatprep.subr.bf16.mxu0 0
  %2086 = vmatpush1.bf16.msra.mxu0 %v1493
  %2087 = vmatprep.subr.bf16.mxu0 0
  %2088 = vmatpush1.bf16.msra.mxu0 %v1494
  %2089 = vmatprep.subr.bf16.mxu0 0
  %2090 = vmatpush1.bf16.msra.mxu0 %v1495
  %2091 = vmatprep.subr.bf16.mxu0 0
  %2092 = vmatpush1.bf16.msra.mxu0 %v1496
  %2093 = vmatprep.subr.bf16.mxu0 0
  %2094 = vmatpush1.bf16.msra.mxu0 %v1497
  %2095 = vmatprep.subr.bf16.mxu0 0
  %2096 = vmatpush1.bf16.msra.mxu0 %v1498
  %2097 = vmatprep.subr.bf16.mxu0 0
  %2098 = vmatpush1.bf16.msra.mxu0 %v1499
  %2099 = vmatprep.subr.bf16.mxu0 0
  %2100 = vmatpush1.bf16.msra.mxu0 %v1500
  %2101 = vmatprep.subr.bf16.mxu0 0
  %2102 = vmatpush1.bf16.msra.mxu0 %v1501
  %2103 = vmatprep.subr.bf16.mxu0 0
  %2104 = vmatpush1.bf16.msra.mxu0 %v1502
  %2105 = vmatprep.subr.bf16.mxu0 0
  %2106 = vmatpush1.bf16.msra.mxu0 %v1503
  %2107 = vmatprep.subr.bf16.mxu0 0
  %2108 = vmatpush1.bf16.msra.mxu0 %v1504
  %2109 = vmatprep.subr.bf16.mxu0 0
  %2110 = vmatpush1.bf16.msra.mxu0 %v1505
  %2111 = vmatprep.subr.bf16.mxu0 0
  %2112 = vmatpush1.bf16.msra.mxu0 %v1506
  %2113 = vmatprep.subr.bf16.mxu0 0
  %2114 = vmatpush1.bf16.msra.mxu0 %v1507
  %2115 = vmatprep.subr.bf16.mxu0 0
  %2116 = vmatpush1.bf16.msra.mxu0 %v1508
  %2117 = vmatprep.mubr.bf16.mxu0 %v532
  %2118 = vmatmul.mubr.bf16.gmra.mrb[0].mxu0 %v531
  %v2119 = vpop.f32.mrb[0].mxu0
  %v2120 = vadd.f32 %v2080, %v2119
  %v2121 = vpop.f32.mrb[0].mxu0
  %v2122 = vpop.f32.mrb[0].mxu0
  %v2123 = vpop.f32.mrb[0].mxu0
  %2124 = vdwg.mxu0
  %2125 = vmatprep.subr.bf16.mxu0 0
  %2126 = vmatpush1.bf16.msra.mxu0 %v1509
  %2127 = vmatprep.subr.bf16.mxu0 0
  %2128 = vmatpush1.bf16.msra.mxu0 %v1510
  %2129 = vmatprep.subr.bf16.mxu0 0
  %2130 = vmatpush1.bf16.msra.mxu0 %v1511
  %2131 = vmatprep.subr.bf16.mxu0 0
  %2132 = vmatpush1.bf16.msra.mxu0 %v1512
  %2133 = vmatprep.subr.bf16.mxu0 0
  %2134 = vmatpush1.bf16.msra.mxu0 %v1513
  %2135 = vmatprep.subr.bf16.mxu0 0
  %2136 = vmatpush1.bf16.msra.mxu0 %v1514
  %2137 = vmatprep.subr.bf16.mxu0 0
  %2138 = vmatpush1.bf16.msra.mxu0 %v1515
  %2139 = vmatprep.subr.bf16.mxu0 0
  %2140 = vmatpush1.bf16.msra.mxu0 %v1516
  %2141 = vmatprep.subr.bf16.mxu0 0
  %2142 = vmatpush1.bf16.msra.mxu0 %v1517
  %2143 = vmatprep.subr.bf16.mxu0 0
  %2144 = vmatpush1.bf16.msra.mxu0 %v1518
  %2145 = vmatprep.subr.bf16.mxu0 0
  %2146 = vmatpush1.bf16.msra.mxu0 %v1519
  %2147 = vmatprep.subr.bf16.mxu0 0
  %2148 = vmatpush1.bf16.msra.mxu0 %v1520
  %2149 = vmatprep.subr.bf16.mxu0 0
  %2150 = vmatpush1.bf16.msra.mxu0 %v1521
  %2151 = vmatprep.subr.bf16.mxu0 0
  %2152 = vmatpush1.bf16.msra.mxu0 %v1522
  %2153 = vmatprep.subr.bf16.mxu0 0
  %2154 = vmatpush1.bf16.msra.mxu0 %v1523
  %2155 = vmatprep.subr.bf16.mxu0 0
  %2156 = vmatpush1.bf16.msra.mxu0 %v1524
  %2157 = vmatprep.mubr.bf16.mxu0 %v534
  %2158 = vmatmul.mubr.bf16.gmra.mrb[0].mxu0 %v533
  %v2159 = vpop.f32.mrb[0].mxu0
  %v2160 = vadd.f32 %v2120, %v2159
  %v2161 = vpop.f32.mrb[0].mxu0
  %v2162 = vpop.f32.mrb[0].mxu0
  %v2163 = vpop.f32.mrb[0].mxu0
  %2164 = vdwg.mxu0
  %2165 = vmatprep.subr.bf16.mxu0 0
  %2166 = vmatpush1.bf16.msra.mxu0 %v1525
  %2167 = vmatprep.subr.bf16.mxu0 0
  %2168 = vmatpush1.bf16.msra.mxu0 %v1526
  %2169 = vmatprep.subr.bf16.mxu0 0
  %2170 = vmatpush1.bf16.msra.mxu0 %v1527
  %2171 = vmatprep.subr.bf16.mxu0 0
  %2172 = vmatpush1.bf16.msra.mxu0 %v1528
  %2173 = vmatprep.subr.bf16.mxu0 0
  %2174 = vmatpush1.bf16.msra.mxu0 %v1529
  %2175 = vmatprep.subr.bf16.mxu0 0
  %2176 = vmatpush1.bf16.msra.mxu0 %v1530
  %2177 = vmatprep.subr.bf16.mxu0 0
  %2178 = vmatpush1.bf16.msra.mxu0 %v1531
  %2179 = vmatprep.subr.bf16.mxu0 0
  %2180 = vmatpush1.bf16.msra.mxu0 %v1532
  %2181 = vmatprep.subr.bf16.mxu0 0
  %2182 = vmatpush1.bf16.msra.mxu0 %v1533
  %2183 = vmatprep.subr.bf16.mxu0 0
  %2184 = vmatpush1.bf16.msra.mxu0 %v1534
  %2185 = vmatprep.subr.bf16.mxu0 0
  %2186 = vmatpush1.bf16.msra.mxu0 %v1535
  %2187 = vmatprep.subr.bf16.mxu0 0
  %2188 = vmatpush1.bf16.msra.mxu0 %v1536
  %2189 = vmatprep.subr.bf16.mxu0 0
  %2190 = vmatpush1.bf16.msra.mxu0 %v1537
  %2191 = vmatprep.subr.bf16.mxu0 0
  %2192 = vmatpush1.bf16.msra.mxu0 %v1538
  %2193 = vmatprep.subr.bf16.mxu0 0
  %2194 = vmatpush1.bf16.msra.mxu0 %v1539
  %2195 = vmatprep.subr.bf16.mxu0 0
  %2196 = vmatpush1.bf16.msra.mxu0 %v1540
  %2197 = vmatprep.mubr.bf16.mxu0 %v536
  %2198 = vmatmul.mubr.bf16.gmra.mrb[0].mxu0 %v535
  %v2199 = vpop.f32.mrb[0].mxu0
  %v2200 = vadd.f32 %v2160, %v2199
  %v2201 = vpop.f32.mrb[0].mxu0
  %v2202 = vpop.f32.mrb[0].mxu0
  %v2203 = vpop.f32.mrb[0].mxu0
  %2204 = vdwg.mxu0
  %2205 = vmatprep.subr.bf16.mxu0 0
  %2206 = vmatpush1.bf16.msra.mxu0 %v1541
  %2207 = vmatprep.subr.bf16.mxu0 0
  %2208 = vmatpush1.bf16.msra.mxu0 %v1542
  %2209 = vmatprep.subr.bf16.mxu0 0
  %2210 = vmatpush1.bf16.msra.mxu0 %v1543
  %2211 = vmatprep.subr.bf16.mxu0 0
  %2212 = vmatpush1.bf16.msra.mxu0 %v1544
  %2213 = vmatprep.subr.bf16.mxu0 0
  %2214 = vmatpush1.bf16.msra.mxu0 %v1545
  %2215 = vmatprep.subr.bf16.mxu0 0
  %2216 = vmatpush1.bf16.msra.mxu0 %v1546
  %2217 = vmatprep.subr.bf16.mxu0 0
  %2218 = vmatpush1.bf16.msra.mxu0 %v1547
  %2219 = vmatprep.subr.bf16.mxu0 0
  %2220 = vmatpush1.bf16.msra.mxu0 %v1548
  %2221 = vmatprep.subr.bf16.mxu0 0
  %2222 = vmatpush1.bf16.msra.mxu0 %v1549
  %2223 = vmatprep.subr.bf16.mxu0 0
  %2224 = vmatpush1.bf16.msra.mxu0 %v1550
  %2225 = vmatprep.subr.bf16.mxu0 0
  %2226 = vmatpush1.bf16.msra.mxu0 %v1551
  %2227 = vmatprep.subr.bf16.mxu0 0
  %2228 = vmatpush1.bf16.msra.mxu0 %v1552
  %2229 = vmatprep.subr.bf16.mxu0 0
  %2230 = vmatpush1.bf16.msra.mxu0 %v1553
  %2231 = vmatprep.subr.bf16.mxu0 0
  %2232 = vmatpush1.bf16.msra.mxu0 %v1554
  %2233 = vmatprep.subr.bf16.mxu0 0
  %2234 = vmatpush1.bf16.msra.mxu0 %v1555
  %2235 = vmatprep.subr.bf16.mxu0 0
  %2236 = vmatpush1.bf16.msra.mxu0 %v1556
  %2237 = vmatprep.mubr.bf16.mxu0 %v538
  %2238 = vmatmul.mubr.bf16.gmra.mrb[0].mxu0 %v537
  %v2239 = vpop.f32.mrb[0].mxu0
  %v2240 = vadd.f32 %v2200, %v2239
  %v2241 = vpop.f32.mrb[0].mxu0
  %v2242 = vpop.f32.mrb[0].mxu0
  %v2243 = vpop.f32.mrb[0].mxu0
  %2244 = vdwg.mxu0
  %2245 = vmatprep.subr.bf16.mxu0 0
  %2246 = vmatpush1.bf16.msra.mxu0 %v1557
  %2247 = vmatprep.subr.bf16.mxu0 0
  %2248 = vmatpush1.bf16.msra.mxu0 %v1558
  %2249 = vmatprep.subr.bf16.mxu0 0
  %2250 = vmatpush1.bf16.msra.mxu0 %v1559
  %2251 = vmatprep.subr.bf16.mxu0 0
  %2252 = vmatpush1.bf16.msra.mxu0 %v1560
  %2253 = vmatprep.subr.bf16.mxu0 0
  %2254 = vmatpush1.bf16.msra.mxu0 %v1561
  %2255 = vmatprep.subr.bf16.mxu0 0
  %2256 = vmatpush1.bf16.msra.mxu0 %v1562
  %2257 = vmatprep.subr.bf16.mxu0 0
  %2258 = vmatpush1.bf16.msra.mxu0 %v1563
  %2259 = vmatprep.subr.bf16.mxu0 0
  %2260 = vmatpush1.bf16.msra.mxu0 %v1564
  %2261 = vmatprep.subr.bf16.mxu0 0
  %2262 = vmatpush1.bf16.msra.mxu0 0
  %2263 = vmatprep.subr.bf16.mxu0 0
  %2264 = vmatpush1.bf16.msra.mxu0 0
  %2265 = vmatprep.subr.bf16.mxu0 0
  %2266 = vmatpush1.bf16.msra.mxu0 0
  %2267 = vmatprep.subr.bf16.mxu0 0
  %2268 = vmatpush1.bf16.msra.mxu0 0
  %2269 = vmatprep.subr.bf16.mxu0 0
  %2270 = vmatpush1.bf16.msra.mxu0 0
  %2271 = vmatprep.subr.bf16.mxu0 0
  %2272 = vmatpush1.bf16.msra.mxu0 0
  %2273 = vmatprep.subr.bf16.mxu0 0
  %2274 = vmatpush1.bf16.msra.mxu0 0
  %2275 = vmatprep.subr.bf16.mxu0 0
  %2276 = vmatpush1.bf16.msra.mxu0 0
  %2277 = vmatprep.mubr.bf16.mxu0 0
  %2278 = vmatmul.mubr.bf16.gmra.mrb[0].mxu0 %v539
  %v2279 = vpop.f32.mrb[0].mxu0
  %v2280 = vadd.f32 %v2240, %v2279
  %v2281 = vpop.f32.mrb[0].mxu0
  %v2282 = vpop.f32.mrb[0].mxu0
  %v2283 = vpop.f32.mrb[0].mxu0
  %2284 = vdwg.mxu0
  %v2285 = vmax.f32 %v2280, 0.0
  %v2286 = vpack.c.bf16 %v2285, %v2285
  %v2287 = vld [vmem:[%s4] sm:$0xf]
  %v2288 = vld [vmem:[%s4 + $0x4] sm:$0xf]
  %v2289 = vld [vmem:[%s4 + $0x8] sm:$0xf]
  %v2290 = vld [vmem:[%s4 + $0xc] sm:$0xf]
  %v2291 = vld [vmem:[%s4 + $0x10] sm:$0xf]
  %v2292 = vld [vmem:[%s4 + $0x14] sm:$0xf]
  %v2293 = vld [vmem:[%s4 + $0x18] sm:$0xf]
  %v2294 = vld [vmem:[%s4 + $0x1c] sm:$0xf]
  %v2295 = vld [vmem:[%s4 + $0x20] sm:$0xf]
  %v2296 = vld [vmem:[%s4 + $0x24] sm:$0xf]
  %v2297 = vld [vmem:[%s4 + $0x28] sm:$0xf]
  %v2298 = vld [vmem:[%s4 + $0x2c] sm:$0xf]
  %v2299 = vld [vmem:[%s4 + $0x30] sm:$0xf]
  %v2300 = vld [vmem:[%s4 + $0x34] sm:$0xf]
  %v2301 = vld [vmem:[%s4 + $0x38] sm:$0xf]
  %v2302 = vld [vmem:[%s4 + $0x3c] sm:$0xf]
  %v2303 = vld [vmem:[%s5] sm:$0x1]
  %v2305 = vlaneseq
  %v2306 = vshrl.u32 %v2305, 7
  %v2307 = vsub.s32 0, %v2306
  %v2308 = vrot.slane %v2303, %v2307
  %v2326 = vunpack.c.l.b16 %v2287
  %v2327 = vunpack.c.l.b16 %v2288
  %v2328 = vunpack.c.l.b16 %v2289
  %v2329 = vunpack.c.l.b16 %v2290
  %v2330 = vunpack.c.l.b16 %v2291
  %v2331 = vunpack.c.l.b16 %v2292
  %v2332 = vunpack.c.l.b16 %v2293
  %v2333 = vunpack.c.l.b16 %v2294
  %v2334 = vunpack.c.l.b16 %v2295
  %v2335 = vunpack.c.l.b16 %v2296
  %v2336 = vunpack.c.l.b16 %v2297
  %v2337 = vunpack.c.l.b16 %v2298
  %v2338 = vunpack.c.l.b16 %v2299
  %v2339 = vunpack.c.l.b16 %v2300
  %v2340 = vunpack.c.l.b16 %v2301
  %v2341 = vunpack.c.l.b16 %v2302
  %v2342 = vpack.c.b16 %v2327, %v2326
  %v2343 = vpack.c.b16 %v2329, %v2328
  %v2344 = vpack.c.b16 %v2331, %v2330
  %v2345 = vpack.c.b16 %v2333, %v2332
  %v2346 = vpack.c.b16 %v2335, %v2334
  %v2347 = vpack.c.b16 %v2337, %v2336
  %v2348 = vpack.c.b16 %v2339, %v2338
  %v2349 = vpack.c.b16 %v2341, %v2340
  %2358 = vmatprep.subr.bf16.mxu0 0
  %2359 = vmatpush1.bf16.msra.mxu0 %v2342
  %2360 = vmatprep.subr.bf16.mxu0 0
  %2361 = vmatpush1.bf16.msra.mxu0 %v2343
  %2362 = vmatprep.subr.bf16.mxu0 0
  %2363 = vmatpush1.bf16.msra.mxu0 %v2344
  %2364 = vmatprep.subr.bf16.mxu0 0
  %2365 = vmatpush1.bf16.msra.mxu0 %v2345
  %2366 = vmatprep.subr.bf16.mxu0 0
  %2367 = vmatpush1.bf16.msra.mxu0 %v2346
  %2368 = vmatprep.subr.bf16.mxu0 0
  %2369 = vmatpush1.bf16.msra.mxu0 %v2347
  %2370 = vmatprep.subr.bf16.mxu0 0
  %2371 = vmatpush1.bf16.msra.mxu0 %v2348
  %2372 = vmatprep.subr.bf16.mxu0 0
  %2373 = vmatpush1.bf16.msra.mxu0 %v2349
  %2374 = vmatprep.subr.bf16.mxu0 0
  %2375 = vmatpush1.bf16.msra.mxu0 0
  %2376 = vmatprep.subr.bf16.mxu0 0
  %2377 = vmatpush1.bf16.msra.mxu0 0
  %2378 = vmatprep.subr.bf16.mxu0 0
  %2379 = vmatpush1.bf16.msra.mxu0 0
  %2380 = vmatprep.subr.bf16.mxu0 0
  %2381 = vmatpush1.bf16.msra.mxu0 0
  %2382 = vmatprep.subr.bf16.mxu0 0
  %2383 = vmatpush1.bf16.msra.mxu0 0
  %2384 = vmatprep.subr.bf16.mxu0 0
  %2385 = vmatpush1.bf16.msra.mxu0 0
  %2386 = vmatprep.subr.bf16.mxu0 0
  %2387 = vmatpush1.bf16.msra.mxu0 0
  %2388 = vmatprep.subr.bf16.mxu0 0
  %2389 = vmatpush1.bf16.msra.mxu0 0
  %2390 = vmatprep.mubr.bf16.mxu0 0
  %2391 = vmatmul.mubr.bf16.gmra.mrb[0].mxu0 %v2286
  %v2392 = vpop.f32.mrb[0].mxu0
  %v2393 = vadd.f32 %v2308, %v2392
  %v2394 = vpop.f32.mrb[0].mxu0
  %v2395 = vpop.f32.mrb[0].mxu0
  %v2396 = vpop.f32.mrb[0].mxu0
  %2397 = vdwg.mxu0
  %v2398 = vmax.f32 %v2393, 0.0
  %v2399 = vpack.c.bf16 %v2398, %v2398
  %v2400 = vld [vmem:[%s6] sm:$0xf]
  %v2401 = vld [vmem:[%s6 + $0x4] sm:$0xf]
  %v2402 = vld [vmem:[%s6 + $0x8] sm:$0xf]
  %v2403 = vld [vmem:[%s6 + $0xc] sm:$0xf]
  %v2404 = vld [vmem:[%s6 + $0x10] sm:$0xf]
  %v2405 = vld [vmem:[%s6 + $0x14] sm:$0xf]
  %v2406 = vld [vmem:[%s6 + $0x18] sm:$0xf]
  %v2407 = vld [vmem:[%s6 + $0x1c] sm:$0xf]
  %v2408 = vld [vmem:[%s6 + $0x20] sm:$0xf]
  %v2409 = vld [vmem:[%s6 + $0x24] sm:$0xf]
  %v2410 = vld [vmem:[%s6 + $0x28] sm:$0xf]
  %v2411 = vld [vmem:[%s6 + $0x2c] sm:$0xf]
  %v2412 = vld [vmem:[%s6 + $0x30] sm:$0xf]
  %v2413 = vld [vmem:[%s6 + $0x34] sm:$0xf]
  %v2414 = vld [vmem:[%s6 + $0x38] sm:$0xf]
  %v2415 = vld [vmem:[%s6 + $0x3c] sm:$0xf]
  %v2416 = vld [vmem:[%s7] sm:$0x1]
  %v2418 = vlaneseq
  %v2419 = vshrl.u32 %v2418, 7
  %v2420 = vsub.s32 0, %v2419
  %v2421 = vrot.slane %v2416, %v2420
  %v2439 = vunpack.c.l.b16 %v2400
  %v2440 = vunpack.c.l.b16 %v2401
  %v2441 = vunpack.c.l.b16 %v2402
  %v2442 = vunpack.c.l.b16 %v2403
  %v2443 = vunpack.c.l.b16 %v2404
  %v2444 = vunpack.c.l.b16 %v2405
  %v2445 = vunpack.c.l.b16 %v2406
  %v2446 = vunpack.c.l.b16 %v2407
  %v2447 = vunpack.c.l.b16 %v2408
  %v2448 = vunpack.c.l.b16 %v2409
  %v2449 = vunpack.c.l.b16 %v2410
  %v2450 = vunpack.c.l.b16 %v2411
  %v2451 = vunpack.c.l.b16 %v2412
  %v2452 = vunpack.c.l.b16 %v2413
  %v2453 = vunpack.c.l.b16 %v2414
  %v2454 = vunpack.c.l.b16 %v2415
  %v2455 = vpack.c.b16 %v2440, %v2439
  %v2456 = vpack.c.b16 %v2442, %v2441
  %v2457 = vpack.c.b16 %v2444, %v2443
  %v2458 = vpack.c.b16 %v2446, %v2445
  %v2459 = vpack.c.b16 %v2448, %v2447
  %v2460 = vpack.c.b16 %v2450, %v2449
  %v2461 = vpack.c.b16 %v2452, %v2451
  %v2462 = vpack.c.b16 %v2454, %v2453
  %2471 = vmatprep.subr.bf16.mxu0 0
  %2472 = vmatpush1.bf16.msra.mxu0 %v2455
  %2473 = vmatprep.subr.bf16.mxu0 0
  %2474 = vmatpush1.bf16.msra.mxu0 %v2456
  %2475 = vmatprep.subr.bf16.mxu0 0
  %2476 = vmatpush1.bf16.msra.mxu0 %v2457
  %2477 = vmatprep.subr.bf16.mxu0 0
  %2478 = vmatpush1.bf16.msra.mxu0 %v2458
  %2479 = vmatprep.subr.bf16.mxu0 0
  %2480 = vmatpush1.bf16.msra.mxu0 %v2459
  %2481 = vmatprep.subr.bf16.mxu0 0
  %2482 = vmatpush1.bf16.msra.mxu0 %v2460
  %2483 = vmatprep.subr.bf16.mxu0 0
  %2484 = vmatpush1.bf16.msra.mxu0 %v2461
  %2485 = vmatprep.subr.bf16.mxu0 0
  %2486 = vmatpush1.bf16.msra.mxu0 %v2462
  %2487 = vmatprep.subr.bf16.mxu0 0
  %2488 = vmatpush1.bf16.msra.mxu0 0
  %2489 = vmatprep.subr.bf16.mxu0 0
  %2490 = vmatpush1.bf16.msra.mxu0 0
  %2491 = vmatprep.subr.bf16.mxu0 0
  %2492 = vmatpush1.bf16.msra.mxu0 0
  %2493 = vmatprep.subr.bf16.mxu0 0
  %2494 = vmatpush1.bf16.msra.mxu0 0
  %2495 = vmatprep.subr.bf16.mxu0 0
  %2496 = vmatpush1.bf16.msra.mxu0 0
  %2497 = vmatprep.subr.bf16.mxu0 0
  %2498 = vmatpush1.bf16.msra.mxu0 0
  %2499 = vmatprep.subr.bf16.mxu0 0
  %2500 = vmatpush1.bf16.msra.mxu0 0
  %2501 = vmatprep.subr.bf16.mxu0 0
  %2502 = vmatpush1.bf16.msra.mxu0 0
  %2503 = vmatprep.mubr.bf16.mxu0 0
  %2504 = vmatmul.mubr.bf16.gmra.mrb[0].mxu0 %v2399
  %v2505 = vpop.f32.mrb[0].mxu0
  %v2506 = vadd.f32 %v2421, %v2505
  %v2507 = vpop.f32.mrb[0].mxu0
  %v2508 = vpop.f32.mrb[0].mxu0
  %v2509 = vpop.f32.mrb[0].mxu0
  %2510 = vdwg.mxu0
  %v2511 = vmax.f32 %v2506, 0.0
  %v2512 = vld [vmem:[%s1] sm:$0xff]
  %v2513 = vpack.c.bf16 %v2512, %v2512
  %v2514 = vld [vmem:[%s8] sm:$0xf]
  %v2515 = vld [vmem:[%s8 + $0x4] sm:$0xf]
  %v2516 = vld [vmem:[%s8 + $0x8] sm:$0xf]
  %v2517 = vld [vmem:[%s8 + $0xc] sm:$0xf]
  %v2518 = vld [vmem:[%s8 + $0x10] sm:$0xf]
  %v2519 = vld [vmem:[%s8 + $0x14] sm:$0xf]
  %v2520 = vld [vmem:[%s8 + $0x18] sm:$0xf]
  %v2521 = vld [vmem:[%s8 + $0x1c] sm:$0xf]
  %v2522 = vld [vmem:[%s8 + $0x20] sm:$0xf]
  %v2523 = vld [vmem:[%s8 + $0x24] sm:$0xf]
  %v2524 = vld [vmem:[%s8 + $0x28] sm:$0xf]
  %v2525 = vld [vmem:[%s8 + $0x2c] sm:$0xf]
  %v2526 = vld [vmem:[%s8 + $0x30] sm:$0xf]
  %v2527 = vld [vmem:[%s8 + $0x34] sm:$0xf]
  %v2528 = vld [vmem:[%s8 + $0x38] sm:$0xf]
  %v2529 = vld [vmem:[%s8 + $0x3c] sm:$0xf]
  %v2530 = vld [vmem:[%s9] sm:$0x1]
  %v2532 = vlaneseq
  %v2533 = vshrl.u32 %v2532, 7
  %v2534 = vsub.s32 0, %v2533
  %v2535 = vrot.slane %v2530, %v2534
  %v2553 = vunpack.c.l.b16 %v2514
  %v2554 = vunpack.c.l.b16 %v2515
  %v2555 = vunpack.c.l.b16 %v2516
  %v2556 = vunpack.c.l.b16 %v2517
  %v2557 = vunpack.c.l.b16 %v2518
  %v2558 = vunpack.c.l.b16 %v2519
  %v2559 = vunpack.c.l.b16 %v2520
  %v2560 = vunpack.c.l.b16 %v2521
  %v2561 = vunpack.c.l.b16 %v2522
  %v2562 = vunpack.c.l.b16 %v2523
  %v2563 = vunpack.c.l.b16 %v2524
  %v2564 = vunpack.c.l.b16 %v2525
  %v2565 = vunpack.c.l.b16 %v2526
  %v2566 = vunpack.c.l.b16 %v2527
  %v2567 = vunpack.c.l.b16 %v2528
  %v2568 = vunpack.c.l.b16 %v2529
  %v2569 = vpack.c.b16 %v2554, %v2553
  %v2570 = vpack.c.b16 %v2556, %v2555
  %v2571 = vpack.c.b16 %v2558, %v2557
  %v2572 = vpack.c.b16 %v2560, %v2559
  %v2573 = vpack.c.b16 %v2562, %v2561
  %v2574 = vpack.c.b16 %v2564, %v2563
  %v2575 = vpack.c.b16 %v2566, %v2565
  %v2576 = vpack.c.b16 %v2568, %v2567
  %2585 = vmatprep.subr.bf16.mxu0 0
  %2586 = vmatpush1.bf16.msra.mxu0 %v2569
  %2587 = vmatprep.subr.bf16.mxu0 0
  %2588 = vmatpush1.bf16.msra.mxu0 %v2570
  %2589 = vmatprep.subr.bf16.mxu0 0
  %2590 = vmatpush1.bf16.msra.mxu0 %v2571
  %2591 = vmatprep.subr.bf16.mxu0 0
  %2592 = vmatpush1.bf16.msra.mxu0 %v2572
  %2593 = vmatprep.subr.bf16.mxu0 0
  %2594 = vmatpush1.bf16.msra.mxu0 %v2573
  %2595 = vmatprep.subr.bf16.mxu0 0
  %2596 = vmatpush1.bf16.msra.mxu0 %v2574
  %2597 = vmatprep.subr.bf16.mxu0 0
  %2598 = vmatpush1.bf16.msra.mxu0 %v2575
  %2599 = vmatprep.subr.bf16.mxu0 0
  %2600 = vmatpush1.bf16.msra.mxu0 %v2576
  %2601 = vmatprep.subr.bf16.mxu0 0
  %2602 = vmatpush1.bf16.msra.mxu0 0
  %2603 = vmatprep.subr.bf16.mxu0 0
  %2604 = vmatpush1.bf16.msra.mxu0 0
  %2605 = vmatprep.subr.bf16.mxu0 0
  %2606 = vmatpush1.bf16.msra.mxu0 0
  %2607 = vmatprep.subr.bf16.mxu0 0
  %2608 = vmatpush1.bf16.msra.mxu0 0
  %2609 = vmatprep.subr.bf16.mxu0 0
  %2610 = vmatpush1.bf16.msra.mxu0 0
  %2611 = vmatprep.subr.bf16.mxu0 0
  %2612 = vmatpush1.bf16.msra.mxu0 0
  %2613 = vmatprep.subr.bf16.mxu0 0
  %2614 = vmatpush1.bf16.msra.mxu0 0
  %2615 = vmatprep.subr.bf16.mxu0 0
  %2616 = vmatpush1.bf16.msra.mxu0 0
  %2617 = vmatprep.mubr.bf16.mxu0 0
  %2618 = vmatmul.mubr.bf16.gmra.mrb[0].mxu0 %v2513
  %v2619 = vpop.f32.mrb[0].mxu0
  %v2620 = vadd.f32 %v2535, %v2619
  %v2621 = vpop.f32.mrb[0].mxu0
  %v2622 = vpop.f32.mrb[0].mxu0
  %v2623 = vpop.f32.mrb[0].mxu0
  %2624 = vdwg.mxu0
  %v2625 = vmax.f32 %v2620, 0.0
  %v2626 = vpack.c.bf16 %v2625, %v2625
  %v2627 = vld [vmem:[%s10] sm:$0xf]
  %v2628 = vld [vmem:[%s10 + $0x4] sm:$0xf]
  %v2629 = vld [vmem:[%s10 + $0x8] sm:$0xf]
  %v2630 = vld [vmem:[%s10 + $0xc] sm:$0xf]
  %v2631 = vld [vmem:[%s10 + $0x10] sm:$0xf]
  %v2632 = vld [vmem:[%s10 + $0x14] sm:$0xf]
  %v2633 = vld [vmem:[%s10 + $0x18] sm:$0xf]
  %v2634 = vld [vmem:[%s10 + $0x1c] sm:$0xf]
  %v2635 = vld [vmem:[%s10 + $0x20] sm:$0xf]
  %v2636 = vld [vmem:[%s10 + $0x24] sm:$0xf]
  %v2637 = vld [vmem:[%s10 + $0x28] sm:$0xf]
  %v2638 = vld [vmem:[%s10 + $0x2c] sm:$0xf]
  %v2639 = vld [vmem:[%s10 + $0x30] sm:$0xf]
  %v2640 = vld [vmem:[%s10 + $0x34] sm:$0xf]
  %v2641 = vld [vmem:[%s10 + $0x38] sm:$0xf]
  %v2642 = vld [vmem:[%s10 + $0x3c] sm:$0xf]
  %v2643 = vld [vmem:[%s11] sm:$0x1]
  %v2645 = vlaneseq
  %v2646 = vshrl.u32 %v2645, 7
  %v2647 = vsub.s32 0, %v2646
  %v2648 = vrot.slane %v2643, %v2647
  %v2666 = vunpack.c.l.b16 %v2627
  %v2667 = vunpack.c.l.b16 %v2628
  %v2668 = vunpack.c.l.b16 %v2629
  %v2669 = vunpack.c.l.b16 %v2630
  %v2670 = vunpack.c.l.b16 %v2631
  %v2671 = vunpack.c.l.b16 %v2632
  %v2672 = vunpack.c.l.b16 %v2633
  %v2673 = vunpack.c.l.b16 %v2634
  %v2674 = vunpack.c.l.b16 %v2635
  %v2675 = vunpack.c.l.b16 %v2636
  %v2676 = vunpack.c.l.b16 %v2637
  %v2677 = vunpack.c.l.b16 %v2638
  %v2678 = vunpack.c.l.b16 %v2639
  %v2679 = vunpack.c.l.b16 %v2640
  %v2680 = vunpack.c.l.b16 %v2641
  %v2681 = vunpack.c.l.b16 %v2642
  %v2682 = vpack.c.b16 %v2667, %v2666
  %v2683 = vpack.c.b16 %v2669, %v2668
  %v2684 = vpack.c.b16 %v2671, %v2670
  %v2685 = vpack.c.b16 %v2673, %v2672
  %v2686 = vpack.c.b16 %v2675, %v2674
  %v2687 = vpack.c.b16 %v2677, %v2676
  %v2688 = vpack.c.b16 %v2679, %v2678
  %v2689 = vpack.c.b16 %v2681, %v2680
  %2698 = vmatprep.subr.bf16.mxu0 0
  %2699 = vmatpush1.bf16.msra.mxu0 %v2682
  %2700 = vmatprep.subr.bf16.mxu0 0
  %2701 = vmatpush1.bf16.msra.mxu0 %v2683
  %2702 = vmatprep.subr.bf16.mxu0 0
  %2703 = vmatpush1.bf16.msra.mxu0 %v2684
  %2704 = vmatprep.subr.bf16.mxu0 0
  %2705 = vmatpush1.bf16.msra.mxu0 %v2685
  %2706 = vmatprep.subr.bf16.mxu0 0
  %2707 = vmatpush1.bf16.msra.mxu0 %v2686
  %2708 = vmatprep.subr.bf16.mxu0 0
  %2709 = vmatpush1.bf16.msra.mxu0 %v2687
  %2710 = vmatprep.subr.bf16.mxu0 0
  %2711 = vmatpush1.bf16.msra.mxu0 %v2688
  %2712 = vmatprep.subr.bf16.mxu0 0
  %2713 = vmatpush1.bf16.msra.mxu0 %v2689
  %2714 = vmatprep.subr.bf16.mxu0 0
  %2715 = vmatpush1.bf16.msra.mxu0 0
  %2716 = vmatprep.subr.bf16.mxu0 0
  %2717 = vmatpush1.bf16.msra.mxu0 0
  %2718 = vmatprep.subr.bf16.mxu0 0
  %2719 = vmatpush1.bf16.msra.mxu0 0
  %2720 = vmatprep.subr.bf16.mxu0 0
  %2721 = vmatpush1.bf16.msra.mxu0 0
  %2722 = vmatprep.subr.bf16.mxu0 0
  %2723 = vmatpush1.bf16.msra.mxu0 0
  %2724 = vmatprep.subr.bf16.mxu0 0
  %2725 = vmatpush1.bf16.msra.mxu0 0
  %2726 = vmatprep.subr.bf16.mxu0 0
  %2727 = vmatpush1.bf16.msra.mxu0 0
  %2728 = vmatprep.subr.bf16.mxu0 0
  %2729 = vmatpush1.bf16.msra.mxu0 0
  %2730 = vmatprep.mubr.bf16.mxu0 0
  %2731 = vmatmul.mubr.bf16.gmra.mrb[0].mxu0 %v2626
  %v2732 = vpop.f32.mrb[0].mxu0
  %v2733 = vadd.f32 %v2648, %v2732
  %v2734 = vpop.f32.mrb[0].mxu0
  %v2735 = vpop.f32.mrb[0].mxu0
  %v2736 = vpop.f32.mrb[0].mxu0
  %2737 = vdwg.mxu0
  %v2738 = vmax.f32 %v2733, 0.0
  %v2739 = vpack.c.bf16 %v2511, %v2511
  %v2740 = vld [vmem:[%s12] sm:$0xf]
  %v2741 = vld [vmem:[%s12 + $0x4] sm:$0xf]
  %v2742 = vld [vmem:[%s12 + $0x8] sm:$0xf]
  %v2743 = vld [vmem:[%s12 + $0xc] sm:$0xf]
  %v2744 = vld [vmem:[%s12 + $0x10] sm:$0xf]
  %v2745 = vld [vmem:[%s12 + $0x14] sm:$0xf]
  %v2746 = vld [vmem:[%s12 + $0x18] sm:$0xf]
  %v2747 = vld [vmem:[%s12 + $0x1c] sm:$0xf]
  %v2748 = vld [vmem:[%s12 + $0x20] sm:$0xf]
  %v2749 = vld [vmem:[%s12 + $0x24] sm:$0xf]
  %v2750 = vld [vmem:[%s12 + $0x28] sm:$0xf]
  %v2751 = vld [vmem:[%s12 + $0x2c] sm:$0xf]
  %v2752 = vld [vmem:[%s12 + $0x30] sm:$0xf]
  %v2753 = vld [vmem:[%s12 + $0x34] sm:$0xf]
  %v2754 = vld [vmem:[%s12 + $0x38] sm:$0xf]
  %v2755 = vld [vmem:[%s12 + $0x3c] sm:$0xf]
  %v2756 = vpack.c.bf16 %v2738, %v2738
  %v2757 = vld [vmem:[%s13] sm:$0xf]
  %v2758 = vld [vmem:[%s13 + $0x4] sm:$0xf]
  %v2759 = vld [vmem:[%s13 + $0x8] sm:$0xf]
  %v2760 = vld [vmem:[%s13 + $0xc] sm:$0xf]
  %v2761 = vld [vmem:[%s13 + $0x10] sm:$0xf]
  %v2762 = vld [vmem:[%s13 + $0x14] sm:$0xf]
  %v2763 = vld [vmem:[%s13 + $0x18] sm:$0xf]
  %v2764 = vld [vmem:[%s13 + $0x1c] sm:$0xf]
  %v2765 = vld [vmem:[%s13 + $0x20] sm:$0xf]
  %v2766 = vld [vmem:[%s13 + $0x24] sm:$0xf]
  %v2767 = vld [vmem:[%s13 + $0x28] sm:$0xf]
  %v2768 = vld [vmem:[%s13 + $0x2c] sm:$0xf]
  %v2769 = vld [vmem:[%s13 + $0x30] sm:$0xf]
  %v2770 = vld [vmem:[%s13 + $0x34] sm:$0xf]
  %v2771 = vld [vmem:[%s13 + $0x38] sm:$0xf]
  %v2772 = vld [vmem:[%s13 + $0x3c] sm:$0xf]
  %v2789 = vunpack.c.l.b16 %v2757
  %v2790 = vunpack.c.l.b16 %v2758
  %v2791 = vunpack.c.l.b16 %v2759
  %v2792 = vunpack.c.l.b16 %v2760
  %v2793 = vunpack.c.l.b16 %v2761
  %v2794 = vunpack.c.l.b16 %v2762
  %v2795 = vunpack.c.l.b16 %v2763
  %v2796 = vunpack.c.l.b16 %v2764
  %v2797 = vunpack.c.l.b16 %v2765
  %v2798 = vunpack.c.l.b16 %v2766
  %v2799 = vunpack.c.l.b16 %v2767
  %v2800 = vunpack.c.l.b16 %v2768
  %v2801 = vunpack.c.l.b16 %v2769
  %v2802 = vunpack.c.l.b16 %v2770
  %v2803 = vunpack.c.l.b16 %v2771
  %v2804 = vunpack.c.l.b16 %v2772
  %v2805 = vpack.c.b16 %v2790, %v2789
  %v2806 = vpack.c.b16 %v2792, %v2791
  %v2807 = vpack.c.b16 %v2794, %v2793
  %v2808 = vpack.c.b16 %v2796, %v2795
  %v2809 = vpack.c.b16 %v2798, %v2797
  %v2810 = vpack.c.b16 %v2800, %v2799
  %v2811 = vpack.c.b16 %v2802, %v2801
  %v2812 = vpack.c.b16 %v2804, %v2803
  %2821 = vmatprep.subr.bf16.mxu0 0
  %2822 = vmatpush1.bf16.msra.mxu0 %v2805
  %2823 = vmatprep.subr.bf16.mxu0 0
  %2824 = vmatpush1.bf16.msra.mxu0 %v2806
  %2825 = vmatprep.subr.bf16.mxu0 0
  %2826 = vmatpush1.bf16.msra.mxu0 %v2807
  %2827 = vmatprep.subr.bf16.mxu0 0
  %2828 = vmatpush1.bf16.msra.mxu0 %v2808
  %2829 = vmatprep.subr.bf16.mxu0 0
  %2830 = vmatpush1.bf16.msra.mxu0 %v2809
  %2831 = vmatprep.subr.bf16.mxu0 0
  %2832 = vmatpush1.bf16.msra.mxu0 %v2810
  %2833 = vmatprep.subr.bf16.mxu0 0
  %2834 = vmatpush1.bf16.msra.mxu0 %v2811
  %2835 = vmatprep.subr.bf16.mxu0 0
  %2836 = vmatpush1.bf16.msra.mxu0 %v2812
  %2837 = vmatprep.subr.bf16.mxu0 0
  %2838 = vmatpush1.bf16.msra.mxu0 0
  %2839 = vmatprep.subr.bf16.mxu0 0
  %2840 = vmatpush1.bf16.msra.mxu0 0
  %2841 = vmatprep.subr.bf16.mxu0 0
  %2842 = vmatpush1.bf16.msra.mxu0 0
  %2843 = vmatprep.subr.bf16.mxu0 0
  %2844 = vmatpush1.bf16.msra.mxu0 0
  %2845 = vmatprep.subr.bf16.mxu0 0
  %2846 = vmatpush1.bf16.msra.mxu0 0
  %2847 = vmatprep.subr.bf16.mxu0 0
  %2848 = vmatpush1.bf16.msra.mxu0 0
  %2849 = vmatprep.subr.bf16.mxu0 0
  %2850 = vmatpush1.bf16.msra.mxu0 0
  %2851 = vmatprep.subr.bf16.mxu0 0
  %2852 = vmatpush1.bf16.msra.mxu0 0
  %2853 = vmatprep.mubr.bf16.mxu0 0
  %2854 = vmatmul.mubr.bf16.gmra.mrb[0].mxu0 %v2756
  %v2855 = vpop.f32.mrb[0].mxu0
  %v2856 = vadd.f32 0.0, %v2855
  %v2857 = vpop.f32.mrb[0].mxu0
  %v2858 = vpop.f32.mrb[0].mxu0
  %v2859 = vpop.f32.mrb[0].mxu0
  %2860 = vdwg.mxu0
  %v2877 = vunpack.c.l.b16 %v2740
  %v2878 = vunpack.c.l.b16 %v2741
  %v2879 = vunpack.c.l.b16 %v2742
  %v2880 = vunpack.c.l.b16 %v2743
  %v2881 = vunpack.c.l.b16 %v2744
  %v2882 = vunpack.c.l.b16 %v2745
  %v2883 = vunpack.c.l.b16 %v2746
  %v2884 = vunpack.c.l.b16 %v2747
  %v2885 = vunpack.c.l.b16 %v2748
  %v2886 = vunpack.c.l.b16 %v2749
  %v2887 = vunpack.c.l.b16 %v2750
  %v2888 = vunpack.c.l.b16 %v2751
  %v2889 = vunpack.c.l.b16 %v2752
  %v2890 = vunpack.c.l.b16 %v2753
  %v2891 = vunpack.c.l.b16 %v2754
  %v2892 = vunpack.c.l.b16 %v2755
  %v2893 = vpack.c.b16 %v2878, %v2877
  %v2894 = vpack.c.b16 %v2880, %v2879
  %v2895 = vpack.c.b16 %v2882, %v2881
  %v2896 = vpack.c.b16 %v2884, %v2883
  %v2897 = vpack.c.b16 %v2886, %v2885
  %v2898 = vpack.c.b16 %v2888, %v2887
  %v2899 = vpack.c.b16 %v2890, %v2889
  %v2900 = vpack.c.b16 %v2892, %v2891
  %2909 = vmatprep.subr.bf16.mxu0 0
  %2910 = vmatpush1.bf16.msra.mxu0 %v2893
  %2911 = vmatprep.subr.bf16.mxu0 0
  %2912 = vmatpush1.bf16.msra.mxu0 %v2894
  %2913 = vmatprep.subr.bf16.mxu0 0
  %2914 = vmatpush1.bf16.msra.mxu0 %v2895
  %2915 = vmatprep.subr.bf16.mxu0 0
  %2916 = vmatpush1.bf16.msra.mxu0 %v2896
  %2917 = vmatprep.subr.bf16.mxu0 0
  %2918 = vmatpush1.bf16.msra.mxu0 %v2897
  %2919 = vmatprep.subr.bf16.mxu0 0
  %2920 = vmatpush1.bf16.msra.mxu0 %v2898
  %2921 = vmatprep.subr.bf16.mxu0 0
  %2922 = vmatpush1.bf16.msra.mxu0 %v2899
  %2923 = vmatprep.subr.bf16.mxu0 0
  %2924 = vmatpush1.bf16.msra.mxu0 %v2900
  %2925 = vmatprep.subr.bf16.mxu0 0
  %2926 = vmatpush1.bf16.msra.mxu0 0
  %2927 = vmatprep.subr.bf16.mxu0 0
  %2928 = vmatpush1.bf16.msra.mxu0 0
  %2929 = vmatprep.subr.bf16.mxu0 0
  %2930 = vmatpush1.bf16.msra.mxu0 0
  %2931 = vmatprep.subr.bf16.mxu0 0
  %2932 = vmatpush1.bf16.msra.mxu0 0
  %2933 = vmatprep.subr.bf16.mxu0 0
  %2934 = vmatpush1.bf16.msra.mxu0 0
  %2935 = vmatprep.subr.bf16.mxu0 0
  %2936 = vmatpush1.bf16.msra.mxu0 0
  %2937 = vmatprep.subr.bf16.mxu0 0
  %2938 = vmatpush1.bf16.msra.mxu0 0
  %2939 = vmatprep.subr.bf16.mxu0 0
  %2940 = vmatpush1.bf16.msra.mxu0 0
  %2941 = vmatprep.mubr.bf16.mxu0 0
  %2942 = vmatmul.mubr.bf16.gmra.mrb[0].mxu0 %v2739
  %v2943 = vpop.f32.mrb[0].mxu0
  %v2944 = vadd.f32 %v2856, %v2943
  %v2945 = vpop.f32.mrb[0].mxu0
  %v2946 = vpop.f32.mrb[0].mxu0
  %v2947 = vpop.f32.mrb[0].mxu0
  %2948 = vdwg.mxu0
  %v2949 = vld [vmem:[%s14] sm:$0x1]
  %v2951 = vlaneseq
  %v2952 = vshrl.u32 %v2951, 7
  %v2953 = vsub.s32 0, %v2952
  %v2954 = vrot.slane %v2949, %v2953
  %v2956 = vadd.f32 %v2944, %v2954
  %v2957 = vmax.f32 %v2956, 0.0
  %v2958 = vpack.c.bf16 %v2957, %v2957
  %v2959 = vld [vmem:[%s15] sm:$0xf]
  %v2960 = vld [vmem:[%s15 + $0x4] sm:$0xf]
  %v2961 = vld [vmem:[%s15 + $0x8] sm:$0xf]
  %v2962 = vld [vmem:[%s15 + $0xc] sm:$0xf]
  %v2963 = vld [vmem:[%s15 + $0x10] sm:$0xf]
  %v2964 = vld [vmem:[%s15 + $0x14] sm:$0xf]
  %v2965 = vld [vmem:[%s15 + $0x18] sm:$0xf]
  %v2966 = vld [vmem:[%s15 + $0x1c] sm:$0xf]
  %v2967 = vld [vmem:[%s15 + $0x20] sm:$0xf]
  %v2968 = vld [vmem:[%s15 + $0x24] sm:$0xf]
  %v2969 = vld [vmem:[%s15 + $0x28] sm:$0xf]
  %v2970 = vld [vmem:[%s15 + $0x2c] sm:$0xf]
  %v2971 = vld [vmem:[%s15 + $0x30] sm:$0xf]
  %v2972 = vld [vmem:[%s15 + $0x34] sm:$0xf]
  %v2973 = vld [vmem:[%s15 + $0x38] sm:$0xf]
  %v2974 = vld [vmem:[%s15 + $0x3c] sm:$0xf]
  %v2975 = vld [vmem:[%s16] sm:$0x1]
  %v2977 = vlaneseq
  %v2978 = vshrl.u32 %v2977, 7
  %v2979 = vsub.s32 0, %v2978
  %v2980 = vrot.slane %v2975, %v2979
  %v2998 = vunpack.c.l.b16 %v2959
  %v2999 = vunpack.c.l.b16 %v2960
  %v3000 = vunpack.c.l.b16 %v2961
  %v3001 = vunpack.c.l.b16 %v2962
  %v3002 = vunpack.c.l.b16 %v2963
  %v3003 = vunpack.c.l.b16 %v2964
  %v3004 = vunpack.c.l.b16 %v2965
  %v3005 = vunpack.c.l.b16 %v2966
  %v3006 = vunpack.c.l.b16 %v2967
  %v3007 = vunpack.c.l.b16 %v2968
  %v3008 = vunpack.c.l.b16 %v2969
  %v3009 = vunpack.c.l.b16 %v2970
  %v3010 = vunpack.c.l.b16 %v2971
  %v3011 = vunpack.c.l.b16 %v2972
  %v3012 = vunpack.c.l.b16 %v2973
  %v3013 = vunpack.c.l.b16 %v2974
  %v3014 = vpack.c.b16 %v2999, %v2998
  %v3015 = vpack.c.b16 %v3001, %v3000
  %v3016 = vpack.c.b16 %v3003, %v3002
  %v3017 = vpack.c.b16 %v3005, %v3004
  %v3018 = vpack.c.b16 %v3007, %v3006
  %v3019 = vpack.c.b16 %v3009, %v3008
  %v3020 = vpack.c.b16 %v3011, %v3010
  %v3021 = vpack.c.b16 %v3013, %v3012
  %3030 = vmatprep.subr.bf16.mxu0 0
  %3031 = vmatpush1.bf16.msra.mxu0 %v3014
  %3032 = vmatprep.subr.bf16.mxu0 0
  %3033 = vmatpush1.bf16.msra.mxu0 %v3015
  %3034 = vmatprep.subr.bf16.mxu0 0
  %3035 = vmatpush1.bf16.msra.mxu0 %v3016
  %3036 = vmatprep.subr.bf16.mxu0 0
  %3037 = vmatpush1.bf16.msra.mxu0 %v3017
  %3038 = vmatprep.subr.bf16.mxu0 0
  %3039 = vmatpush1.bf16.msra.mxu0 %v3018
  %3040 = vmatprep.subr.bf16.mxu0 0
  %3041 = vmatpush1.bf16.msra.mxu0 %v3019
  %3042 = vmatprep.subr.bf16.mxu0 0
  %3043 = vmatpush1.bf16.msra.mxu0 %v3020
  %3044 = vmatprep.subr.bf16.mxu0 0
  %3045 = vmatpush1.bf16.msra.mxu0 %v3021
  %3046 = vmatprep.subr.bf16.mxu0 0
  %3047 = vmatpush1.bf16.msra.mxu0 0
  %3048 = vmatprep.subr.bf16.mxu0 0
  %3049 = vmatpush1.bf16.msra.mxu0 0
  %3050 = vmatprep.subr.bf16.mxu0 0
  %3051 = vmatpush1.bf16.msra.mxu0 0
  %3052 = vmatprep.subr.bf16.mxu0 0
  %3053 = vmatpush1.bf16.msra.mxu0 0
  %3054 = vmatprep.subr.bf16.mxu0 0
  %3055 = vmatpush1.bf16.msra.mxu0 0
  %3056 = vmatprep.subr.bf16.mxu0 0
  %3057 = vmatpush1.bf16.msra.mxu0 0
  %3058 = vmatprep.subr.bf16.mxu0 0
  %3059 = vmatpush1.bf16.msra.mxu0 0
  %3060 = vmatprep.subr.bf16.mxu0 0
  %3061 = vmatpush1.bf16.msra.mxu0 0
  %3062 = vmatprep.mubr.bf16.mxu0 0
  %3063 = vmatmul.mubr.bf16.gmra.mrb[0].mxu0 %v2958
  %v3064 = vpop.f32.mrb[0].mxu0
  %v3065 = vadd.f32 %v2980, %v3064
  %v3066 = vpop.f32.mrb[0].mxu0
  %v3067 = vpop.f32.mrb[0].mxu0
  %v3068 = vpop.f32.mrb[0].mxu0
  %3069 = vdwg.mxu0
  %v3070 = vlaneseq
  %v3071 = vand.u32 %v3070, 127
  %vm3072 = vcmp.lt.s32.totalorder %v3071, 2
  %v3073 = vsel %vm3072, %v3065, -inf
  %3074 = vmax.xlane.f32.xlu0 %v3073
  %v3075 = vpop.xlane.xlu0 %3074
  %v3076 = vsub.f32 %v3073, %v3075
  %v3077 = vmul.f32 %v3076, 1.442695
  %v3078 = vpow.pop %v3077
  %3079 = vadd.xlane.f32.xlu0 %v3078
  %v3080 = vpop.xlane.xlu0 %3079
  %v3081 = vrcp.pop %v3080
  %v3082 = vmul.f32 %v3078, %v3081
  %3083 = vst [vmem:[%s17] sm:$0xff] %v3082
  // Predicated region
  $region70: #{forward.5} parent=0 // pred_check
    _
  $region71: #{forward.5} parent=0 // pred_check_branch
    %3085 = sbr.rel (0) target = $region73
  $region72: #{forward.5} parent=0 // pred_region
    _
  $region73: #{forward.5} parent=0 // pred_fallthru
    _
  // Predicated region
  $region74: #{forward.5} parent=0 // pred_check
    _
  $region75: #{forward.5} parent=0 // pred_check_branch
    %3087 = sbr.rel (0) target = $region77
  $region76: #{forward.5} parent=0 // pred_region
    _
  $region77: #{forward.5} parent=0 // pred_fallthru
    _

</llo_original>
